<compile_context>
chip_gen: v6e
topology: v6e:2x2x1
jax: 0.10.0
libtpu: 0.0.40
codegen_flags: <defaults>
</compile_context>

<pallas_src>
import functools

import jax
import jax.numpy as jnp
from jax import lax
from jax.experimental import pallas as pl
from jax.experimental.pallas import tpu as pltpu

LEAKY_SLOPE = 0.01   # nn.LeakyReLU default
BN_EPS = 1e-5        # nn.BatchNorm2d default
PAD = 128            # flat-lane padding each side of the image (>= W+1, vreg aligned)


def _leaky(x):
    return jnp.where(x > 0, x, LEAKY_SLOPE * x)


# --------------------------------------------------------------------------
# Fused kernel: one batch element per grid step, channel-major (C, H*W).
# --------------------------------------------------------------------------
def decoder_fused_kernel(x_ref, wug_ref, s_ref, bup_ref, ml_ref, mr_ref,
                         w3f_ref, b3_ref, wol_ref, bol_ref, whl_ref, bhl_ref,
                         o_ref, imgpad_ref, xcol_ref, *, H, W, G):
    P = H * W
    C = w3f_ref.shape[0]

    # ---- upsample 1x1 conv + pixel-shuffle (MXU scatter, no relayouts) ----
    x = x_ref[0]                       # (N, d_enc) bf16 tokens
    img = bup_ref[...]                 # (C, P) f32, upsample bias pre-scattered
    for g in range(G):                 # G = s0*s1 sub-pixel positions
        # t[c, n] = sum_k w_up[k, c*G + g] * x[n, k]
        t = lax.dot_general(wug_ref[g], x, (((1,), (1,)), ((), ())),
                            preferred_element_type=jnp.float32)       # (C, N)
        # scatter the token columns onto this sub-position's pixel lanes
        img = img + jnp.dot(t, s_ref[g], preferred_element_type=jnp.float32)

    # ---- SAME padding in VMEM (flat layout: vertical pad is implicit) ----
    imgpad_ref[...] = jnp.zeros_like(imgpad_ref)
    imgpad_ref[:, PAD:PAD + P] = img
    xpad = imgpad_ref[...]             # (C, P + 2*PAD) f32

    # ---- im2col: 9 shifted taps -> (9C, P) bf16 column matrix ----
    mask_l = ml_ref[...]               # (1, P): 0.0 where w == 0
    mask_r = mr_ref[...]               # (1, P): 0.0 where w == W-1
    tap = 0
    for dh in (-1, 0, 1):
        for dw in (-1, 0, 1):
            start = PAD + dh * W + dw
            piece = xpad[:, start:start + P]
            if dw == -1:
                piece = piece * mask_l
            elif dw == 1:
                piece = piece * mask_r
            xcol_ref[tap * C:(tap + 1) * C, :] = piece.astype(xcol_ref.dtype)
            tap += 1

    # ---- 3x3 conv as one K = 9*C matmul, bias, LeakyReLU ----
    y = jnp.dot(w3f_ref[...], xcol_ref[...], preferred_element_type=jnp.float32)
    y = _leaky(y + b3_ref[...])
    # ---- 1x1 conv (BN1 folded in), LeakyReLU ----
    y = jnp.dot(wol_ref[...], y.astype(jnp.bfloat16),
                preferred_element_type=jnp.float32) + bol_ref[...]
    y = _leaky(y)
    # ---- 1x1 head (BN2 folded in) ----
    z = jnp.dot(whl_ref[...], y.astype(jnp.bfloat16),
                preferred_element_type=jnp.float32) + bhl_ref[...]
    o_ref[0] = z.astype(o_ref.dtype)   # (n_cls, P): lane-dense store


def _full_spec(shape):
    zeros = (0,) * len(shape)
    return pl.BlockSpec(shape, lambda i: zeros)


def decoder_up_conv_forward(x_seq, params, gs_h, gs_w, s0, s1):
    """x_seq: (B, gs_h*gs_w, d_encoder) -> (B, n_cls, gs_h*s0, gs_w*s1) (NCHW)."""
    B, N, d_enc = x_seq.shape
    C = params["w_out"].shape[0]
    n_cls = params["w_head"].shape[1]
    H, W = gs_h * s0, gs_w * s1
    P, G = H * W, s0 * s1
    f32, bf16 = jnp.float32, jnp.bfloat16

    # ---- wrapper-side parameter folding / re-layout (all tiny, one-off) ----
    # upsample weight grouped by sub-pixel position: wug[g, c, k] = w_up[k, c*G+g]
    wug = jnp.transpose(params["w_up"].reshape(d_enc, C, s0, s1),
                        (2, 3, 1, 0)).reshape(G, C, d_enc)
    # upsample bias pre-scattered to image layout (C, P)
    b_up3 = params["b_up"].reshape(C, s0, s1)
    bup_img = jnp.broadcast_to(b_up3[:, None, :, None, :],
                               (C, gs_h, s0, gs_w, s1)).reshape(C, P)
    # one-hot scatter matrices S[g, n, p] = (g == g(p)) & (n == n(p))
    pidx = jnp.arange(P)
    hh, ww = pidx // W, pidx % W
    n_of_p = (hh // s0) * gs_w + (ww // s1)
    g_of_p = (hh % s0) * s1 + (ww % s1)
    scat = ((jnp.arange(G)[:, None, None] == g_of_p[None, None, :]) &
            (jnp.arange(N)[None, :, None] == n_of_p[None, None, :])).astype(f32)
    # horizontal boundary masks for the 3x3 taps
    mask_l = (ww != 0).astype(f32).reshape(1, P)
    mask_r = (ww != W - 1).astype(f32).reshape(1, P)
    # 3x3 conv weight as (C_out, 9*C_in), tap-major / c_in-minor
    w3f = jnp.transpose(params["w3"], (2, 0, 1)).reshape(C, 9 * C)
    b3 = params["b3"].reshape(C, 1)
    # fold BN1 into the 1x1 "out" conv and BN2 into the head (inference mode)
    s1v, t1v = params["bn1_scale"].reshape(C), params["bn1_shift"].reshape(C)
    s2v, t2v = params["bn2_scale"].reshape(C), params["bn2_shift"].reshape(C)
    wol = (s1v[:, None] * params["w_out"]).T                       # (C, C)
    bol = (params["b_out"].reshape(C) + t1v @ params["w_out"]).reshape(C, 1)
    whl = (s2v[:, None] * params["w_head"]).T                      # (n_cls, C)
    bhl = (params["b_head"].reshape(n_cls) + t2v @ params["w_head"]).reshape(n_cls, 1)

    kernel = functools.partial(decoder_fused_kernel, H=H, W=W, G=G)
    out = pl.pallas_call(
        kernel,
        out_shape=jax.ShapeDtypeStruct((B, n_cls, P), f32),
        grid=(B,),
        in_specs=[
            pl.BlockSpec((1, N, d_enc), lambda i: (i, 0, 0)),
            _full_spec((G, C, d_enc)), _full_spec((G, N, P)), _full_spec((C, P)),
            _full_spec((1, P)), _full_spec((1, P)),
            _full_spec((C, 9 * C)), _full_spec((C, 1)),
            _full_spec((C, C)), _full_spec((C, 1)),
            _full_spec((n_cls, C)), _full_spec((n_cls, 1)),
        ],
        out_specs=pl.BlockSpec((1, n_cls, P), lambda i: (i, 0, 0)),
        scratch_shapes=[
            pltpu.VMEM((C, P + 2 * PAD), f32),      # flat zero-padded image
            pltpu.VMEM((9 * C, P), bf16),           # im2col column matrix
        ],
        compiler_params=pltpu.CompilerParams(dimension_semantics=("parallel",)),
    )(x_seq.astype(bf16), wug.astype(bf16), scat, bup_img,
      mask_l, mask_r, w3f.astype(bf16), b3,
      wol.astype(bf16), bol, whl.astype(bf16), bhl)
    return out.reshape(B, n_cls, H, W)


# --------------------------------------------------------------------------
# Parameter init (PyTorch NCHW weights represented as matmul matrices) + reference
# --------------------------------------------------------------------------
def init_params(key, d_enc, d_dec, n_cls, s0, s1):
    ks = jax.random.split(key, 16)
    c_mid = d_dec * s0 * s1

    def nrm(k, shape, scale=0.05):
        return scale * jax.random.normal(k, shape, jnp.float32)

    p = {
        "w_up": nrm(ks[0], (d_enc, c_mid)),
        "b_up": nrm(ks[1], (1, c_mid)),
        "w3": nrm(ks[2], (9, d_dec, d_dec)),
        "b3": nrm(ks[3], (1, d_dec)),
        "w_out": nrm(ks[8], (d_dec, d_dec)),
        "b_out": nrm(ks[9], (1, d_dec)),
        "w_head": nrm(ks[14], (d_dec, n_cls)),
        "b_head": nrm(ks[15], (1, n_cls)),
    }
    # BatchNorm1 (inference): fold gamma/beta/running stats into scale/shift.
    g1, b1 = 1.0 + nrm(ks[4], (1, d_dec)), nrm(ks[5], (1, d_dec))
    m1, v1 = nrm(ks[6], (1, d_dec)), 1.0 + jnp.abs(nrm(ks[7], (1, d_dec)))
    p["bn1_scale"] = g1 / jnp.sqrt(v1 + BN_EPS)
    p["bn1_shift"] = b1 - m1 * p["bn1_scale"]
    # BatchNorm2.
    g2, b2 = 1.0 + nrm(ks[10], (1, d_dec)), nrm(ks[11], (1, d_dec))
    m2, v2 = nrm(ks[12], (1, d_dec)), 1.0 + jnp.abs(nrm(ks[13], (1, d_dec)))
    p["bn2_scale"] = g2 / jnp.sqrt(v2 + BN_EPS)
    p["bn2_shift"] = b2 - m2 * p["bn2_scale"]
    return p


def pixel_shuffle_rearrange(y, s0, s1, c_out):
    # einops 'b (c s0 s1) h w -> b c (h s0) (w s1)', expressed in NHWC.
    B, H, W, _ = y.shape
    y = y.reshape(B, H, W, c_out, s0, s1)
    y = jnp.transpose(y, (0, 1, 4, 2, 5, 3))
    return y.reshape(B, H * s0, W * s1, c_out)


def reference_forward(x_seq, params, gs_h, gs_w, s0, s1):
    """Pure-JAX f32 reference; returns NCHW (B, n_cls, H, W)."""
    B, N, _ = x_seq.shape
    C = params["w_out"].shape[0]
    y = jnp.einsum("bnc,cd->bnd", x_seq, params["w_up"]) + params["b_up"]
    y = y.reshape(B, gs_h, gs_w, C * s0 * s1)
    y = pixel_shuffle_rearrange(y, s0, s1, C)
    w3 = params["w3"].reshape(3, 3, C, C)
    y = lax.conv_general_dilated(y, w3, (1, 1), "SAME",
                                 dimension_numbers=("NHWC", "HWIO", "NHWC"))
    y = _leaky(y + params["b3"].reshape(1, 1, 1, C))
    y = y * params["bn1_scale"].reshape(1, 1, 1, C) + params["bn1_shift"].reshape(1, 1, 1, C)
    y = _leaky(jnp.einsum("bhwc,cd->bhwd", y, params["w_out"])
               + params["b_out"].reshape(1, 1, 1, C))
    y = y * params["bn2_scale"].reshape(1, 1, 1, C) + params["bn2_shift"].reshape(1, 1, 1, C)
    z = jnp.einsum("bhwc,cd->bhwd", y, params["w_head"]) + params["b_head"].reshape(1, 1, 1, -1)
    return jnp.transpose(z, (0, 3, 1, 2))


if __name__ == "__main__":
    # Small config: n_cls=8, patch_size=8, d_encoder=32, d_decoder=16,
    # scale_factor=(2, 8); im_size=(32, 32) -> token grid (4, 4) -> output (8, 32).
    B, d_enc, d_dec, n_cls = 2, 32, 16, 8
    s0, s1 = 2, 8
    patch_size = 8
    im_size = (32, 32)
    gs_h, gs_w = im_size[0] // patch_size, im_size[1] // patch_size  # 4, 4

    key = jax.random.PRNGKey(0)
    kx, kp = jax.random.split(key)
    x = jax.random.normal(kx, (B, gs_h * gs_w, d_enc), jnp.float32)  # (2, 16, 32)
    params = init_params(kp, d_enc, d_dec, n_cls, s0, s1)

    out = decoder_up_conv_forward(x, params, gs_h, gs_w, s0, s1)
    out = jax.block_until_ready(out)

    ref = reference_forward(x, params, gs_h, gs_w, s0, s1)
    H2, W2 = gs_h * s0, gs_w * s1
    assert out.shape == (B, n_cls, H2, W2), out.shape
    # bf16 MXU operands (f32 accumulation) vs f32 reference -> small numerical slack.
    max_err = float(jnp.max(jnp.abs(out - ref)))
    assert jnp.allclose(out, ref, atol=5e-3, rtol=5e-2), max_err
    print("KERNEL_OK")
</pallas_src>

<mosaic_0001>
module attributes {stable_mosaic.version = 11 : i64} {
  func.func @decoder_fused_kernel(%arg0: i32, %arg1: memref<1x16x32xbf16, #tpu.memory_space<vmem>>, %arg2: memref<16x16x32xbf16, #tpu.memory_space<vmem>>, %arg3: memref<16x16x256xf32, #tpu.memory_space<vmem>>, %arg4: memref<16x256xf32, #tpu.memory_space<vmem>>, %arg5: memref<1x256xf32, #tpu.memory_space<vmem>>, %arg6: memref<1x256xf32, #tpu.memory_space<vmem>>, %arg7: memref<16x144xbf16, #tpu.memory_space<vmem>>, %arg8: memref<16x1xf32, #tpu.memory_space<vmem>>, %arg9: memref<16x16xbf16, #tpu.memory_space<vmem>>, %arg10: memref<16x1xf32, #tpu.memory_space<vmem>>, %arg11: memref<8x16xbf16, #tpu.memory_space<vmem>>, %arg12: memref<8x1xf32, #tpu.memory_space<vmem>>, %arg13: memref<1x8x256xf32, #tpu.memory_space<vmem>>, %arg14: memref<16x512xf32, #tpu.memory_space<vmem>>, %arg15: memref<144x256xbf16, #tpu.memory_space<vmem>>) attributes {dimension_semantics = [#tpu.dimension_semantics<parallel>], iteration_bounds = array<i64: 2>, scalar_prefetch = 0 : i64, scratch_operands = 2 : i64, tpu.core_type = #tpu.core_type<tc>, window_params = [{transform_indices = @transform_0, window_bounds = array<i64: 1, 16, 32>}, {pipeline_mode = #tpu.pipeline_mode<synchronous>, transform_indices = @transform_1, window_bounds = array<i64: 16, 16, 32>}, {pipeline_mode = #tpu.pipeline_mode<synchronous>, transform_indices = @transform_2, window_bounds = array<i64: 16, 16, 256>}, {pipeline_mode = #tpu.pipeline_mode<synchronous>, transform_indices = @transform_3, window_bounds = array<i64: 16, 256>}, {pipeline_mode = #tpu.pipeline_mode<synchronous>, transform_indices = @transform_4, window_bounds = array<i64: 1, 256>}, {pipeline_mode = #tpu.pipeline_mode<synchronous>, transform_indices = @transform_5, window_bounds = array<i64: 1, 256>}, {pipeline_mode = #tpu.pipeline_mode<synchronous>, transform_indices = @transform_6, window_bounds = array<i64: 16, 144>}, {pipeline_mode = #tpu.pipeline_mode<synchronous>, transform_indices = @transform_7, window_bounds = array<i64: 16, 1>}, {pipeline_mode = #tpu.pipeline_mode<synchronous>, transform_indices = @transform_8, window_bounds = array<i64: 16, 16>}, {pipeline_mode = #tpu.pipeline_mode<synchronous>, transform_indices = @transform_9, window_bounds = array<i64: 16, 1>}, {pipeline_mode = #tpu.pipeline_mode<synchronous>, transform_indices = @transform_10, window_bounds = array<i64: 8, 16>}, {pipeline_mode = #tpu.pipeline_mode<synchronous>, transform_indices = @transform_11, window_bounds = array<i64: 8, 1>}, {transform_indices = @transform_12, window_bounds = array<i64: 1, 8, 256>}]} {
    %c0 = arith.constant 0 : index
    %c0_0 = arith.constant 0 : index
    %c0_1 = arith.constant 0 : index
    %0 = vector.load %arg1[%c0, %c0_0, %c0_1] : memref<1x16x32xbf16, #tpu.memory_space<vmem>>, vector<1x16x32xbf16>
    %1 = vector.shape_cast %0 : vector<1x16x32xbf16> to vector<16x32xbf16>
    %c0_2 = arith.constant 0 : index
    %c0_3 = arith.constant 0 : index
    %2 = vector.load %arg4[%c0_2, %c0_3] : memref<16x256xf32, #tpu.memory_space<vmem>>, vector<16x256xf32>
    %c0_4 = arith.constant 0 : index
    %c0_5 = arith.constant 0 : index
    %c0_6 = arith.constant 0 : index
    %3 = vector.load %arg2[%c0_4, %c0_5, %c0_6] : memref<16x16x32xbf16, #tpu.memory_space<vmem>>, vector<1x16x32xbf16>
    %4 = vector.shape_cast %3 : vector<1x16x32xbf16> to vector<16x32xbf16>
    %cst = arith.constant dense<0.000000e+00> : vector<16x16xf32>
    %5 = tpu.matmul %4, %1, %cst {dimension_numbers = #tpu.dot_dimension_numbers<[1], [1], [0], [0], [0, 0, 1, 0], [], []>} : vector<16x32xbf16>, vector<16x32xbf16>, vector<16x16xf32> -> vector<16x16xf32>
    %c0_7 = arith.constant 0 : index
    %c0_8 = arith.constant 0 : index
    %c0_9 = arith.constant 0 : index
    %6 = vector.load %arg3[%c0_7, %c0_8, %c0_9] : memref<16x16x256xf32, #tpu.memory_space<vmem>>, vector<1x16x256xf32>
    %7 = vector.shape_cast %6 : vector<1x16x256xf32> to vector<16x256xf32>
    %cst_10 = arith.constant dense<0.000000e+00> : vector<16x256xf32>
    %8 = tpu.matmul %5, %7, %cst_10 {dimension_numbers = #tpu.dot_dimension_numbers<[1], [0], [0], [1], [0, 0, 1, 1], [], []>} : vector<16x16xf32>, vector<16x256xf32>, vector<16x256xf32> -> vector<16x256xf32>
    %9 = arith.addf %2, %8 : vector<16x256xf32>
    %c1 = arith.constant 1 : index
    %c0_11 = arith.constant 0 : index
    %c0_12 = arith.constant 0 : index
    %10 = vector.load %arg2[%c1, %c0_11, %c0_12] : memref<16x16x32xbf16, #tpu.memory_space<vmem>>, vector<1x16x32xbf16>
    %11 = vector.shape_cast %10 : vector<1x16x32xbf16> to vector<16x32xbf16>
    %cst_13 = arith.constant dense<0.000000e+00> : vector<16x16xf32>
    %12 = tpu.matmul %11, %1, %cst_13 {dimension_numbers = #tpu.dot_dimension_numbers<[1], [1], [0], [0], [0, 0, 1, 0], [], []>} : vector<16x32xbf16>, vector<16x32xbf16>, vector<16x16xf32> -> vector<16x16xf32>
    %c1_14 = arith.constant 1 : index
    %c0_15 = arith.constant 0 : index
    %c0_16 = arith.constant 0 : index
    %13 = vector.load %arg3[%c1_14, %c0_15, %c0_16] : memref<16x16x256xf32, #tpu.memory_space<vmem>>, vector<1x16x256xf32>
    %14 = vector.shape_cast %13 : vector<1x16x256xf32> to vector<16x256xf32>
    %cst_17 = arith.constant dense<0.000000e+00> : vector<16x256xf32>
    %15 = tpu.matmul %12, %14, %cst_17 {dimension_numbers = #tpu.dot_dimension_numbers<[1], [0], [0], [1], [0, 0, 1, 1], [], []>} : vector<16x16xf32>, vector<16x256xf32>, vector<16x256xf32> -> vector<16x256xf32>
    %16 = arith.addf %9, %15 : vector<16x256xf32>
    %c2 = arith.constant 2 : index
    %c0_18 = arith.constant 0 : index
    %c0_19 = arith.constant 0 : index
    %17 = vector.load %arg2[%c2, %c0_18, %c0_19] : memref<16x16x32xbf16, #tpu.memory_space<vmem>>, vector<1x16x32xbf16>
    %18 = vector.shape_cast %17 : vector<1x16x32xbf16> to vector<16x32xbf16>
    %cst_20 = arith.constant dense<0.000000e+00> : vector<16x16xf32>
    %19 = tpu.matmul %18, %1, %cst_20 {dimension_numbers = #tpu.dot_dimension_numbers<[1], [1], [0], [0], [0, 0, 1, 0], [], []>} : vector<16x32xbf16>, vector<16x32xbf16>, vector<16x16xf32> -> vector<16x16xf32>
    %c2_21 = arith.constant 2 : index
    %c0_22 = arith.constant 0 : index
    %c0_23 = arith.constant 0 : index
    %20 = vector.load %arg3[%c2_21, %c0_22, %c0_23] : memref<16x16x256xf32, #tpu.memory_space<vmem>>, vector<1x16x256xf32>
    %21 = vector.shape_cast %20 : vector<1x16x256xf32> to vector<16x256xf32>
    %cst_24 = arith.constant dense<0.000000e+00> : vector<16x256xf32>
    %22 = tpu.matmul %19, %21, %cst_24 {dimension_numbers = #tpu.dot_dimension_numbers<[1], [0], [0], [1], [0, 0, 1, 1], [], []>} : vector<16x16xf32>, vector<16x256xf32>, vector<16x256xf32> -> vector<16x256xf32>
    %23 = arith.addf %16, %22 : vector<16x256xf32>
    %c3 = arith.constant 3 : index
    %c0_25 = arith.constant 0 : index
    %c0_26 = arith.constant 0 : index
    %24 = vector.load %arg2[%c3, %c0_25, %c0_26] : memref<16x16x32xbf16, #tpu.memory_space<vmem>>, vector<1x16x32xbf16>
    %25 = vector.shape_cast %24 : vector<1x16x32xbf16> to vector<16x32xbf16>
    %cst_27 = arith.constant dense<0.000000e+00> : vector<16x16xf32>
    %26 = tpu.matmul %25, %1, %cst_27 {dimension_numbers = #tpu.dot_dimension_numbers<[1], [1], [0], [0], [0, 0, 1, 0], [], []>} : vector<16x32xbf16>, vector<16x32xbf16>, vector<16x16xf32> -> vector<16x16xf32>
    %c3_28 = arith.constant 3 : index
    %c0_29 = arith.constant 0 : index
    %c0_30 = arith.constant 0 : index
    %27 = vector.load %arg3[%c3_28, %c0_29, %c0_30] : memref<16x16x256xf32, #tpu.memory_space<vmem>>, vector<1x16x256xf32>
    %28 = vector.shape_cast %27 : vector<1x16x256xf32> to vector<16x256xf32>
    %cst_31 = arith.constant dense<0.000000e+00> : vector<16x256xf32>
    %29 = tpu.matmul %26, %28, %cst_31 {dimension_numbers = #tpu.dot_dimension_numbers<[1], [0], [0], [1], [0, 0, 1, 1], [], []>} : vector<16x16xf32>, vector<16x256xf32>, vector<16x256xf32> -> vector<16x256xf32>
    %30 = arith.addf %23, %29 : vector<16x256xf32>
    %c4 = arith.constant 4 : index
    %c0_32 = arith.constant 0 : index
    %c0_33 = arith.constant 0 : index
    %31 = vector.load %arg2[%c4, %c0_32, %c0_33] : memref<16x16x32xbf16, #tpu.memory_space<vmem>>, vector<1x16x32xbf16>
    %32 = vector.shape_cast %31 : vector<1x16x32xbf16> to vector<16x32xbf16>
    %cst_34 = arith.constant dense<0.000000e+00> : vector<16x16xf32>
    %33 = tpu.matmul %32, %1, %cst_34 {dimension_numbers = #tpu.dot_dimension_numbers<[1], [1], [0], [0], [0, 0, 1, 0], [], []>} : vector<16x32xbf16>, vector<16x32xbf16>, vector<16x16xf32> -> vector<16x16xf32>
    %c4_35 = arith.constant 4 : index
    %c0_36 = arith.constant 0 : index
    %c0_37 = arith.constant 0 : index
    %34 = vector.load %arg3[%c4_35, %c0_36, %c0_37] : memref<16x16x256xf32, #tpu.memory_space<vmem>>, vector<1x16x256xf32>
    %35 = vector.shape_cast %34 : vector<1x16x256xf32> to vector<16x256xf32>
    %cst_38 = arith.constant dense<0.000000e+00> : vector<16x256xf32>
    %36 = tpu.matmul %33, %35, %cst_38 {dimension_numbers = #tpu.dot_dimension_numbers<[1], [0], [0], [1], [0, 0, 1, 1], [], []>} : vector<16x16xf32>, vector<16x256xf32>, vector<16x256xf32> -> vector<16x256xf32>
    %37 = arith.addf %30, %36 : vector<16x256xf32>
    %c5 = arith.constant 5 : index
    %c0_39 = arith.constant 0 : index
    %c0_40 = arith.constant 0 : index
    %38 = vector.load %arg2[%c5, %c0_39, %c0_40] : memref<16x16x32xbf16, #tpu.memory_space<vmem>>, vector<1x16x32xbf16>
    %39 = vector.shape_cast %38 : vector<1x16x32xbf16> to vector<16x32xbf16>
    %cst_41 = arith.constant dense<0.000000e+00> : vector<16x16xf32>
    %40 = tpu.matmul %39, %1, %cst_41 {dimension_numbers = #tpu.dot_dimension_numbers<[1], [1], [0], [0], [0, 0, 1, 0], [], []>} : vector<16x32xbf16>, vector<16x32xbf16>, vector<16x16xf32> -> vector<16x16xf32>
    %c5_42 = arith.constant 5 : index
    %c0_43 = arith.constant 0 : index
    %c0_44 = arith.constant 0 : index
    %41 = vector.load %arg3[%c5_42, %c0_43, %c0_44] : memref<16x16x256xf32, #tpu.memory_space<vmem>>, vector<1x16x256xf32>
    %42 = vector.shape_cast %41 : vector<1x16x256xf32> to vector<16x256xf32>
    %cst_45 = arith.constant dense<0.000000e+00> : vector<16x256xf32>
    %43 = tpu.matmul %40, %42, %cst_45 {dimension_numbers = #tpu.dot_dimension_numbers<[1], [0], [0], [1], [0, 0, 1, 1], [], []>} : vector<16x16xf32>, vector<16x256xf32>, vector<16x256xf32> -> vector<16x256xf32>
    %44 = arith.addf %37, %43 : vector<16x256xf32>
    %c6 = arith.constant 6 : index
    %c0_46 = arith.constant 0 : index
    %c0_47 = arith.constant 0 : index
    %45 = vector.load %arg2[%c6, %c0_46, %c0_47] : memref<16x16x32xbf16, #tpu.memory_space<vmem>>, vector<1x16x32xbf16>
    %46 = vector.shape_cast %45 : vector<1x16x32xbf16> to vector<16x32xbf16>
    %cst_48 = arith.constant dense<0.000000e+00> : vector<16x16xf32>
    %47 = tpu.matmul %46, %1, %cst_48 {dimension_numbers = #tpu.dot_dimension_numbers<[1], [1], [0], [0], [0, 0, 1, 0], [], []>} : vector<16x32xbf16>, vector<16x32xbf16>, vector<16x16xf32> -> vector<16x16xf32>
    %c6_49 = arith.constant 6 : index
    %c0_50 = arith.constant 0 : index
    %c0_51 = arith.constant 0 : index
    %48 = vector.load %arg3[%c6_49, %c0_50, %c0_51] : memref<16x16x256xf32, #tpu.memory_space<vmem>>, vector<1x16x256xf32>
    %49 = vector.shape_cast %48 : vector<1x16x256xf32> to vector<16x256xf32>
    %cst_52 = arith.constant dense<0.000000e+00> : vector<16x256xf32>
    %50 = tpu.matmul %47, %49, %cst_52 {dimension_numbers = #tpu.dot_dimension_numbers<[1], [0], [0], [1], [0, 0, 1, 1], [], []>} : vector<16x16xf32>, vector<16x256xf32>, vector<16x256xf32> -> vector<16x256xf32>
    %51 = arith.addf %44, %50 : vector<16x256xf32>
    %c7 = arith.constant 7 : index
    %c0_53 = arith.constant 0 : index
    %c0_54 = arith.constant 0 : index
    %52 = vector.load %arg2[%c7, %c0_53, %c0_54] : memref<16x16x32xbf16, #tpu.memory_space<vmem>>, vector<1x16x32xbf16>
    %53 = vector.shape_cast %52 : vector<1x16x32xbf16> to vector<16x32xbf16>
    %cst_55 = arith.constant dense<0.000000e+00> : vector<16x16xf32>
    %54 = tpu.matmul %53, %1, %cst_55 {dimension_numbers = #tpu.dot_dimension_numbers<[1], [1], [0], [0], [0, 0, 1, 0], [], []>} : vector<16x32xbf16>, vector<16x32xbf16>, vector<16x16xf32> -> vector<16x16xf32>
    %c7_56 = arith.constant 7 : index
    %c0_57 = arith.constant 0 : index
    %c0_58 = arith.constant 0 : index
    %55 = vector.load %arg3[%c7_56, %c0_57, %c0_58] : memref<16x16x256xf32, #tpu.memory_space<vmem>>, vector<1x16x256xf32>
    %56 = vector.shape_cast %55 : vector<1x16x256xf32> to vector<16x256xf32>
    %cst_59 = arith.constant dense<0.000000e+00> : vector<16x256xf32>
    %57 = tpu.matmul %54, %56, %cst_59 {dimension_numbers = #tpu.dot_dimension_numbers<[1], [0], [0], [1], [0, 0, 1, 1], [], []>} : vector<16x16xf32>, vector<16x256xf32>, vector<16x256xf32> -> vector<16x256xf32>
    %58 = arith.addf %51, %57 : vector<16x256xf32>
    %c8 = arith.constant 8 : index
    %c0_60 = arith.constant 0 : index
    %c0_61 = arith.constant 0 : index
    %59 = vector.load %arg2[%c8, %c0_60, %c0_61] : memref<16x16x32xbf16, #tpu.memory_space<vmem>>, vector<1x16x32xbf16>
    %60 = vector.shape_cast %59 : vector<1x16x32xbf16> to vector<16x32xbf16>
    %cst_62 = arith.constant dense<0.000000e+00> : vector<16x16xf32>
    %61 = tpu.matmul %60, %1, %cst_62 {dimension_numbers = #tpu.dot_dimension_numbers<[1], [1], [0], [0], [0, 0, 1, 0], [], []>} : vector<16x32xbf16>, vector<16x32xbf16>, vector<16x16xf32> -> vector<16x16xf32>
    %c8_63 = arith.constant 8 : index
    %c0_64 = arith.constant 0 : index
    %c0_65 = arith.constant 0 : index
    %62 = vector.load %arg3[%c8_63, %c0_64, %c0_65] : memref<16x16x256xf32, #tpu.memory_space<vmem>>, vector<1x16x256xf32>
    %63 = vector.shape_cast %62 : vector<1x16x256xf32> to vector<16x256xf32>
    %cst_66 = arith.constant dense<0.000000e+00> : vector<16x256xf32>
    %64 = tpu.matmul %61, %63, %cst_66 {dimension_numbers = #tpu.dot_dimension_numbers<[1], [0], [0], [1], [0, 0, 1, 1], [], []>} : vector<16x16xf32>, vector<16x256xf32>, vector<16x256xf32> -> vector<16x256xf32>
    %65 = arith.addf %58, %64 : vector<16x256xf32>
    %c9 = arith.constant 9 : index
    %c0_67 = arith.constant 0 : index
    %c0_68 = arith.constant 0 : index
    %66 = vector.load %arg2[%c9, %c0_67, %c0_68] : memref<16x16x32xbf16, #tpu.memory_space<vmem>>, vector<1x16x32xbf16>
    %67 = vector.shape_cast %66 : vector<1x16x32xbf16> to vector<16x32xbf16>
    %cst_69 = arith.constant dense<0.000000e+00> : vector<16x16xf32>
    %68 = tpu.matmul %67, %1, %cst_69 {dimension_numbers = #tpu.dot_dimension_numbers<[1], [1], [0], [0], [0, 0, 1, 0], [], []>} : vector<16x32xbf16>, vector<16x32xbf16>, vector<16x16xf32> -> vector<16x16xf32>
    %c9_70 = arith.constant 9 : index
    %c0_71 = arith.constant 0 : index
    %c0_72 = arith.constant 0 : index
    %69 = vector.load %arg3[%c9_70, %c0_71, %c0_72] : memref<16x16x256xf32, #tpu.memory_space<vmem>>, vector<1x16x256xf32>
    %70 = vector.shape_cast %69 : vector<1x16x256xf32> to vector<16x256xf32>
    %cst_73 = arith.constant dense<0.000000e+00> : vector<16x256xf32>
    %71 = tpu.matmul %68, %70, %cst_73 {dimension_numbers = #tpu.dot_dimension_numbers<[1], [0], [0], [1], [0, 0, 1, 1], [], []>} : vector<16x16xf32>, vector<16x256xf32>, vector<16x256xf32> -> vector<16x256xf32>
    %72 = arith.addf %65, %71 : vector<16x256xf32>
    %c10 = arith.constant 10 : index
    %c0_74 = arith.constant 0 : index
    %c0_75 = arith.constant 0 : index
    %73 = vector.load %arg2[%c10, %c0_74, %c0_75] : memref<16x16x32xbf16, #tpu.memory_space<vmem>>, vector<1x16x32xbf16>
    %74 = vector.shape_cast %73 : vector<1x16x32xbf16> to vector<16x32xbf16>
    %cst_76 = arith.constant dense<0.000000e+00> : vector<16x16xf32>
    %75 = tpu.matmul %74, %1, %cst_76 {dimension_numbers = #tpu.dot_dimension_numbers<[1], [1], [0], [0], [0, 0, 1, 0], [], []>} : vector<16x32xbf16>, vector<16x32xbf16>, vector<16x16xf32> -> vector<16x16xf32>
    %c10_77 = arith.constant 10 : index
    %c0_78 = arith.constant 0 : index
    %c0_79 = arith.constant 0 : index
    %76 = vector.load %arg3[%c10_77, %c0_78, %c0_79] : memref<16x16x256xf32, #tpu.memory_space<vmem>>, vector<1x16x256xf32>
    %77 = vector.shape_cast %76 : vector<1x16x256xf32> to vector<16x256xf32>
    %cst_80 = arith.constant dense<0.000000e+00> : vector<16x256xf32>
    %78 = tpu.matmul %75, %77, %cst_80 {dimension_numbers = #tpu.dot_dimension_numbers<[1], [0], [0], [1], [0, 0, 1, 1], [], []>} : vector<16x16xf32>, vector<16x256xf32>, vector<16x256xf32> -> vector<16x256xf32>
    %79 = arith.addf %72, %78 : vector<16x256xf32>
    %c11 = arith.constant 11 : index
    %c0_81 = arith.constant 0 : index
    %c0_82 = arith.constant 0 : index
    %80 = vector.load %arg2[%c11, %c0_81, %c0_82] : memref<16x16x32xbf16, #tpu.memory_space<vmem>>, vector<1x16x32xbf16>
    %81 = vector.shape_cast %80 : vector<1x16x32xbf16> to vector<16x32xbf16>
    %cst_83 = arith.constant dense<0.000000e+00> : vector<16x16xf32>
    %82 = tpu.matmul %81, %1, %cst_83 {dimension_numbers = #tpu.dot_dimension_numbers<[1], [1], [0], [0], [0, 0, 1, 0], [], []>} : vector<16x32xbf16>, vector<16x32xbf16>, vector<16x16xf32> -> vector<16x16xf32>
    %c11_84 = arith.constant 11 : index
    %c0_85 = arith.constant 0 : index
    %c0_86 = arith.constant 0 : index
    %83 = vector.load %arg3[%c11_84, %c0_85, %c0_86] : memref<16x16x256xf32, #tpu.memory_space<vmem>>, vector<1x16x256xf32>
    %84 = vector.shape_cast %83 : vector<1x16x256xf32> to vector<16x256xf32>
    %cst_87 = arith.constant dense<0.000000e+00> : vector<16x256xf32>
    %85 = tpu.matmul %82, %84, %cst_87 {dimension_numbers = #tpu.dot_dimension_numbers<[1], [0], [0], [1], [0, 0, 1, 1], [], []>} : vector<16x16xf32>, vector<16x256xf32>, vector<16x256xf32> -> vector<16x256xf32>
    %86 = arith.addf %79, %85 : vector<16x256xf32>
    %c12 = arith.constant 12 : index
    %c0_88 = arith.constant 0 : index
    %c0_89 = arith.constant 0 : index
    %87 = vector.load %arg2[%c12, %c0_88, %c0_89] : memref<16x16x32xbf16, #tpu.memory_space<vmem>>, vector<1x16x32xbf16>
    %88 = vector.shape_cast %87 : vector<1x16x32xbf16> to vector<16x32xbf16>
    %cst_90 = arith.constant dense<0.000000e+00> : vector<16x16xf32>
    %89 = tpu.matmul %88, %1, %cst_90 {dimension_numbers = #tpu.dot_dimension_numbers<[1], [1], [0], [0], [0, 0, 1, 0], [], []>} : vector<16x32xbf16>, vector<16x32xbf16>, vector<16x16xf32> -> vector<16x16xf32>
    %c12_91 = arith.constant 12 : index
    %c0_92 = arith.constant 0 : index
    %c0_93 = arith.constant 0 : index
    %90 = vector.load %arg3[%c12_91, %c0_92, %c0_93] : memref<16x16x256xf32, #tpu.memory_space<vmem>>, vector<1x16x256xf32>
    %91 = vector.shape_cast %90 : vector<1x16x256xf32> to vector<16x256xf32>
    %cst_94 = arith.constant dense<0.000000e+00> : vector<16x256xf32>
    %92 = tpu.matmul %89, %91, %cst_94 {dimension_numbers = #tpu.dot_dimension_numbers<[1], [0], [0], [1], [0, 0, 1, 1], [], []>} : vector<16x16xf32>, vector<16x256xf32>, vector<16x256xf32> -> vector<16x256xf32>
    %93 = arith.addf %86, %92 : vector<16x256xf32>
    %c13 = arith.constant 13 : index
    %c0_95 = arith.constant 0 : index
    %c0_96 = arith.constant 0 : index
    %94 = vector.load %arg2[%c13, %c0_95, %c0_96] : memref<16x16x32xbf16, #tpu.memory_space<vmem>>, vector<1x16x32xbf16>
    %95 = vector.shape_cast %94 : vector<1x16x32xbf16> to vector<16x32xbf16>
    %cst_97 = arith.constant dense<0.000000e+00> : vector<16x16xf32>
    %96 = tpu.matmul %95, %1, %cst_97 {dimension_numbers = #tpu.dot_dimension_numbers<[1], [1], [0], [0], [0, 0, 1, 0], [], []>} : vector<16x32xbf16>, vector<16x32xbf16>, vector<16x16xf32> -> vector<16x16xf32>
    %c13_98 = arith.constant 13 : index
    %c0_99 = arith.constant 0 : index
    %c0_100 = arith.constant 0 : index
    %97 = vector.load %arg3[%c13_98, %c0_99, %c0_100] : memref<16x16x256xf32, #tpu.memory_space<vmem>>, vector<1x16x256xf32>
    %98 = vector.shape_cast %97 : vector<1x16x256xf32> to vector<16x256xf32>
    %cst_101 = arith.constant dense<0.000000e+00> : vector<16x256xf32>
    %99 = tpu.matmul %96, %98, %cst_101 {dimension_numbers = #tpu.dot_dimension_numbers<[1], [0], [0], [1], [0, 0, 1, 1], [], []>} : vector<16x16xf32>, vector<16x256xf32>, vector<16x256xf32> -> vector<16x256xf32>
    %100 = arith.addf %93, %99 : vector<16x256xf32>
    %c14 = arith.constant 14 : index
    %c0_102 = arith.constant 0 : index
    %c0_103 = arith.constant 0 : index
    %101 = vector.load %arg2[%c14, %c0_102, %c0_103] : memref<16x16x32xbf16, #tpu.memory_space<vmem>>, vector<1x16x32xbf16>
    %102 = vector.shape_cast %101 : vector<1x16x32xbf16> to vector<16x32xbf16>
    %cst_104 = arith.constant dense<0.000000e+00> : vector<16x16xf32>
    %103 = tpu.matmul %102, %1, %cst_104 {dimension_numbers = #tpu.dot_dimension_numbers<[1], [1], [0], [0], [0, 0, 1, 0], [], []>} : vector<16x32xbf16>, vector<16x32xbf16>, vector<16x16xf32> -> vector<16x16xf32>
    %c14_105 = arith.constant 14 : index
    %c0_106 = arith.constant 0 : index
    %c0_107 = arith.constant 0 : index
    %104 = vector.load %arg3[%c14_105, %c0_106, %c0_107] : memref<16x16x256xf32, #tpu.memory_space<vmem>>, vector<1x16x256xf32>
    %105 = vector.shape_cast %104 : vector<1x16x256xf32> to vector<16x256xf32>
    %cst_108 = arith.constant dense<0.000000e+00> : vector<16x256xf32>
    %106 = tpu.matmul %103, %105, %cst_108 {dimension_numbers = #tpu.dot_dimension_numbers<[1], [0], [0], [1], [0, 0, 1, 1], [], []>} : vector<16x16xf32>, vector<16x256xf32>, vector<16x256xf32> -> vector<16x256xf32>
    %107 = arith.addf %100, %106 : vector<16x256xf32>
    %c15 = arith.constant 15 : index
    %c0_109 = arith.constant 0 : index
    %c0_110 = arith.constant 0 : index
    %108 = vector.load %arg2[%c15, %c0_109, %c0_110] : memref<16x16x32xbf16, #tpu.memory_space<vmem>>, vector<1x16x32xbf16>
    %109 = vector.shape_cast %108 : vector<1x16x32xbf16> to vector<16x32xbf16>
    %cst_111 = arith.constant dense<0.000000e+00> : vector<16x16xf32>
    %110 = tpu.matmul %109, %1, %cst_111 {dimension_numbers = #tpu.dot_dimension_numbers<[1], [1], [0], [0], [0, 0, 1, 0], [], []>} : vector<16x32xbf16>, vector<16x32xbf16>, vector<16x16xf32> -> vector<16x16xf32>
    %c15_112 = arith.constant 15 : index
    %c0_113 = arith.constant 0 : index
    %c0_114 = arith.constant 0 : index
    %111 = vector.load %arg3[%c15_112, %c0_113, %c0_114] : memref<16x16x256xf32, #tpu.memory_space<vmem>>, vector<1x16x256xf32>
    %112 = vector.shape_cast %111 : vector<1x16x256xf32> to vector<16x256xf32>
    %cst_115 = arith.constant dense<0.000000e+00> : vector<16x256xf32>
    %113 = tpu.matmul %110, %112, %cst_115 {dimension_numbers = #tpu.dot_dimension_numbers<[1], [0], [0], [1], [0, 0, 1, 1], [], []>} : vector<16x16xf32>, vector<16x256xf32>, vector<16x256xf32> -> vector<16x256xf32>
    %114 = arith.addf %107, %113 : vector<16x256xf32>
    %cst_116 = arith.constant 0.000000e+00 : f32
    %115 = vector.broadcast %cst_116 : f32 to vector<16x512xf32>
    %c0_117 = arith.constant 0 : index
    %c0_118 = arith.constant 0 : index
    %116 = vector.load %arg14[%c0_117, %c0_118] : memref<16x512xf32, #tpu.memory_space<vmem>>, vector<16x512xf32>
    tpu.vector_store %arg14[%c0_117, %c0_118], %115 {strides = array<i32>} : memref<16x512xf32, #tpu.memory_space<vmem>>, vector<16x512xf32>,
    %c0_119 = arith.constant 0 : index
    %c128 = arith.constant 128 : index
    %117 = vector.load %arg14[%c0_119, %c128] : memref<16x512xf32, #tpu.memory_space<vmem>>, vector<16x256xf32>
    tpu.vector_store %arg14[%c0_119, %c128], %114 {strides = array<i32>} : memref<16x512xf32, #tpu.memory_space<vmem>>, vector<16x256xf32>,
    %c0_120 = arith.constant 0 : index
    %c0_121 = arith.constant 0 : index
    %118 = vector.load %arg14[%c0_120, %c0_121] : memref<16x512xf32, #tpu.memory_space<vmem>>, vector<16x512xf32>
    %c0_122 = arith.constant 0 : index
    %c0_123 = arith.constant 0 : index
    %119 = vector.load %arg5[%c0_122, %c0_123] : memref<1x256xf32, #tpu.memory_space<vmem>>, vector<1x256xf32>
    %c0_124 = arith.constant 0 : index
    %c0_125 = arith.constant 0 : index
    %120 = vector.load %arg6[%c0_124, %c0_125] : memref<1x256xf32, #tpu.memory_space<vmem>>, vector<1x256xf32>
    %121 = vector.extract_strided_slice %118 {offsets = [0, 95], sizes = [16, 256], strides = [1, 1]} : vector<16x512xf32> to vector<16x256xf32>
    %122 = vector.broadcast %119 : vector<1x256xf32> to vector<16x256xf32>
    %123 = arith.mulf %121, %122 : vector<16x256xf32>
    %124 = arith.truncf %123 : vector<16x256xf32> to vector<16x256xbf16>
    %c0_126 = arith.constant 0 : index
    %c0_127 = arith.constant 0 : index
    %125 = vector.load %arg15[%c0_126, %c0_127] : memref<144x256xbf16, #tpu.memory_space<vmem>>, vector<16x256xbf16>
    tpu.vector_store %arg15[%c0_126, %c0_127], %124 {strides = array<i32>} : memref<144x256xbf16, #tpu.memory_space<vmem>>, vector<16x256xbf16>,
    %126 = vector.extract_strided_slice %118 {offsets = [0, 96], sizes = [16, 256], strides = [1, 1]} : vector<16x512xf32> to vector<16x256xf32>
    %127 = arith.truncf %126 : vector<16x256xf32> to vector<16x256xbf16>
    %c16 = arith.constant 16 : index
    %c0_128 = arith.constant 0 : index
    %128 = vector.load %arg15[%c16, %c0_128] : memref<144x256xbf16, #tpu.memory_space<vmem>>, vector<16x256xbf16>
    tpu.vector_store %arg15[%c16, %c0_128], %127 {strides = array<i32>} : memref<144x256xbf16, #tpu.memory_space<vmem>>, vector<16x256xbf16>,
    %129 = vector.extract_strided_slice %118 {offsets = [0, 97], sizes = [16, 256], strides = [1, 1]} : vector<16x512xf32> to vector<16x256xf32>
    %130 = vector.broadcast %120 : vector<1x256xf32> to vector<16x256xf32>
    %131 = arith.mulf %129, %130 : vector<16x256xf32>
    %132 = arith.truncf %131 : vector<16x256xf32> to vector<16x256xbf16>
    %c32 = arith.constant 32 : index
    %c0_129 = arith.constant 0 : index
    %133 = vector.load %arg15[%c32, %c0_129] : memref<144x256xbf16, #tpu.memory_space<vmem>>, vector<16x256xbf16>
    tpu.vector_store %arg15[%c32, %c0_129], %132 {strides = array<i32>} : memref<144x256xbf16, #tpu.memory_space<vmem>>, vector<16x256xbf16>,
    %134 = vector.extract_strided_slice %118 {offsets = [0, 127], sizes = [16, 256], strides = [1, 1]} : vector<16x512xf32> to vector<16x256xf32>
    %135 = vector.broadcast %119 : vector<1x256xf32> to vector<16x256xf32>
    %136 = arith.mulf %134, %135 : vector<16x256xf32>
    %137 = arith.truncf %136 : vector<16x256xf32> to vector<16x256xbf16>
    %c48 = arith.constant 48 : index
    %c0_130 = arith.constant 0 : index
    %138 = vector.load %arg15[%c48, %c0_130] : memref<144x256xbf16, #tpu.memory_space<vmem>>, vector<16x256xbf16>
    tpu.vector_store %arg15[%c48, %c0_130], %137 {strides = array<i32>} : memref<144x256xbf16, #tpu.memory_space<vmem>>, vector<16x256xbf16>,
    %139 = vector.extract_strided_slice %118 {offsets = [0, 128], sizes = [16, 256], strides = [1, 1]} : vector<16x512xf32> to vector<16x256xf32>
    %140 = arith.truncf %139 : vector<16x256xf32> to vector<16x256xbf16>
    %c64 = arith.constant 64 : index
    %c0_131 = arith.constant 0 : index
    %141 = vector.load %arg15[%c64, %c0_131] : memref<144x256xbf16, #tpu.memory_space<vmem>>, vector<16x256xbf16>
    tpu.vector_store %arg15[%c64, %c0_131], %140 {strides = array<i32>} : memref<144x256xbf16, #tpu.memory_space<vmem>>, vector<16x256xbf16>,
    %142 = vector.extract_strided_slice %118 {offsets = [0, 129], sizes = [16, 256], strides = [1, 1]} : vector<16x512xf32> to vector<16x256xf32>
    %143 = vector.broadcast %120 : vector<1x256xf32> to vector<16x256xf32>
    %144 = arith.mulf %142, %143 : vector<16x256xf32>
    %145 = arith.truncf %144 : vector<16x256xf32> to vector<16x256xbf16>
    %c80 = arith.constant 80 : index
    %c0_132 = arith.constant 0 : index
    %146 = vector.load %arg15[%c80, %c0_132] : memref<144x256xbf16, #tpu.memory_space<vmem>>, vector<16x256xbf16>
    tpu.vector_store %arg15[%c80, %c0_132], %145 {strides = array<i32>} : memref<144x256xbf16, #tpu.memory_space<vmem>>, vector<16x256xbf16>,
    %147 = vector.extract_strided_slice %118 {offsets = [0, 159], sizes = [16, 256], strides = [1, 1]} : vector<16x512xf32> to vector<16x256xf32>
    %148 = vector.broadcast %119 : vector<1x256xf32> to vector<16x256xf32>
    %149 = arith.mulf %147, %148 : vector<16x256xf32>
    %150 = arith.truncf %149 : vector<16x256xf32> to vector<16x256xbf16>
    %c96 = arith.constant 96 : index
    %c0_133 = arith.constant 0 : index
    %151 = vector.load %arg15[%c96, %c0_133] : memref<144x256xbf16, #tpu.memory_space<vmem>>, vector<16x256xbf16>
    tpu.vector_store %arg15[%c96, %c0_133], %150 {strides = array<i32>} : memref<144x256xbf16, #tpu.memory_space<vmem>>, vector<16x256xbf16>,
    %152 = vector.extract_strided_slice %118 {offsets = [0, 160], sizes = [16, 256], strides = [1, 1]} : vector<16x512xf32> to vector<16x256xf32>
    %153 = arith.truncf %152 : vector<16x256xf32> to vector<16x256xbf16>
    %c112 = arith.constant 112 : index
    %c0_134 = arith.constant 0 : index
    %154 = vector.load %arg15[%c112, %c0_134] : memref<144x256xbf16, #tpu.memory_space<vmem>>, vector<16x256xbf16>
    tpu.vector_store %arg15[%c112, %c0_134], %153 {strides = array<i32>} : memref<144x256xbf16, #tpu.memory_space<vmem>>, vector<16x256xbf16>,
    %155 = vector.extract_strided_slice %118 {offsets = [0, 161], sizes = [16, 256], strides = [1, 1]} : vector<16x512xf32> to vector<16x256xf32>
    %156 = vector.broadcast %120 : vector<1x256xf32> to vector<16x256xf32>
    %157 = arith.mulf %155, %156 : vector<16x256xf32>
    %158 = arith.truncf %157 : vector<16x256xf32> to vector<16x256xbf16>
    %c128_135 = arith.constant 128 : index
    %c0_136 = arith.constant 0 : index
    %159 = vector.load %arg15[%c128_135, %c0_136] : memref<144x256xbf16, #tpu.memory_space<vmem>>, vector<16x256xbf16>
    tpu.vector_store %arg15[%c128_135, %c0_136], %158 {strides = array<i32>} : memref<144x256xbf16, #tpu.memory_space<vmem>>, vector<16x256xbf16>,
    %c0_137 = arith.constant 0 : index
    %c0_138 = arith.constant 0 : index
    %160 = vector.load %arg7[%c0_137, %c0_138] : memref<16x144xbf16, #tpu.memory_space<vmem>>, vector<16x144xbf16>
    %c0_139 = arith.constant 0 : index
    %c0_140 = arith.constant 0 : index
    %161 = vector.load %arg15[%c0_139, %c0_140] : memref<144x256xbf16, #tpu.memory_space<vmem>>, vector<144x256xbf16>
    %cst_141 = arith.constant dense<0.000000e+00> : vector<16x256xf32>
    %162 = tpu.matmul %160, %161, %cst_141 {dimension_numbers = #tpu.dot_dimension_numbers<[1], [0], [0], [1], [0, 0, 1, 1], [], []>} : vector<16x144xbf16>, vector<144x256xbf16>, vector<16x256xf32> -> vector<16x256xf32>
    %c0_142 = arith.constant 0 : index
    %c0_143 = arith.constant 0 : index
    %163 = vector.load %arg8[%c0_142, %c0_143] : memref<16x1xf32, #tpu.memory_space<vmem>>, vector<16x1xf32>
    %164 = vector.broadcast %163 : vector<16x1xf32> to vector<16x256xf32>
    %165 = arith.addf %162, %164 : vector<16x256xf32>
    %cst_144 = arith.constant 0.000000e+00 : f32
    %166 = vector.broadcast %cst_144 : f32 to vector<16x256xf32>
    %167 = arith.cmpf ogt, %165, %166 : vector<16x256xf32>
    %cst_145 = arith.constant 0.00999999977 : f32
    %168 = vector.broadcast %cst_145 : f32 to vector<16x256xf32>
    %169 = arith.mulf %168, %165 : vector<16x256xf32>
    %170 = arith.select %167, %165, %169 : vector<16x256xi1>, vector<16x256xf32>
    %c0_146 = arith.constant 0 : index
    %c0_147 = arith.constant 0 : index
    %171 = vector.load %arg9[%c0_146, %c0_147] : memref<16x16xbf16, #tpu.memory_space<vmem>>, vector<16x16xbf16>
    %172 = arith.truncf %170 : vector<16x256xf32> to vector<16x256xbf16>
    %cst_148 = arith.constant dense<0.000000e+00> : vector<16x256xf32>
    %173 = tpu.matmul %171, %172, %cst_148 {dimension_numbers = #tpu.dot_dimension_numbers<[1], [0], [0], [1], [0, 0, 1, 1], [], []>} : vector<16x16xbf16>, vector<16x256xbf16>, vector<16x256xf32> -> vector<16x256xf32>
    %c0_149 = arith.constant 0 : index
    %c0_150 = arith.constant 0 : index
    %174 = vector.load %arg10[%c0_149, %c0_150] : memref<16x1xf32, #tpu.memory_space<vmem>>, vector<16x1xf32>
    %175 = vector.broadcast %174 : vector<16x1xf32> to vector<16x256xf32>
    %176 = arith.addf %173, %175 : vector<16x256xf32>
    %cst_151 = arith.constant 0.000000e+00 : f32
    %177 = vector.broadcast %cst_151 : f32 to vector<16x256xf32>
    %178 = arith.cmpf ogt, %176, %177 : vector<16x256xf32>
    %cst_152 = arith.constant 0.00999999977 : f32
    %179 = vector.broadcast %cst_152 : f32 to vector<16x256xf32>
    %180 = arith.mulf %179, %176 : vector<16x256xf32>
    %181 = arith.select %178, %176, %180 : vector<16x256xi1>, vector<16x256xf32>
    %c0_153 = arith.constant 0 : index
    %c0_154 = arith.constant 0 : index
    %182 = vector.load %arg11[%c0_153, %c0_154] : memref<8x16xbf16, #tpu.memory_space<vmem>>, vector<8x16xbf16>
    %183 = arith.truncf %181 : vector<16x256xf32> to vector<16x256xbf16>
    %cst_155 = arith.constant dense<0.000000e+00> : vector<8x256xf32>
    %184 = tpu.matmul %182, %183, %cst_155 {dimension_numbers = #tpu.dot_dimension_numbers<[1], [0], [0], [1], [0, 0, 1, 1], [], []>} : vector<8x16xbf16>, vector<16x256xbf16>, vector<8x256xf32> -> vector<8x256xf32>
    %c0_156 = arith.constant 0 : index
    %c0_157 = arith.constant 0 : index
    %185 = vector.load %arg12[%c0_156, %c0_157] : memref<8x1xf32, #tpu.memory_space<vmem>>, vector<8x1xf32>
    %186 = vector.broadcast %185 : vector<8x1xf32> to vector<8x256xf32>
    %187 = arith.addf %184, %186 : vector<8x256xf32>
    %c0_158 = arith.constant 0 : index
    %c0_159 = arith.constant 0 : index
    %c0_160 = arith.constant 0 : index
    %188 = vector.load %arg13[%c0_158, %c0_159, %c0_160] : memref<1x8x256xf32, #tpu.memory_space<vmem>>, vector<1x8x256xf32>
    %189 = vector.shape_cast %188 : vector<1x8x256xf32> to vector<8x256xf32>
    %190 = vector.shape_cast %187 : vector<8x256xf32> to vector<1x8x256xf32>
    tpu.vector_store %arg13[%c0_158, %c0_159, %c0_160], %190 {strides = array<i32>} : memref<1x8x256xf32, #tpu.memory_space<vmem>>, vector<1x8x256xf32>,
    return
  }
  func.func @transform_0(%arg0: i32) -> (i32, i32, i32) {
    %c0_i32 = arith.constant 0 : i32
    %c0_i32_0 = arith.constant 0 : i32
    %c0_i32_1 = arith.constant 0 : i32
    return %arg0, %c0_i32, %c0_i32_0 : i32, i32, i32
  }
  func.func @transform_1(%arg0: i32) -> (i32, i32, i32) {
    %c0_i32 = arith.constant 0 : i32
    %c0_i32_0 = arith.constant 0 : i32
    %c0_i32_1 = arith.constant 0 : i32
    %c0_i32_2 = arith.constant 0 : i32
    return %c0_i32, %c0_i32_0, %c0_i32_1 : i32, i32, i32
  }
  func.func @transform_2(%arg0: i32) -> (i32, i32, i32) {
    %c0_i32 = arith.constant 0 : i32
    %c0_i32_0 = arith.constant 0 : i32
    %c0_i32_1 = arith.constant 0 : i32
    %c0_i32_2 = arith.constant 0 : i32
    return %c0_i32, %c0_i32_0, %c0_i32_1 : i32, i32, i32
  }
  func.func @transform_3(%arg0: i32) -> (i32, i32) {
    %c0_i32 = arith.constant 0 : i32
    %c0_i32_0 = arith.constant 0 : i32
    %c0_i32_1 = arith.constant 0 : i32
    return %c0_i32, %c0_i32_0 : i32, i32
  }
  func.func @transform_4(%arg0: i32) -> (i32, i32) {
    %c0_i32 = arith.constant 0 : i32
    %c0_i32_0 = arith.constant 0 : i32
    %c0_i32_1 = arith.constant 0 : i32
    return %c0_i32, %c0_i32_0 : i32, i32
  }
  func.func @transform_5(%arg0: i32) -> (i32, i32) {
    %c0_i32 = arith.constant 0 : i32
    %c0_i32_0 = arith.constant 0 : i32
    %c0_i32_1 = arith.constant 0 : i32
    return %c0_i32, %c0_i32_0 : i32, i32
  }
  func.func @transform_6(%arg0: i32) -> (i32, i32) {
    %c0_i32 = arith.constant 0 : i32
    %c0_i32_0 = arith.constant 0 : i32
    %c0_i32_1 = arith.constant 0 : i32
    return %c0_i32, %c0_i32_0 : i32, i32
  }
  func.func @transform_7(%arg0: i32) -> (i32, i32) {
    %c0_i32 = arith.constant 0 : i32
    %c0_i32_0 = arith.constant 0 : i32
    %c0_i32_1 = arith.constant 0 : i32
    return %c0_i32, %c0_i32_0 : i32, i32
  }
  func.func @transform_8(%arg0: i32) -> (i32, i32) {
    %c0_i32 = arith.constant 0 : i32
    %c0_i32_0 = arith.constant 0 : i32
    %c0_i32_1 = arith.constant 0 : i32
    return %c0_i32, %c0_i32_0 : i32, i32
  }
  func.func @transform_9(%arg0: i32) -> (i32, i32) {
    %c0_i32 = arith.constant 0 : i32
    %c0_i32_0 = arith.constant 0 : i32
    %c0_i32_1 = arith.constant 0 : i32
    return %c0_i32, %c0_i32_0 : i32, i32
  }
  func.func @transform_10(%arg0: i32) -> (i32, i32) {
    %c0_i32 = arith.constant 0 : i32
    %c0_i32_0 = arith.constant 0 : i32
    %c0_i32_1 = arith.constant 0 : i32
    return %c0_i32, %c0_i32_0 : i32, i32
  }
  func.func @transform_11(%arg0: i32) -> (i32, i32) {
    %c0_i32 = arith.constant 0 : i32
    %c0_i32_0 = arith.constant 0 : i32
    %c0_i32_1 = arith.constant 0 : i32
    return %c0_i32, %c0_i32_0 : i32, i32
  }
  func.func @transform_12(%arg0: i32) -> (i32, i32, i32) {
    %c0_i32 = arith.constant 0 : i32
    %c0_i32_0 = arith.constant 0 : i32
    %c0_i32_1 = arith.constant 0 : i32
    return %arg0, %c0_i32, %c0_i32_0 : i32, i32, i32
  }
}

</mosaic_0001>

<llo_original>
// kernel: tpu_custom_call.1
$region0: #{tpu_custom_call.1}
  #allocation0 [shape = 'u32[]', space=smem, size = 0x4, offset = 0x4, fixed_abs, tag = 'smem constant byte address 0x4 - core index']
  #allocation1 [shape = 'u32[144,128]{1,0:T(1,128)}', space=vmem, size = 0x12000, scoped, tag = 'internal scratch']
  #allocation2 [shape = 'f32[16,512]{1,0:T(8,128)}', space=vmem, size = 0x8000, scoped, tag = 'scratch operand']
  #allocation3 [shape = 'bf16[144,256]{1,0:T(8,128)(2,1)}', space=vmem, size = 0x12000, scoped, tag = 'scratch operand']
  %s0 = inlined_call_operand.vmem [shape: bf16[2,16,32], index: 0, kind: input, shape index: {}]
  %s1 = inlined_call_operand.hbm [shape: bf16[16,16,32], index: 1, kind: input, shape index: {}]
  %s2 = inlined_call_operand.hbm [shape: f32[16,16,256], index: 2, kind: input, shape index: {}]
  %s3 = inlined_call_operand.vmem [shape: f32[16,256], index: 3, kind: input, shape index: {}]
  %s4 = inlined_call_operand.hbm [shape: f32[1,256], index: 4, kind: input, shape index: {}]
  %s5 = inlined_call_operand.hbm [shape: f32[1,256], index: 5, kind: input, shape index: {}]
  %s6 = inlined_call_operand.hbm [shape: bf16[16,144], index: 6, kind: input, shape index: {}]
  %s7 = inlined_call_operand.vmem [shape: f32[16,1], index: 7, kind: input, shape index: {}]
  %s8 = inlined_call_operand.vmem [shape: bf16[16,16], index: 8, kind: input, shape index: {}]
  %s9 = inlined_call_operand.vmem [shape: f32[16,1], index: 9, kind: input, shape index: {}]
  %s10 = inlined_call_operand.vmem [shape: bf16[8,16], index: 10, kind: input, shape index: {}]
  %s11 = inlined_call_operand.vmem [shape: f32[8,1], index: 11, kind: input, shape index: {}]
  %s12 = inlined_call_operand.hbm [shape: f32[2,8,256], index: 12, kind: output, shape index: {}]
  %s13 = sld [smem:[#allocation0]]
  $region101: #{tpu_custom_call.1} parent=0
    _
  %s15 = ssub.s32 1, %s13
  %s16 = scalar_select 0, %s15, %s13
  $region1: #{tpu_custom_call.1} parent=0
    #allocation4 [shape = 'u8[65536]{0}', space=vmem, size = 0x10000, scoped, tag = 'input window, operand 1, single buffered']
    #allocation5 [shape = 's32[2]{0}', space=sflag, size = 0x8, scoped, tag = 'scoped memory for tpu_custom_call.1']
    #allocation6 [shape = 's32[2]{0}', space=sflag, size = 0x8, scoped, tag = 'scoped memory for tpu_custom_call.1']
    #allocation7 [shape = 'u8[262144]{0}', space=vmem, size = 0x40000, scoped, tag = 'input window, operand 2, single buffered']
    #allocation8 [shape = 's32[1]{0}', space=sflag, size = 0x4, scoped, tag = 'scoped memory for tpu_custom_call.1']
    #allocation9 [shape = 'u8[1024]{0}', space=vmem, size = 0x400, scoped, tag = 'input window, operand 4, single buffered']
    #allocation10 [shape = 'u8[1024]{0}', space=vmem, size = 0x400, scoped, tag = 'input window, operand 5, single buffered']
    #allocation11 [shape = 's32[1]{0}', space=sflag, size = 0x4, scoped, tag = 'scoped memory for tpu_custom_call.1']
    #allocation12 [shape = 'u8[8192]{0}', space=vmem, size = 0x2000, scoped, tag = 'input window, operand 6, single buffered']
    #allocation13 [shape = 'u8[16384]{0}', space=vmem, size = 0x4000, scoped, tag = 'output window, operand 0']
    %17 = vsyncpa [#allocation5], 0
    %18 = vsyncpa [#allocation8], 0
    %19 = vsyncpa [#allocation11], 0
    %20 = vsyncpa [#allocation6], 0
    %s21 = scalar_lea.sflag [#allocation6], 1
    %22 = vsyncpa %s21, 0
    loop: start=0, step=1, limit=4
    $region2: #{tpu_custom_call.1} parent=1 // loop_pre_header
      _
    $region3: #{tpu_custom_call.1} parent=1 // loop_header
      %s24 = sphi 0, %s28
      %p25 = scmp.ge.s32.totalorder %s24, 4
      %s34 = sphi 0, %s36
      %s37 = sphi 0, %s34
      %s38 = sphi 0, %s37
      %s54 = sphi 0, %s38
      %s58 = sphi 0, %s58
      %s60 = sphi 0, %s58
      %s61 = sphi 0, %s60
      %s75 = sphi 0, %s61
      %s79 = sphi 0, %s79
      %s81 = sphi 0, %s79
      %s82 = sphi 0, %s81
      %s96 = sphi 0, %s82
      %s100 = sphi 0, %s100
      %s102 = sphi 0, %s100
      %s103 = sphi 0, %s102
      %s117 = sphi 0, %s103
      %s121 = sphi 0, %s121
      %s123 = sphi 0, %s121
      %s124 = sphi 0, %s123
      %s138 = sphi 0, %s124
      %s142 = sphi 0, %s142
      %s144 = sphi 0, %s142
      %s145 = sphi 0, %s144
      %s159 = sphi 0, %s145
      %s163 = sphi 0, %s163
      %s165 = sphi 0, %s163
      %s166 = sphi 0, %s165
      %s180 = sphi 0, %s166
      %s184 = sphi 0, %s184
      %s186 = sphi 0, %s184
      %s187 = sphi 0, %s186
      %s201 = sphi 0, %s187
      %s205 = sphi 0, %s205
      %s207 = sphi 0, %s205
      %s208 = sphi 0, %s207
      %s222 = sphi 0, %s208
      %s226 = sphi 0, %s226
      %s228 = sphi 0, %s226
      %s229 = sphi 0, %s228
      %s243 = sphi 0, %s229
      %s247 = sphi 0, %s247
      %s249 = sphi 0, %s247
      %s250 = sphi 0, %s249
      %s264 = sphi 0, %s250
      %s268 = sphi 0, %s268
      %s270 = sphi 0, %s268
      %s271 = sphi 0, %s270
      %s285 = sphi 0, %s271
      %s291 = sphi 0, %s293
      %s294 = sphi 0, %s291
      %s295 = sphi 0, %s294
      %s311 = sphi 0, %s295
    $region4: #{tpu_custom_call.1} parent=1 // loop_header_branch
      %27 = sbr.rel (%p25) target = $region8
    $region5: #{tpu_custom_call.1} parent=1 // loop_body
      %s29 = ssub.s32 %s24, 1
      %s30 = ssub.s32 %s24, 2
      %s31 = sadd.s32 %s24, 1
      %s32 = ssub.s32 %s24, %s31
      %p33 = scmp.eq.s32.totalorder %s32, 0
      %s35 = sadd.s32 %s34, 1
      %s36 = scalar_select %p33, %s34, %s35
      %p39 = pneg %p33
      %p40 = scmp.eq.s32.totalorder %s24, 1
      %p41 = por %p39, %p40
      %p42 = scmp.ne.s32.totalorder %s34, %s37
      %p43 = scmp.eq.s32.totalorder %s24, 0
      %p44 = por %p42, %p43
      %p45 = scmp.ne.s32.totalorder %s34, %s37
      %p46 = scmp.eq.s32.totalorder %s29, 1
      %p47 = por %p45, %p46
      %p48 = scmp.ne.s32.totalorder %s37, %s38
      %p49 = scmp.eq.s32.totalorder %s29, 0
      %p50 = por %p48, %p49
      %p51 = scmp.ne.s32.totalorder %s37, %s38
      %p52 = scmp.eq.s32.totalorder %s30, 1
      %p53 = por %p51, %p52
      %p55 = scmp.ne.s32.totalorder %s38, %s54
      %p56 = scmp.eq.s32.totalorder %s30, 0
      %p57 = por %p55, %p56
      %s59 = sadd.s32 %s58, 1
      %p62 = scmp.eq.s32.totalorder %s24, 1
      %p63 = scmp.ne.s32.totalorder %s58, %s60
      %p64 = scmp.eq.s32.totalorder %s24, 0
      %p65 = por %p63, %p64
      %p66 = scmp.ne.s32.totalorder %s58, %s60
      %p67 = scmp.eq.s32.totalorder %s29, 1
      %p68 = por %p66, %p67
      %p69 = scmp.ne.s32.totalorder %s60, %s61
      %p70 = scmp.eq.s32.totalorder %s29, 0
      %p71 = por %p69, %p70
      %p72 = scmp.ne.s32.totalorder %s60, %s61
      %p73 = scmp.eq.s32.totalorder %s30, 1
      %p74 = por %p72, %p73
      %p76 = scmp.ne.s32.totalorder %s61, %s75
      %p77 = scmp.eq.s32.totalorder %s30, 0
      %p78 = por %p76, %p77
      %s80 = sadd.s32 %s79, 1
      %p83 = scmp.eq.s32.totalorder %s24, 1
      %p84 = scmp.ne.s32.totalorder %s79, %s81
      %p85 = scmp.eq.s32.totalorder %s24, 0
      %p86 = por %p84, %p85
      %p87 = scmp.ne.s32.totalorder %s79, %s81
      %p88 = scmp.eq.s32.totalorder %s29, 1
      %p89 = por %p87, %p88
      %p90 = scmp.ne.s32.totalorder %s81, %s82
      %p91 = scmp.eq.s32.totalorder %s29, 0
      %p92 = por %p90, %p91
      %p93 = scmp.ne.s32.totalorder %s81, %s82
      %p94 = scmp.eq.s32.totalorder %s30, 1
      %p95 = por %p93, %p94
      %p97 = scmp.ne.s32.totalorder %s82, %s96
      %p98 = scmp.eq.s32.totalorder %s30, 0
      %p99 = por %p97, %p98
      %s101 = sadd.s32 %s100, 1
      %p104 = scmp.eq.s32.totalorder %s24, 1
      %p105 = scmp.ne.s32.totalorder %s100, %s102
      %p106 = scmp.eq.s32.totalorder %s24, 0
      %p107 = por %p105, %p106
      %p108 = scmp.ne.s32.totalorder %s100, %s102
      %p109 = scmp.eq.s32.totalorder %s29, 1
      %p110 = por %p108, %p109
      %p111 = scmp.ne.s32.totalorder %s102, %s103
      %p112 = scmp.eq.s32.totalorder %s29, 0
      %p113 = por %p111, %p112
      %p114 = scmp.ne.s32.totalorder %s102, %s103
      %p115 = scmp.eq.s32.totalorder %s30, 1
      %p116 = por %p114, %p115
      %p118 = scmp.ne.s32.totalorder %s103, %s117
      %p119 = scmp.eq.s32.totalorder %s30, 0
      %p120 = por %p118, %p119
      %s122 = sadd.s32 %s121, 1
      %p125 = scmp.eq.s32.totalorder %s24, 1
      %p126 = scmp.ne.s32.totalorder %s121, %s123
      %p127 = scmp.eq.s32.totalorder %s24, 0
      %p128 = por %p126, %p127
      %p129 = scmp.ne.s32.totalorder %s121, %s123
      %p130 = scmp.eq.s32.totalorder %s29, 1
      %p131 = por %p129, %p130
      %p132 = scmp.ne.s32.totalorder %s123, %s124
      %p133 = scmp.eq.s32.totalorder %s29, 0
      %p134 = por %p132, %p133
      %p135 = scmp.ne.s32.totalorder %s123, %s124
      %p136 = scmp.eq.s32.totalorder %s30, 1
      %p137 = por %p135, %p136
      %p139 = scmp.ne.s32.totalorder %s124, %s138
      %p140 = scmp.eq.s32.totalorder %s30, 0
      %p141 = por %p139, %p140
      %s143 = sadd.s32 %s142, 1
      %p146 = scmp.eq.s32.totalorder %s24, 1
      %p147 = scmp.ne.s32.totalorder %s142, %s144
      %p148 = scmp.eq.s32.totalorder %s24, 0
      %p149 = por %p147, %p148
      %p150 = scmp.ne.s32.totalorder %s142, %s144
      %p151 = scmp.eq.s32.totalorder %s29, 1
      %p152 = por %p150, %p151
      %p153 = scmp.ne.s32.totalorder %s144, %s145
      %p154 = scmp.eq.s32.totalorder %s29, 0
      %p155 = por %p153, %p154
      %p156 = scmp.ne.s32.totalorder %s144, %s145
      %p157 = scmp.eq.s32.totalorder %s30, 1
      %p158 = por %p156, %p157
      %p160 = scmp.ne.s32.totalorder %s145, %s159
      %p161 = scmp.eq.s32.totalorder %s30, 0
      %p162 = por %p160, %p161
      %s164 = sadd.s32 %s163, 1
      %p167 = scmp.eq.s32.totalorder %s24, 1
      %p168 = scmp.ne.s32.totalorder %s163, %s165
      %p169 = scmp.eq.s32.totalorder %s24, 0
      %p170 = por %p168, %p169
      %p171 = scmp.ne.s32.totalorder %s163, %s165
      %p172 = scmp.eq.s32.totalorder %s29, 1
      %p173 = por %p171, %p172
      %p174 = scmp.ne.s32.totalorder %s165, %s166
      %p175 = scmp.eq.s32.totalorder %s29, 0
      %p176 = por %p174, %p175
      %p177 = scmp.ne.s32.totalorder %s165, %s166
      %p178 = scmp.eq.s32.totalorder %s30, 1
      %p179 = por %p177, %p178
      %p181 = scmp.ne.s32.totalorder %s166, %s180
      %p182 = scmp.eq.s32.totalorder %s30, 0
      %p183 = por %p181, %p182
      %s185 = sadd.s32 %s184, 1
      %p188 = scmp.eq.s32.totalorder %s24, 1
      %p189 = scmp.ne.s32.totalorder %s184, %s186
      %p190 = scmp.eq.s32.totalorder %s24, 0
      %p191 = por %p189, %p190
      %p192 = scmp.ne.s32.totalorder %s184, %s186
      %p193 = scmp.eq.s32.totalorder %s29, 1
      %p194 = por %p192, %p193
      %p195 = scmp.ne.s32.totalorder %s186, %s187
      %p196 = scmp.eq.s32.totalorder %s29, 0
      %p197 = por %p195, %p196
      %p198 = scmp.ne.s32.totalorder %s186, %s187
      %p199 = scmp.eq.s32.totalorder %s30, 1
      %p200 = por %p198, %p199
      %p202 = scmp.ne.s32.totalorder %s187, %s201
      %p203 = scmp.eq.s32.totalorder %s30, 0
      %p204 = por %p202, %p203
      %s206 = sadd.s32 %s205, 1
      %p209 = scmp.eq.s32.totalorder %s24, 1
      %p210 = scmp.ne.s32.totalorder %s205, %s207
      %p211 = scmp.eq.s32.totalorder %s24, 0
      %p212 = por %p210, %p211
      %p213 = scmp.ne.s32.totalorder %s205, %s207
      %p214 = scmp.eq.s32.totalorder %s29, 1
      %p215 = por %p213, %p214
      %p216 = scmp.ne.s32.totalorder %s207, %s208
      %p217 = scmp.eq.s32.totalorder %s29, 0
      %p218 = por %p216, %p217
      %p219 = scmp.ne.s32.totalorder %s207, %s208
      %p220 = scmp.eq.s32.totalorder %s30, 1
      %p221 = por %p219, %p220
      %p223 = scmp.ne.s32.totalorder %s208, %s222
      %p224 = scmp.eq.s32.totalorder %s30, 0
      %p225 = por %p223, %p224
      %s227 = sadd.s32 %s226, 1
      %p230 = scmp.eq.s32.totalorder %s24, 1
      %p231 = scmp.ne.s32.totalorder %s226, %s228
      %p232 = scmp.eq.s32.totalorder %s24, 0
      %p233 = por %p231, %p232
      %p234 = scmp.ne.s32.totalorder %s226, %s228
      %p235 = scmp.eq.s32.totalorder %s29, 1
      %p236 = por %p234, %p235
      %p237 = scmp.ne.s32.totalorder %s228, %s229
      %p238 = scmp.eq.s32.totalorder %s29, 0
      %p239 = por %p237, %p238
      %p240 = scmp.ne.s32.totalorder %s228, %s229
      %p241 = scmp.eq.s32.totalorder %s30, 1
      %p242 = por %p240, %p241
      %p244 = scmp.ne.s32.totalorder %s229, %s243
      %p245 = scmp.eq.s32.totalorder %s30, 0
      %p246 = por %p244, %p245
      %s248 = sadd.s32 %s247, 1
      %p251 = scmp.eq.s32.totalorder %s24, 1
      %p252 = scmp.ne.s32.totalorder %s247, %s249
      %p253 = scmp.eq.s32.totalorder %s24, 0
      %p254 = por %p252, %p253
      %p255 = scmp.ne.s32.totalorder %s247, %s249
      %p256 = scmp.eq.s32.totalorder %s29, 1
      %p257 = por %p255, %p256
      %p258 = scmp.ne.s32.totalorder %s249, %s250
      %p259 = scmp.eq.s32.totalorder %s29, 0
      %p260 = por %p258, %p259
      %p261 = scmp.ne.s32.totalorder %s249, %s250
      %p262 = scmp.eq.s32.totalorder %s30, 1
      %p263 = por %p261, %p262
      %p265 = scmp.ne.s32.totalorder %s250, %s264
      %p266 = scmp.eq.s32.totalorder %s30, 0
      %p267 = por %p265, %p266
      %s269 = sadd.s32 %s268, 1
      %p272 = scmp.eq.s32.totalorder %s24, 1
      %p273 = scmp.ne.s32.totalorder %s268, %s270
      %p274 = scmp.eq.s32.totalorder %s24, 0
      %p275 = por %p273, %p274
      %p276 = scmp.ne.s32.totalorder %s268, %s270
      %p277 = scmp.eq.s32.totalorder %s29, 1
      %p278 = por %p276, %p277
      %p279 = scmp.ne.s32.totalorder %s270, %s271
      %p280 = scmp.eq.s32.totalorder %s29, 0
      %p281 = por %p279, %p280
      %p282 = scmp.ne.s32.totalorder %s270, %s271
      %p283 = scmp.eq.s32.totalorder %s30, 1
      %p284 = por %p282, %p283
      %p286 = scmp.ne.s32.totalorder %s271, %s285
      %p287 = scmp.eq.s32.totalorder %s30, 0
      %p288 = por %p286, %p287
      %s289 = ssub.s32 %s24, %s31
      %p290 = scmp.eq.s32.totalorder %s289, 0
      %s292 = sadd.s32 %s291, 1
      %s293 = scalar_select %p290, %s291, %s292
      %p296 = pneg %p290
      %p297 = scmp.eq.s32.totalorder %s24, 1
      %p298 = por %p296, %p297
      %p299 = scmp.ne.s32.totalorder %s291, %s294
      %p300 = scmp.eq.s32.totalorder %s24, 0
      %p301 = por %p299, %p300
      %p302 = scmp.ne.s32.totalorder %s291, %s294
      %p303 = scmp.eq.s32.totalorder %s29, 1
      %p304 = por %p302, %p303
      %p305 = scmp.ne.s32.totalorder %s294, %s295
      %p306 = scmp.eq.s32.totalorder %s29, 0
      %p307 = por %p305, %p306
      %p308 = scmp.ne.s32.totalorder %s294, %s295
      %p309 = scmp.eq.s32.totalorder %s30, 1
      %p310 = por %p308, %p309
      %p312 = scmp.ne.s32.totalorder %s295, %s311
      %p313 = scmp.eq.s32.totalorder %s30, 0
      %p314 = por %p312, %p313
      %p315 = scmp.le.s32.totalorder 1, %s24
      %p316 = scmp.lt.s32.totalorder %s24, 3
      %p317 = pnand %p315, %p316
      %p318 = pneg %p317
      // Predicated region
      $region9: #{tpu_custom_call.1} parent=5 // pred_check
        _
      $region10: #{tpu_custom_call.1} parent=5 // pred_check_branch
        %320 = sbr.rel (%p317) target = $region12
      $region11: #{tpu_custom_call.1} parent=5 // pred_region
        %s321 = ssub.s32 %s24, 1
        // Predicated region
        $region13: #{tpu_custom_call.1} parent=11 // pred_check
          %p322 = pneg %p71
        $region14: #{tpu_custom_call.1} parent=11 // pred_check_branch
          %324 = sbr.rel (%p322) target = $region16
        $region15: #{tpu_custom_call.1} parent=11 // pred_region
          %s326 = ssub.s32 2048, 2048
          %327 = vsyncadd [#allocation5], %s326
          %s328 = sshll.u32 [#allocation4], 4
          %s329 = int_to_ptr.vmem [resolvable:$true] %s328
          %334 = dma.hbm_to_vmem [thread:$0]  %s1, 2048, %s329, [#allocation5], 64, 64, 4
        $region16: #{tpu_custom_call.1} parent=11 // pred_fallthru
          _
        // Predicated region
        $region17: #{tpu_custom_call.1} parent=11 // pred_check
          %p335 = pneg %p92
        $region18: #{tpu_custom_call.1} parent=11 // pred_check_branch
          %337 = sbr.rel (%p335) target = $region20
        $region19: #{tpu_custom_call.1} parent=11 // pred_region
          %s339 = ssub.s32 8192, 8192
          %340 = vsyncadd [#allocation8], %s339
          %s341 = sshll.u32 [#allocation7], 4
          %s342 = int_to_ptr.vmem [resolvable:$true] %s341
          %347 = dma.hbm_to_vmem [thread:$0]  %s2, 8192, %s342, [#allocation8], 256, 256, 16
        $region20: #{tpu_custom_call.1} parent=11 // pred_fallthru
          _
        // Predicated region
        $region21: #{tpu_custom_call.1} parent=11 // pred_check
          %p348 = pneg %p113
        $region22: #{tpu_custom_call.1} parent=11 // pred_check_branch
          %350 = sbr.rel (%p348) target = $region24
        $region23: #{tpu_custom_call.1} parent=11 // pred_region
          _
        $region24: #{tpu_custom_call.1} parent=11 // pred_fallthru
          _
        // Predicated region
        $region25: #{tpu_custom_call.1} parent=11 // pred_check
          %p351 = pneg %p134
        $region26: #{tpu_custom_call.1} parent=11 // pred_check_branch
          %353 = sbr.rel (%p351) target = $region28
        $region27: #{tpu_custom_call.1} parent=11 // pred_region
          %s355 = ssub.s32 32, 32
          %356 = vsyncadd [#allocation8], %s355
          %s358 = sshll.u32 [#allocation9], 4
          %s359 = int_to_ptr.vmem [resolvable:$true] %s358
          %361 = dma.hbm_to_vmem [thread:$0]  %s4, 32, %s359, [#allocation8]
        $region28: #{tpu_custom_call.1} parent=11 // pred_fallthru
          _
        // Predicated region
        $region29: #{tpu_custom_call.1} parent=11 // pred_check
          %p362 = pneg %p155
        $region30: #{tpu_custom_call.1} parent=11 // pred_check_branch
          %364 = sbr.rel (%p362) target = $region32
        $region31: #{tpu_custom_call.1} parent=11 // pred_region
          %s366 = ssub.s32 32, 32
          %367 = vsyncadd [#allocation11], %s366
          %s369 = sshll.u32 [#allocation10], 4
          %s370 = int_to_ptr.vmem [resolvable:$true] %s369
          %372 = dma.hbm_to_vmem [thread:$0]  %s5, 32, %s370, [#allocation11]
        $region32: #{tpu_custom_call.1} parent=11 // pred_fallthru
          _
        // Predicated region
        $region33: #{tpu_custom_call.1} parent=11 // pred_check
          %p373 = pneg %p176
        $region34: #{tpu_custom_call.1} parent=11 // pred_check_branch
          %375 = sbr.rel (%p373) target = $region36
        $region35: #{tpu_custom_call.1} parent=11 // pred_region
          %s377 = ssub.s32 256, 256
          %378 = vsyncadd [#allocation11], %s377
          %s379 = sshll.u32 [#allocation12], 4
          %s380 = int_to_ptr.vmem [resolvable:$true] %s379
          %385 = dma.hbm_to_vmem [thread:$0]  %s6, 256, %s380, [#allocation11], 128, 128, 8
        $region36: #{tpu_custom_call.1} parent=11 // pred_fallthru
          _
        // Predicated region
        $region37: #{tpu_custom_call.1} parent=11 // pred_check
          %p386 = pneg %p197
        $region38: #{tpu_custom_call.1} parent=11 // pred_check_branch
          %388 = sbr.rel (%p386) target = $region40
        $region39: #{tpu_custom_call.1} parent=11 // pred_region
          _
        $region40: #{tpu_custom_call.1} parent=11 // pred_fallthru
          _
        // Predicated region
        $region41: #{tpu_custom_call.1} parent=11 // pred_check
          %p389 = pneg %p218
        $region42: #{tpu_custom_call.1} parent=11 // pred_check_branch
          %391 = sbr.rel (%p389) target = $region44
        $region43: #{tpu_custom_call.1} parent=11 // pred_region
          _
        $region44: #{tpu_custom_call.1} parent=11 // pred_fallthru
          _
        // Predicated region
        $region45: #{tpu_custom_call.1} parent=11 // pred_check
          %p392 = pneg %p239
        $region46: #{tpu_custom_call.1} parent=11 // pred_check_branch
          %394 = sbr.rel (%p392) target = $region48
        $region47: #{tpu_custom_call.1} parent=11 // pred_region
          _
        $region48: #{tpu_custom_call.1} parent=11 // pred_fallthru
          _
        // Predicated region
        $region49: #{tpu_custom_call.1} parent=11 // pred_check
          %p395 = pneg %p260
        $region50: #{tpu_custom_call.1} parent=11 // pred_check_branch
          %397 = sbr.rel (%p395) target = $region52
        $region51: #{tpu_custom_call.1} parent=11 // pred_region
          _
        $region52: #{tpu_custom_call.1} parent=11 // pred_fallthru
          _
        // Predicated region
        $region53: #{tpu_custom_call.1} parent=11 // pred_check
          %p398 = pneg %p281
        $region54: #{tpu_custom_call.1} parent=11 // pred_check_branch
          %400 = sbr.rel (%p398) target = $region56
        $region55: #{tpu_custom_call.1} parent=11 // pred_region
          _
        $region56: #{tpu_custom_call.1} parent=11 // pred_fallthru
          _
      $region12: #{tpu_custom_call.1} parent=5 // pred_fallthru
        _
      %p401 = scmp.lt.s32.totalorder %s24, 2
      // Predicated region
      $region57: #{tpu_custom_call.1} parent=5 // pred_check
        %p402 = pneg %p401
      $region58: #{tpu_custom_call.1} parent=5 // pred_check_branch
        %404 = sbr.rel (%p402) target = $region60
      $region59: #{tpu_custom_call.1} parent=5 // pred_region
        // Predicated region
        $region61: #{tpu_custom_call.1} parent=59 // pred_check
          %p405 = pneg %p44
        $region62: #{tpu_custom_call.1} parent=59 // pred_check_branch
          %407 = sbr.rel (%p405) target = $region64
        $region63: #{tpu_custom_call.1} parent=59 // pred_region
          %p408 = scmp.lt.s32.totalorder %s24, 1
          %s409 = scalar_select %p408, %s24, 1
          %s410 = smul.addr %s409, 2
          %s411 = smul.addr %s410, 4
          %s412 = scalar_lea.vmem %s0, %s411
        $region64: #{tpu_custom_call.1} parent=59 // pred_fallthru
          _
      $region60: #{tpu_custom_call.1} parent=5 // pred_fallthru
        _
      %p413 = scmp.le.s32.totalorder 1, %s24
      %p414 = scmp.lt.s32.totalorder %s24, 3
      %p415 = pnand %p413, %p414
      %p416 = pneg %p415
      // Predicated region
      $region65: #{tpu_custom_call.1} parent=5 // pred_check
        _
      $region66: #{tpu_custom_call.1} parent=5 // pred_check_branch
        %418 = sbr.rel (%p415) target = $region68
      $region67: #{tpu_custom_call.1} parent=5 // pred_region
        %s419 = ssub.s32 %s24, 1
        // Predicated region
        $region69: #{tpu_custom_call.1} parent=67 // pred_check
          %p420 = pneg %p71
        $region70: #{tpu_custom_call.1} parent=67 // pred_check_branch
          %422 = sbr.rel (%p420) target = $region72
        $region71: #{tpu_custom_call.1} parent=67 // pred_region
          %423 = dma.done [#allocation5], 2048
        $region72: #{tpu_custom_call.1} parent=67 // pred_fallthru
          _
        // Predicated region
        $region73: #{tpu_custom_call.1} parent=67 // pred_check
          %p424 = pneg %p92
        $region74: #{tpu_custom_call.1} parent=67 // pred_check_branch
          %426 = sbr.rel (%p424) target = $region76
        $region75: #{tpu_custom_call.1} parent=67 // pred_region
          %427 = dma.done [#allocation8], 8192
        $region76: #{tpu_custom_call.1} parent=67 // pred_fallthru
          _
        // Predicated region
        $region77: #{tpu_custom_call.1} parent=67 // pred_check
          %p428 = pneg %p134
        $region78: #{tpu_custom_call.1} parent=67 // pred_check_branch
          %430 = sbr.rel (%p428) target = $region80
        $region79: #{tpu_custom_call.1} parent=67 // pred_region
          %431 = dma.done [#allocation8], 32
        $region80: #{tpu_custom_call.1} parent=67 // pred_fallthru
          _
        // Predicated region
        $region81: #{tpu_custom_call.1} parent=67 // pred_check
          %p432 = pneg %p155
        $region82: #{tpu_custom_call.1} parent=67 // pred_check_branch
          %434 = sbr.rel (%p432) target = $region84
        $region83: #{tpu_custom_call.1} parent=67 // pred_region
          %435 = dma.done [#allocation11], 32
        $region84: #{tpu_custom_call.1} parent=67 // pred_fallthru
          _
        // Predicated region
        $region85: #{tpu_custom_call.1} parent=67 // pred_check
          %p436 = pneg %p176
        $region86: #{tpu_custom_call.1} parent=67 // pred_check_branch
          %438 = sbr.rel (%p436) target = $region88
        $region87: #{tpu_custom_call.1} parent=67 // pred_region
          %439 = dma.done [#allocation11], 256
        $region88: #{tpu_custom_call.1} parent=67 // pred_fallthru
          _
        %p440 = scmp.lt.s32.totalorder %s29, 1
        %s441 = scalar_select %p440, %s29, 1
        %s442 = smul.addr %s441, 2
        %s443 = smul.addr %s442, 4
        %s444 = scalar_lea.vmem %s0, %s443
        %p445 = pneg %p50
        %p446 = pneg %p47
        %p447 = pneg %p71
        %p448 = pneg %p68
        %p449 = pneg %p92
        %p450 = pneg %p89
        %p451 = pneg %p113
        %p452 = pneg %p110
        %p453 = pneg %p134
        %p454 = pneg %p131
        %p455 = pneg %p155
        %p456 = pneg %p152
        %p457 = pneg %p176
        %p458 = pneg %p173
        %p459 = pneg %p197
        %p460 = pneg %p194
        %p461 = pneg %p218
        %p462 = pneg %p215
        %p463 = pneg %p239
        %p464 = pneg %p236
        %p465 = pneg %p260
        %p466 = pneg %p257
        %p467 = pneg %p281
        %p468 = pneg %p278
        %p469 = pneg %p307
        %p470 = pneg %p304
        %s471 = sand.u32 %s294, 1
        %s472 = scalar_lea.sflag [#allocation6], %s471
        %s473 = sand.u32 %s294, 1
        %s474 = smul.addr %s473, 16
        %s475 = scalar_lea.vmem [#allocation13], %s474
        %p476 = scmp.lt.s32.totalorder %s29, 1
        %s477 = scalar_select %p476, %s29, 1
        %s478 = smul.addr %s477, 2
        %s479 = smul.addr %s478, 4
        %s480 = scalar_lea.vmem %s0, %s479
        %v482 = vld [vmem:[%s480] sm:$0xf]
        %v483 = vld [vmem:[%s480 + $0x4] sm:$0xf]
        %v484 = vld [vmem:[%s3] sm:$0xff]
        %v485 = vld [vmem:[%s3 + $0x8] sm:$0xff]
        %v486 = vld [vmem:[%s3 + $0x10] sm:$0xff]
        %v487 = vld [vmem:[%s3 + $0x18] sm:$0xff]
        %v488 = vld [vmem:[#allocation4] sm:$0xf]
        %v489 = vld [vmem:[#allocation4 + $0x4] sm:$0xf]
        %v492 = vunpack.c.l.b16 %v488
        %v493 = vunpack.c.l.b16 %v489
        %v494 = vpack.c.b16 %v493, %v492
        %v497 = vunpack.c.l.b16 %v482
        %v498 = vunpack.c.l.b16 %v483
        %v499 = vpack.c.b16 %v498, %v497
        %vm500 = vcmask 261120
        %v502 = vsel %vm500, %v494, 0
        %v505 = vsel %vm500, %v499, 0
        %507 = vmatprep.subr.bf16.mxu0 0
        %508 = vmatpush1.bf16.xpose.msra.mxu0 0
        %509 = vmatprep.subr.bf16.mxu0 0
        %510 = vmatpush1.bf16.xpose.msra.mxu0 0
        %511 = vmatprep.subr.bf16.mxu0 0
        %512 = vmatpush1.bf16.xpose.msra.mxu0 0
        %513 = vmatprep.subr.bf16.mxu0 0
        %514 = vmatpush1.bf16.xpose.msra.mxu0 0
        %515 = vmatprep.subr.bf16.mxu0 0
        %516 = vmatpush1.bf16.xpose.msra.mxu0 0
        %517 = vmatprep.subr.bf16.mxu0 0
        %518 = vmatpush1.bf16.xpose.msra.mxu0 0
        %519 = vmatprep.subr.bf16.mxu0 0
        %520 = vmatpush1.bf16.xpose.msra.mxu0 0
        %521 = vmatprep.subr.bf16.mxu0 0
        %522 = vmatpush1.bf16.xpose.msra.mxu0 %v505
        %523 = vmatprep.subr.bf16.mxu0 0
        %524 = vmatpush2.bf16.xpose.msra.mxu0 0
        %525 = vmatprep.subr.bf16.mxu0 0
        %526 = vmatpush2.bf16.xpose.msra.mxu0 0
        %527 = vmatprep.subr.bf16.mxu0 0
        %528 = vmatpush2.bf16.xpose.msra.mxu0 0
        %529 = vmatprep.subr.bf16.mxu0 0
        %530 = vmatpush2.bf16.xpose.msra.mxu0 0
        %531 = vmatprep.subr.bf16.mxu0 0
        %532 = vmatpush2.bf16.xpose.msra.mxu0 0
        %533 = vmatprep.subr.bf16.mxu0 0
        %534 = vmatpush2.bf16.xpose.msra.mxu0 0
        %535 = vmatprep.subr.bf16.mxu0 0
        %536 = vmatpush2.bf16.xpose.msra.mxu0 0
        %537 = vmatprep.subr.bf16.mxu0 0
        %538 = vmatpush2.bf16.xpose.msra.mxu0 0
        %539 = vmatprep.mubr.bf16.mxu0 0
        %540 = vmatmul.mubr.bf16.gmra.mxu0 %v502
        %v541 = vpop.f32.mrf.mxu0
        %v542 = vadd.f32 0.0, %v541
        %v543 = vpop.f32.mrf.mxu0
        %v544 = vpop.f32.mrf.mxu0
        %v545 = vadd.f32 0.0, %v544
        %v546 = vpop.f32.mrf.mxu0
        %547 = vdwg.mxu0
        %v548 = vld [vmem:[#allocation7] sm:$0xff]
        %v549 = vld [vmem:[#allocation7 + $0x8] sm:$0xff]
        %v550 = vld [vmem:[#allocation7 + $0x10] sm:$0xff]
        %v551 = vld [vmem:[#allocation7 + $0x18] sm:$0xff]
        %vm552 = vcmask 130048
        %v554 = vsel %vm552, %v542, 0
        %v557 = vsel %vm552, %v545, 0
        %559 = vmatprep.subr.mxu0 0.0
        %560 = vmatpush1.msra.mxu0 0.0
        %561 = vmatprep.subr.mxu0 0.0
        %562 = vmatpush1.msra.mxu0 0.0
        %563 = vmatprep.subr.mxu0 0.0
        %564 = vmatpush1.msra.mxu0 0.0
        %565 = vmatprep.subr.mxu0 0.0
        %566 = vmatpush1.msra.mxu0 0.0
        %567 = vmatprep.subr.mxu0 0.0
        %568 = vmatpush1.msra.mxu0 0.0
        %569 = vmatprep.subr.mxu0 0.0
        %570 = vmatpush1.msra.mxu0 0.0
        %571 = vmatprep.subr.mxu0 0.0
        %572 = vmatpush1.msra.mxu0 0.0
        %573 = vmatprep.subr.mxu0 0.0
        %574 = vmatpush1.msra.mxu0 0.0
        %575 = vmatprep.subr.mxu0 0.0
        %576 = vmatpush1.msra.mxu0 0.0
        %577 = vmatprep.subr.mxu0 0.0
        %578 = vmatpush1.msra.mxu0 0.0
        %579 = vmatprep.subr.mxu0 0.0
        %580 = vmatpush1.msra.mxu0 0.0
        %581 = vmatprep.subr.mxu0 0.0
        %582 = vmatpush1.msra.mxu0 0.0
        %583 = vmatprep.subr.mxu0 0.0
        %584 = vmatpush1.msra.mxu0 0.0
        %585 = vmatprep.subr.mxu0 0.0
        %586 = vmatpush1.msra.mxu0 0.0
        %587 = vmatprep.subr.mxu0 %v551
        %588 = vmatpush1.msra.mxu0 %v550
        %589 = vmatprep.subr.mxu0 %v549
        %590 = vmatpush1.msra.mxu0 %v548
        %591 = vmatprep.subr.mxu0 0.0
        %592 = vmatpush2.msra.mxu0 0.0
        %593 = vmatprep.subr.mxu0 0.0
        %594 = vmatpush2.msra.mxu0 0.0
        %595 = vmatprep.subr.mxu0 0.0
        %596 = vmatpush2.msra.mxu0 0.0
        %597 = vmatprep.subr.mxu0 0.0
        %598 = vmatpush2.msra.mxu0 0.0
        %599 = vmatprep.subr.mxu0 0.0
        %600 = vmatpush2.msra.mxu0 0.0
        %601 = vmatprep.subr.mxu0 0.0
        %602 = vmatpush2.msra.mxu0 0.0
        %603 = vmatprep.subr.mxu0 0.0
        %604 = vmatpush2.msra.mxu0 0.0
        %605 = vmatprep.subr.mxu0 0.0
        %606 = vmatpush2.msra.mxu0 0.0
        %607 = vmatprep.subr.mxu0 0.0
        %608 = vmatpush2.msra.mxu0 0.0
        %609 = vmatprep.subr.mxu0 0.0
        %610 = vmatpush2.msra.mxu0 0.0
        %611 = vmatprep.subr.mxu0 0.0
        %612 = vmatpush2.msra.mxu0 0.0
        %613 = vmatprep.subr.mxu0 0.0
        %614 = vmatpush2.msra.mxu0 0.0
        %615 = vmatprep.subr.mxu0 0.0
        %616 = vmatpush2.msra.mxu0 0.0
        %617 = vmatprep.subr.mxu0 0.0
        %618 = vmatpush2.msra.mxu0 0.0
        %619 = vmatprep.subr.mxu0 0.0
        %620 = vmatpush2.msra.mxu0 0.0
        %621 = vmatprep.subr.mxu0 0.0
        %622 = vmatpush2.msra.mxu0 0.0
        %623 = vmatprep.mubr.f32.mxu0 0.0
        %624 = vmatmul.mubr.f32.gmra.mxu0 %v554
        %v625 = vpop.f32.mrf.mxu0
        %v626 = vadd.f32 0.0, %v625
        %v627 = vpop.f32.mrf.mxu0
        %v628 = vadd.f32 0.0, %v627
        %629 = vmatprep.mubr.f32.mxu0 0.0
        %630 = vmatmul.mubr.f32.gmra.mxu0 %v557
        %v631 = vpop.f32.mrf.mxu0
        %v632 = vadd.f32 0.0, %v631
        %v633 = vpop.f32.mrf.mxu0
        %v634 = vadd.f32 0.0, %v633
        %635 = vdwg.mxu0
        %v636 = vadd.f32 %v484, %v626
        %v637 = vadd.f32 %v485, %v628
        %v638 = vadd.f32 %v486, %v632
        %v639 = vadd.f32 %v487, %v634
        %s640 = scalar_lea.vmem [#allocation4], 8
        %v641 = vld [vmem:[%s640] sm:$0xf]
        %v642 = vld [vmem:[%s640 + $0x4] sm:$0xf]
        %v645 = vunpack.c.l.b16 %v641
        %v646 = vunpack.c.l.b16 %v642
        %v647 = vpack.c.b16 %v646, %v645
        %v649 = vsel %vm500, %v647, 0
        %651 = vmatprep.subr.bf16.mxu0 0
        %652 = vmatpush1.bf16.xpose.msra.mxu0 0
        %653 = vmatprep.subr.bf16.mxu0 0
        %654 = vmatpush1.bf16.xpose.msra.mxu0 0
        %655 = vmatprep.subr.bf16.mxu0 0
        %656 = vmatpush1.bf16.xpose.msra.mxu0 0
        %657 = vmatprep.subr.bf16.mxu0 0
        %658 = vmatpush1.bf16.xpose.msra.mxu0 0
        %659 = vmatprep.subr.bf16.mxu0 0
        %660 = vmatpush1.bf16.xpose.msra.mxu0 0
        %661 = vmatprep.subr.bf16.mxu0 0
        %662 = vmatpush1.bf16.xpose.msra.mxu0 0
        %663 = vmatprep.subr.bf16.mxu0 0
        %664 = vmatpush1.bf16.xpose.msra.mxu0 0
        %665 = vmatprep.subr.bf16.mxu0 0
        %666 = vmatpush1.bf16.xpose.msra.mxu0 %v505
        %667 = vmatprep.subr.bf16.mxu0 0
        %668 = vmatpush2.bf16.xpose.msra.mxu0 0
        %669 = vmatprep.subr.bf16.mxu0 0
        %670 = vmatpush2.bf16.xpose.msra.mxu0 0
        %671 = vmatprep.subr.bf16.mxu0 0
        %672 = vmatpush2.bf16.xpose.msra.mxu0 0
        %673 = vmatprep.subr.bf16.mxu0 0
        %674 = vmatpush2.bf16.xpose.msra.mxu0 0
        %675 = vmatprep.subr.bf16.mxu0 0
        %676 = vmatpush2.bf16.xpose.msra.mxu0 0
        %677 = vmatprep.subr.bf16.mxu0 0
        %678 = vmatpush2.bf16.xpose.msra.mxu0 0
        %679 = vmatprep.subr.bf16.mxu0 0
        %680 = vmatpush2.bf16.xpose.msra.mxu0 0
        %681 = vmatprep.subr.bf16.mxu0 0
        %682 = vmatpush2.bf16.xpose.msra.mxu0 0
        %683 = vmatprep.mubr.bf16.mxu0 0
        %684 = vmatmul.mubr.bf16.gmra.mxu0 %v649
        %v685 = vpop.f32.mrf.mxu0
        %v686 = vadd.f32 0.0, %v685
        %v687 = vpop.f32.mrf.mxu0
        %v688 = vpop.f32.mrf.mxu0
        %v689 = vadd.f32 0.0, %v688
        %v690 = vpop.f32.mrf.mxu0
        %691 = vdwg.mxu0
        %s692 = scalar_lea.vmem [#allocation7], 32
        %v693 = vld [vmem:[%s692] sm:$0xff]
        %v694 = vld [vmem:[%s692 + $0x8] sm:$0xff]
        %v695 = vld [vmem:[%s692 + $0x10] sm:$0xff]
        %v696 = vld [vmem:[%s692 + $0x18] sm:$0xff]
        %v698 = vsel %vm552, %v686, 0
        %v701 = vsel %vm552, %v689, 0
        %703 = vmatprep.subr.mxu0 0.0
        %704 = vmatpush1.msra.mxu0 0.0
        %705 = vmatprep.subr.mxu0 0.0
        %706 = vmatpush1.msra.mxu0 0.0
        %707 = vmatprep.subr.mxu0 0.0
        %708 = vmatpush1.msra.mxu0 0.0
        %709 = vmatprep.subr.mxu0 0.0
        %710 = vmatpush1.msra.mxu0 0.0
        %711 = vmatprep.subr.mxu0 0.0
        %712 = vmatpush1.msra.mxu0 0.0
        %713 = vmatprep.subr.mxu0 0.0
        %714 = vmatpush1.msra.mxu0 0.0
        %715 = vmatprep.subr.mxu0 0.0
        %716 = vmatpush1.msra.mxu0 0.0
        %717 = vmatprep.subr.mxu0 0.0
        %718 = vmatpush1.msra.mxu0 0.0
        %719 = vmatprep.subr.mxu0 0.0
        %720 = vmatpush1.msra.mxu0 0.0
        %721 = vmatprep.subr.mxu0 0.0
        %722 = vmatpush1.msra.mxu0 0.0
        %723 = vmatprep.subr.mxu0 0.0
        %724 = vmatpush1.msra.mxu0 0.0
        %725 = vmatprep.subr.mxu0 0.0
        %726 = vmatpush1.msra.mxu0 0.0
        %727 = vmatprep.subr.mxu0 0.0
        %728 = vmatpush1.msra.mxu0 0.0
        %729 = vmatprep.subr.mxu0 0.0
        %730 = vmatpush1.msra.mxu0 0.0
        %731 = vmatprep.subr.mxu0 %v696
        %732 = vmatpush1.msra.mxu0 %v695
        %733 = vmatprep.subr.mxu0 %v694
        %734 = vmatpush1.msra.mxu0 %v693
        %735 = vmatprep.subr.mxu0 0.0
        %736 = vmatpush2.msra.mxu0 0.0
        %737 = vmatprep.subr.mxu0 0.0
        %738 = vmatpush2.msra.mxu0 0.0
        %739 = vmatprep.subr.mxu0 0.0
        %740 = vmatpush2.msra.mxu0 0.0
        %741 = vmatprep.subr.mxu0 0.0
        %742 = vmatpush2.msra.mxu0 0.0
        %743 = vmatprep.subr.mxu0 0.0
        %744 = vmatpush2.msra.mxu0 0.0
        %745 = vmatprep.subr.mxu0 0.0
        %746 = vmatpush2.msra.mxu0 0.0
        %747 = vmatprep.subr.mxu0 0.0
        %748 = vmatpush2.msra.mxu0 0.0
        %749 = vmatprep.subr.mxu0 0.0
        %750 = vmatpush2.msra.mxu0 0.0
        %751 = vmatprep.subr.mxu0 0.0
        %752 = vmatpush2.msra.mxu0 0.0
        %753 = vmatprep.subr.mxu0 0.0
        %754 = vmatpush2.msra.mxu0 0.0
        %755 = vmatprep.subr.mxu0 0.0
        %756 = vmatpush2.msra.mxu0 0.0
        %757 = vmatprep.subr.mxu0 0.0
        %758 = vmatpush2.msra.mxu0 0.0
        %759 = vmatprep.subr.mxu0 0.0
        %760 = vmatpush2.msra.mxu0 0.0
        %761 = vmatprep.subr.mxu0 0.0
        %762 = vmatpush2.msra.mxu0 0.0
        %763 = vmatprep.subr.mxu0 0.0
        %764 = vmatpush2.msra.mxu0 0.0
        %765 = vmatprep.subr.mxu0 0.0
        %766 = vmatpush2.msra.mxu0 0.0
        %767 = vmatprep.mubr.f32.mxu0 0.0
        %768 = vmatmul.mubr.f32.gmra.mxu0 %v698
        %v769 = vpop.f32.mrf.mxu0
        %v770 = vadd.f32 0.0, %v769
        %v771 = vpop.f32.mrf.mxu0
        %v772 = vadd.f32 0.0, %v771
        %773 = vmatprep.mubr.f32.mxu0 0.0
        %774 = vmatmul.mubr.f32.gmra.mxu0 %v701
        %v775 = vpop.f32.mrf.mxu0
        %v776 = vadd.f32 0.0, %v775
        %v777 = vpop.f32.mrf.mxu0
        %v778 = vadd.f32 0.0, %v777
        %779 = vdwg.mxu0
        %v780 = vadd.f32 %v636, %v770
        %v781 = vadd.f32 %v637, %v772
        %v782 = vadd.f32 %v638, %v776
        %v783 = vadd.f32 %v639, %v778
        %s784 = scalar_lea.vmem [#allocation4], 16
        %v785 = vld [vmem:[%s784] sm:$0xf]
        %v786 = vld [vmem:[%s784 + $0x4] sm:$0xf]
        %v789 = vunpack.c.l.b16 %v785
        %v790 = vunpack.c.l.b16 %v786
        %v791 = vpack.c.b16 %v790, %v789
        %v793 = vsel %vm500, %v791, 0
        %795 = vmatprep.subr.bf16.mxu0 0
        %796 = vmatpush1.bf16.xpose.msra.mxu0 0
        %797 = vmatprep.subr.bf16.mxu0 0
        %798 = vmatpush1.bf16.xpose.msra.mxu0 0
        %799 = vmatprep.subr.bf16.mxu0 0
        %800 = vmatpush1.bf16.xpose.msra.mxu0 0
        %801 = vmatprep.subr.bf16.mxu0 0
        %802 = vmatpush1.bf16.xpose.msra.mxu0 0
        %803 = vmatprep.subr.bf16.mxu0 0
        %804 = vmatpush1.bf16.xpose.msra.mxu0 0
        %805 = vmatprep.subr.bf16.mxu0 0
        %806 = vmatpush1.bf16.xpose.msra.mxu0 0
        %807 = vmatprep.subr.bf16.mxu0 0
        %808 = vmatpush1.bf16.xpose.msra.mxu0 0
        %809 = vmatprep.subr.bf16.mxu0 0
        %810 = vmatpush1.bf16.xpose.msra.mxu0 %v505
        %811 = vmatprep.subr.bf16.mxu0 0
        %812 = vmatpush2.bf16.xpose.msra.mxu0 0
        %813 = vmatprep.subr.bf16.mxu0 0
        %814 = vmatpush2.bf16.xpose.msra.mxu0 0
        %815 = vmatprep.subr.bf16.mxu0 0
        %816 = vmatpush2.bf16.xpose.msra.mxu0 0
        %817 = vmatprep.subr.bf16.mxu0 0
        %818 = vmatpush2.bf16.xpose.msra.mxu0 0
        %819 = vmatprep.subr.bf16.mxu0 0
        %820 = vmatpush2.bf16.xpose.msra.mxu0 0
        %821 = vmatprep.subr.bf16.mxu0 0
        %822 = vmatpush2.bf16.xpose.msra.mxu0 0
        %823 = vmatprep.subr.bf16.mxu0 0
        %824 = vmatpush2.bf16.xpose.msra.mxu0 0
        %825 = vmatprep.subr.bf16.mxu0 0
        %826 = vmatpush2.bf16.xpose.msra.mxu0 0
        %827 = vmatprep.mubr.bf16.mxu0 0
        %828 = vmatmul.mubr.bf16.gmra.mxu0 %v793
        %v829 = vpop.f32.mrf.mxu0
        %v830 = vadd.f32 0.0, %v829
        %v831 = vpop.f32.mrf.mxu0
        %v832 = vpop.f32.mrf.mxu0
        %v833 = vadd.f32 0.0, %v832
        %v834 = vpop.f32.mrf.mxu0
        %835 = vdwg.mxu0
        %s836 = scalar_lea.vmem [#allocation7], 64
        %v837 = vld [vmem:[%s836] sm:$0xff]
        %v838 = vld [vmem:[%s836 + $0x8] sm:$0xff]
        %v839 = vld [vmem:[%s836 + $0x10] sm:$0xff]
        %v840 = vld [vmem:[%s836 + $0x18] sm:$0xff]
        %v842 = vsel %vm552, %v830, 0
        %v845 = vsel %vm552, %v833, 0
        %847 = vmatprep.subr.mxu0 0.0
        %848 = vmatpush1.msra.mxu0 0.0
        %849 = vmatprep.subr.mxu0 0.0
        %850 = vmatpush1.msra.mxu0 0.0
        %851 = vmatprep.subr.mxu0 0.0
        %852 = vmatpush1.msra.mxu0 0.0
        %853 = vmatprep.subr.mxu0 0.0
        %854 = vmatpush1.msra.mxu0 0.0
        %855 = vmatprep.subr.mxu0 0.0
        %856 = vmatpush1.msra.mxu0 0.0
        %857 = vmatprep.subr.mxu0 0.0
        %858 = vmatpush1.msra.mxu0 0.0
        %859 = vmatprep.subr.mxu0 0.0
        %860 = vmatpush1.msra.mxu0 0.0
        %861 = vmatprep.subr.mxu0 0.0
        %862 = vmatpush1.msra.mxu0 0.0
        %863 = vmatprep.subr.mxu0 0.0
        %864 = vmatpush1.msra.mxu0 0.0
        %865 = vmatprep.subr.mxu0 0.0
        %866 = vmatpush1.msra.mxu0 0.0
        %867 = vmatprep.subr.mxu0 0.0
        %868 = vmatpush1.msra.mxu0 0.0
        %869 = vmatprep.subr.mxu0 0.0
        %870 = vmatpush1.msra.mxu0 0.0
        %871 = vmatprep.subr.mxu0 0.0
        %872 = vmatpush1.msra.mxu0 0.0
        %873 = vmatprep.subr.mxu0 0.0
        %874 = vmatpush1.msra.mxu0 0.0
        %875 = vmatprep.subr.mxu0 %v840
        %876 = vmatpush1.msra.mxu0 %v839
        %877 = vmatprep.subr.mxu0 %v838
        %878 = vmatpush1.msra.mxu0 %v837
        %879 = vmatprep.subr.mxu0 0.0
        %880 = vmatpush2.msra.mxu0 0.0
        %881 = vmatprep.subr.mxu0 0.0
        %882 = vmatpush2.msra.mxu0 0.0
        %883 = vmatprep.subr.mxu0 0.0
        %884 = vmatpush2.msra.mxu0 0.0
        %885 = vmatprep.subr.mxu0 0.0
        %886 = vmatpush2.msra.mxu0 0.0
        %887 = vmatprep.subr.mxu0 0.0
        %888 = vmatpush2.msra.mxu0 0.0
        %889 = vmatprep.subr.mxu0 0.0
        %890 = vmatpush2.msra.mxu0 0.0
        %891 = vmatprep.subr.mxu0 0.0
        %892 = vmatpush2.msra.mxu0 0.0
        %893 = vmatprep.subr.mxu0 0.0
        %894 = vmatpush2.msra.mxu0 0.0
        %895 = vmatprep.subr.mxu0 0.0
        %896 = vmatpush2.msra.mxu0 0.0
        %897 = vmatprep.subr.mxu0 0.0
        %898 = vmatpush2.msra.mxu0 0.0
        %899 = vmatprep.subr.mxu0 0.0
        %900 = vmatpush2.msra.mxu0 0.0
        %901 = vmatprep.subr.mxu0 0.0
        %902 = vmatpush2.msra.mxu0 0.0
        %903 = vmatprep.subr.mxu0 0.0
        %904 = vmatpush2.msra.mxu0 0.0
        %905 = vmatprep.subr.mxu0 0.0
        %906 = vmatpush2.msra.mxu0 0.0
        %907 = vmatprep.subr.mxu0 0.0
        %908 = vmatpush2.msra.mxu0 0.0
        %909 = vmatprep.subr.mxu0 0.0
        %910 = vmatpush2.msra.mxu0 0.0
        %911 = vmatprep.mubr.f32.mxu0 0.0
        %912 = vmatmul.mubr.f32.gmra.mxu0 %v842
        %v913 = vpop.f32.mrf.mxu0
        %v914 = vadd.f32 0.0, %v913
        %v915 = vpop.f32.mrf.mxu0
        %v916 = vadd.f32 0.0, %v915
        %917 = vmatprep.mubr.f32.mxu0 0.0
        %918 = vmatmul.mubr.f32.gmra.mxu0 %v845
        %v919 = vpop.f32.mrf.mxu0
        %v920 = vadd.f32 0.0, %v919
        %v921 = vpop.f32.mrf.mxu0
        %v922 = vadd.f32 0.0, %v921
        %923 = vdwg.mxu0
        %v924 = vadd.f32 %v780, %v914
        %v925 = vadd.f32 %v781, %v916
        %v926 = vadd.f32 %v782, %v920
        %v927 = vadd.f32 %v783, %v922
        %s928 = scalar_lea.vmem [#allocation4], 24
        %v929 = vld [vmem:[%s928] sm:$0xf]
        %v930 = vld [vmem:[%s928 + $0x4] sm:$0xf]
        %v933 = vunpack.c.l.b16 %v929
        %v934 = vunpack.c.l.b16 %v930
        %v935 = vpack.c.b16 %v934, %v933
        %v937 = vsel %vm500, %v935, 0
        %939 = vmatprep.subr.bf16.mxu0 0
        %940 = vmatpush1.bf16.xpose.msra.mxu0 0
        %941 = vmatprep.subr.bf16.mxu0 0
        %942 = vmatpush1.bf16.xpose.msra.mxu0 0
        %943 = vmatprep.subr.bf16.mxu0 0
        %944 = vmatpush1.bf16.xpose.msra.mxu0 0
        %945 = vmatprep.subr.bf16.mxu0 0
        %946 = vmatpush1.bf16.xpose.msra.mxu0 0
        %947 = vmatprep.subr.bf16.mxu0 0
        %948 = vmatpush1.bf16.xpose.msra.mxu0 0
        %949 = vmatprep.subr.bf16.mxu0 0
        %950 = vmatpush1.bf16.xpose.msra.mxu0 0
        %951 = vmatprep.subr.bf16.mxu0 0
        %952 = vmatpush1.bf16.xpose.msra.mxu0 0
        %953 = vmatprep.subr.bf16.mxu0 0
        %954 = vmatpush1.bf16.xpose.msra.mxu0 %v505
        %955 = vmatprep.subr.bf16.mxu0 0
        %956 = vmatpush2.bf16.xpose.msra.mxu0 0
        %957 = vmatprep.subr.bf16.mxu0 0
        %958 = vmatpush2.bf16.xpose.msra.mxu0 0
        %959 = vmatprep.subr.bf16.mxu0 0
        %960 = vmatpush2.bf16.xpose.msra.mxu0 0
        %961 = vmatprep.subr.bf16.mxu0 0
        %962 = vmatpush2.bf16.xpose.msra.mxu0 0
        %963 = vmatprep.subr.bf16.mxu0 0
        %964 = vmatpush2.bf16.xpose.msra.mxu0 0
        %965 = vmatprep.subr.bf16.mxu0 0
        %966 = vmatpush2.bf16.xpose.msra.mxu0 0
        %967 = vmatprep.subr.bf16.mxu0 0
        %968 = vmatpush2.bf16.xpose.msra.mxu0 0
        %969 = vmatprep.subr.bf16.mxu0 0
        %970 = vmatpush2.bf16.xpose.msra.mxu0 0
        %971 = vmatprep.mubr.bf16.mxu0 0
        %972 = vmatmul.mubr.bf16.gmra.mxu0 %v937
        %v973 = vpop.f32.mrf.mxu0
        %v974 = vadd.f32 0.0, %v973
        %v975 = vpop.f32.mrf.mxu0
        %v976 = vpop.f32.mrf.mxu0
        %v977 = vadd.f32 0.0, %v976
        %v978 = vpop.f32.mrf.mxu0
        %979 = vdwg.mxu0
        %s980 = scalar_lea.vmem [#allocation7], 96
        %v981 = vld [vmem:[%s980] sm:$0xff]
        %v982 = vld [vmem:[%s980 + $0x8] sm:$0xff]
        %v983 = vld [vmem:[%s980 + $0x10] sm:$0xff]
        %v984 = vld [vmem:[%s980 + $0x18] sm:$0xff]
        %v986 = vsel %vm552, %v974, 0
        %v989 = vsel %vm552, %v977, 0
        %991 = vmatprep.subr.mxu0 0.0
        %992 = vmatpush1.msra.mxu0 0.0
        %993 = vmatprep.subr.mxu0 0.0
        %994 = vmatpush1.msra.mxu0 0.0
        %995 = vmatprep.subr.mxu0 0.0
        %996 = vmatpush1.msra.mxu0 0.0
        %997 = vmatprep.subr.mxu0 0.0
        %998 = vmatpush1.msra.mxu0 0.0
        %999 = vmatprep.subr.mxu0 0.0
        %1000 = vmatpush1.msra.mxu0 0.0
        %1001 = vmatprep.subr.mxu0 0.0
        %1002 = vmatpush1.msra.mxu0 0.0
        %1003 = vmatprep.subr.mxu0 0.0
        %1004 = vmatpush1.msra.mxu0 0.0
        %1005 = vmatprep.subr.mxu0 0.0
        %1006 = vmatpush1.msra.mxu0 0.0
        %1007 = vmatprep.subr.mxu0 0.0
        %1008 = vmatpush1.msra.mxu0 0.0
        %1009 = vmatprep.subr.mxu0 0.0
        %1010 = vmatpush1.msra.mxu0 0.0
        %1011 = vmatprep.subr.mxu0 0.0
        %1012 = vmatpush1.msra.mxu0 0.0
        %1013 = vmatprep.subr.mxu0 0.0
        %1014 = vmatpush1.msra.mxu0 0.0
        %1015 = vmatprep.subr.mxu0 0.0
        %1016 = vmatpush1.msra.mxu0 0.0
        %1017 = vmatprep.subr.mxu0 0.0
        %1018 = vmatpush1.msra.mxu0 0.0
        %1019 = vmatprep.subr.mxu0 %v984
        %1020 = vmatpush1.msra.mxu0 %v983
        %1021 = vmatprep.subr.mxu0 %v982
        %1022 = vmatpush1.msra.mxu0 %v981
        %1023 = vmatprep.subr.mxu0 0.0
        %1024 = vmatpush2.msra.mxu0 0.0
        %1025 = vmatprep.subr.mxu0 0.0
        %1026 = vmatpush2.msra.mxu0 0.0
        %1027 = vmatprep.subr.mxu0 0.0
        %1028 = vmatpush2.msra.mxu0 0.0
        %1029 = vmatprep.subr.mxu0 0.0
        %1030 = vmatpush2.msra.mxu0 0.0
        %1031 = vmatprep.subr.mxu0 0.0
        %1032 = vmatpush2.msra.mxu0 0.0
        %1033 = vmatprep.subr.mxu0 0.0
        %1034 = vmatpush2.msra.mxu0 0.0
        %1035 = vmatprep.subr.mxu0 0.0
        %1036 = vmatpush2.msra.mxu0 0.0
        %1037 = vmatprep.subr.mxu0 0.0
        %1038 = vmatpush2.msra.mxu0 0.0
        %1039 = vmatprep.subr.mxu0 0.0
        %1040 = vmatpush2.msra.mxu0 0.0
        %1041 = vmatprep.subr.mxu0 0.0
        %1042 = vmatpush2.msra.mxu0 0.0
        %1043 = vmatprep.subr.mxu0 0.0
        %1044 = vmatpush2.msra.mxu0 0.0
        %1045 = vmatprep.subr.mxu0 0.0
        %1046 = vmatpush2.msra.mxu0 0.0
        %1047 = vmatprep.subr.mxu0 0.0
        %1048 = vmatpush2.msra.mxu0 0.0
        %1049 = vmatprep.subr.mxu0 0.0
        %1050 = vmatpush2.msra.mxu0 0.0
        %1051 = vmatprep.subr.mxu0 0.0
        %1052 = vmatpush2.msra.mxu0 0.0
        %1053 = vmatprep.subr.mxu0 0.0
        %1054 = vmatpush2.msra.mxu0 0.0
        %1055 = vmatprep.mubr.f32.mxu0 0.0
        %1056 = vmatmul.mubr.f32.gmra.mxu0 %v986
        %v1057 = vpop.f32.mrf.mxu0
        %v1058 = vadd.f32 0.0, %v1057
        %v1059 = vpop.f32.mrf.mxu0
        %v1060 = vadd.f32 0.0, %v1059
        %1061 = vmatprep.mubr.f32.mxu0 0.0
        %1062 = vmatmul.mubr.f32.gmra.mxu0 %v989
        %v1063 = vpop.f32.mrf.mxu0
        %v1064 = vadd.f32 0.0, %v1063
        %v1065 = vpop.f32.mrf.mxu0
        %v1066 = vadd.f32 0.0, %v1065
        %1067 = vdwg.mxu0
        %v1068 = vadd.f32 %v924, %v1058
        %v1069 = vadd.f32 %v925, %v1060
        %v1070 = vadd.f32 %v926, %v1064
        %v1071 = vadd.f32 %v927, %v1066
        %s1072 = scalar_lea.vmem [#allocation4], 32
        %v1073 = vld [vmem:[%s1072] sm:$0xf]
        %v1074 = vld [vmem:[%s1072 + $0x4] sm:$0xf]
        %v1077 = vunpack.c.l.b16 %v1073
        %v1078 = vunpack.c.l.b16 %v1074
        %v1079 = vpack.c.b16 %v1078, %v1077
        %v1081 = vsel %vm500, %v1079, 0
        %1083 = vmatprep.subr.bf16.mxu0 0
        %1084 = vmatpush1.bf16.xpose.msra.mxu0 0
        %1085 = vmatprep.subr.bf16.mxu0 0
        %1086 = vmatpush1.bf16.xpose.msra.mxu0 0
        %1087 = vmatprep.subr.bf16.mxu0 0
        %1088 = vmatpush1.bf16.xpose.msra.mxu0 0
        %1089 = vmatprep.subr.bf16.mxu0 0
        %1090 = vmatpush1.bf16.xpose.msra.mxu0 0
        %1091 = vmatprep.subr.bf16.mxu0 0
        %1092 = vmatpush1.bf16.xpose.msra.mxu0 0
        %1093 = vmatprep.subr.bf16.mxu0 0
        %1094 = vmatpush1.bf16.xpose.msra.mxu0 0
        %1095 = vmatprep.subr.bf16.mxu0 0
        %1096 = vmatpush1.bf16.xpose.msra.mxu0 0
        %1097 = vmatprep.subr.bf16.mxu0 0
        %1098 = vmatpush1.bf16.xpose.msra.mxu0 %v505
        %1099 = vmatprep.subr.bf16.mxu0 0
        %1100 = vmatpush2.bf16.xpose.msra.mxu0 0
        %1101 = vmatprep.subr.bf16.mxu0 0
        %1102 = vmatpush2.bf16.xpose.msra.mxu0 0
        %1103 = vmatprep.subr.bf16.mxu0 0
        %1104 = vmatpush2.bf16.xpose.msra.mxu0 0
        %1105 = vmatprep.subr.bf16.mxu0 0
        %1106 = vmatpush2.bf16.xpose.msra.mxu0 0
        %1107 = vmatprep.subr.bf16.mxu0 0
        %1108 = vmatpush2.bf16.xpose.msra.mxu0 0
        %1109 = vmatprep.subr.bf16.mxu0 0
        %1110 = vmatpush2.bf16.xpose.msra.mxu0 0
        %1111 = vmatprep.subr.bf16.mxu0 0
        %1112 = vmatpush2.bf16.xpose.msra.mxu0 0
        %1113 = vmatprep.subr.bf16.mxu0 0
        %1114 = vmatpush2.bf16.xpose.msra.mxu0 0
        %1115 = vmatprep.mubr.bf16.mxu0 0
        %1116 = vmatmul.mubr.bf16.gmra.mxu0 %v1081
        %v1117 = vpop.f32.mrf.mxu0
        %v1118 = vadd.f32 0.0, %v1117
        %v1119 = vpop.f32.mrf.mxu0
        %v1120 = vpop.f32.mrf.mxu0
        %v1121 = vadd.f32 0.0, %v1120
        %v1122 = vpop.f32.mrf.mxu0
        %1123 = vdwg.mxu0
        %s1124 = scalar_lea.vmem [#allocation7], 128
        %v1125 = vld [vmem:[%s1124] sm:$0xff]
        %v1126 = vld [vmem:[%s1124 + $0x8] sm:$0xff]
        %v1127 = vld [vmem:[%s1124 + $0x10] sm:$0xff]
        %v1128 = vld [vmem:[%s1124 + $0x18] sm:$0xff]
        %v1130 = vsel %vm552, %v1118, 0
        %v1133 = vsel %vm552, %v1121, 0
        %1135 = vmatprep.subr.mxu0 0.0
        %1136 = vmatpush1.msra.mxu0 0.0
        %1137 = vmatprep.subr.mxu0 0.0
        %1138 = vmatpush1.msra.mxu0 0.0
        %1139 = vmatprep.subr.mxu0 0.0
        %1140 = vmatpush1.msra.mxu0 0.0
        %1141 = vmatprep.subr.mxu0 0.0
        %1142 = vmatpush1.msra.mxu0 0.0
        %1143 = vmatprep.subr.mxu0 0.0
        %1144 = vmatpush1.msra.mxu0 0.0
        %1145 = vmatprep.subr.mxu0 0.0
        %1146 = vmatpush1.msra.mxu0 0.0
        %1147 = vmatprep.subr.mxu0 0.0
        %1148 = vmatpush1.msra.mxu0 0.0
        %1149 = vmatprep.subr.mxu0 0.0
        %1150 = vmatpush1.msra.mxu0 0.0
        %1151 = vmatprep.subr.mxu0 0.0
        %1152 = vmatpush1.msra.mxu0 0.0
        %1153 = vmatprep.subr.mxu0 0.0
        %1154 = vmatpush1.msra.mxu0 0.0
        %1155 = vmatprep.subr.mxu0 0.0
        %1156 = vmatpush1.msra.mxu0 0.0
        %1157 = vmatprep.subr.mxu0 0.0
        %1158 = vmatpush1.msra.mxu0 0.0
        %1159 = vmatprep.subr.mxu0 0.0
        %1160 = vmatpush1.msra.mxu0 0.0
        %1161 = vmatprep.subr.mxu0 0.0
        %1162 = vmatpush1.msra.mxu0 0.0
        %1163 = vmatprep.subr.mxu0 %v1128
        %1164 = vmatpush1.msra.mxu0 %v1127
        %1165 = vmatprep.subr.mxu0 %v1126
        %1166 = vmatpush1.msra.mxu0 %v1125
        %1167 = vmatprep.subr.mxu0 0.0
        %1168 = vmatpush2.msra.mxu0 0.0
        %1169 = vmatprep.subr.mxu0 0.0
        %1170 = vmatpush2.msra.mxu0 0.0
        %1171 = vmatprep.subr.mxu0 0.0
        %1172 = vmatpush2.msra.mxu0 0.0
        %1173 = vmatprep.subr.mxu0 0.0
        %1174 = vmatpush2.msra.mxu0 0.0
        %1175 = vmatprep.subr.mxu0 0.0
        %1176 = vmatpush2.msra.mxu0 0.0
        %1177 = vmatprep.subr.mxu0 0.0
        %1178 = vmatpush2.msra.mxu0 0.0
        %1179 = vmatprep.subr.mxu0 0.0
        %1180 = vmatpush2.msra.mxu0 0.0
        %1181 = vmatprep.subr.mxu0 0.0
        %1182 = vmatpush2.msra.mxu0 0.0
        %1183 = vmatprep.subr.mxu0 0.0
        %1184 = vmatpush2.msra.mxu0 0.0
        %1185 = vmatprep.subr.mxu0 0.0
        %1186 = vmatpush2.msra.mxu0 0.0
        %1187 = vmatprep.subr.mxu0 0.0
        %1188 = vmatpush2.msra.mxu0 0.0
        %1189 = vmatprep.subr.mxu0 0.0
        %1190 = vmatpush2.msra.mxu0 0.0
        %1191 = vmatprep.subr.mxu0 0.0
        %1192 = vmatpush2.msra.mxu0 0.0
        %1193 = vmatprep.subr.mxu0 0.0
        %1194 = vmatpush2.msra.mxu0 0.0
        %1195 = vmatprep.subr.mxu0 0.0
        %1196 = vmatpush2.msra.mxu0 0.0
        %1197 = vmatprep.subr.mxu0 0.0
        %1198 = vmatpush2.msra.mxu0 0.0
        %1199 = vmatprep.mubr.f32.mxu0 0.0
        %1200 = vmatmul.mubr.f32.gmra.mxu0 %v1130
        %v1201 = vpop.f32.mrf.mxu0
        %v1202 = vadd.f32 0.0, %v1201
        %v1203 = vpop.f32.mrf.mxu0
        %v1204 = vadd.f32 0.0, %v1203
        %1205 = vmatprep.mubr.f32.mxu0 0.0
        %1206 = vmatmul.mubr.f32.gmra.mxu0 %v1133
        %v1207 = vpop.f32.mrf.mxu0
        %v1208 = vadd.f32 0.0, %v1207
        %v1209 = vpop.f32.mrf.mxu0
        %v1210 = vadd.f32 0.0, %v1209
        %1211 = vdwg.mxu0
        %v1212 = vadd.f32 %v1068, %v1202
        %v1213 = vadd.f32 %v1069, %v1204
        %v1214 = vadd.f32 %v1070, %v1208
        %v1215 = vadd.f32 %v1071, %v1210
        %s1216 = scalar_lea.vmem [#allocation4], 40
        %v1217 = vld [vmem:[%s1216] sm:$0xf]
        %v1218 = vld [vmem:[%s1216 + $0x4] sm:$0xf]
        %v1221 = vunpack.c.l.b16 %v1217
        %v1222 = vunpack.c.l.b16 %v1218
        %v1223 = vpack.c.b16 %v1222, %v1221
        %v1225 = vsel %vm500, %v1223, 0
        %1227 = vmatprep.subr.bf16.mxu0 0
        %1228 = vmatpush1.bf16.xpose.msra.mxu0 0
        %1229 = vmatprep.subr.bf16.mxu0 0
        %1230 = vmatpush1.bf16.xpose.msra.mxu0 0
        %1231 = vmatprep.subr.bf16.mxu0 0
        %1232 = vmatpush1.bf16.xpose.msra.mxu0 0
        %1233 = vmatprep.subr.bf16.mxu0 0
        %1234 = vmatpush1.bf16.xpose.msra.mxu0 0
        %1235 = vmatprep.subr.bf16.mxu0 0
        %1236 = vmatpush1.bf16.xpose.msra.mxu0 0
        %1237 = vmatprep.subr.bf16.mxu0 0
        %1238 = vmatpush1.bf16.xpose.msra.mxu0 0
        %1239 = vmatprep.subr.bf16.mxu0 0
        %1240 = vmatpush1.bf16.xpose.msra.mxu0 0
        %1241 = vmatprep.subr.bf16.mxu0 0
        %1242 = vmatpush1.bf16.xpose.msra.mxu0 %v505
        %1243 = vmatprep.subr.bf16.mxu0 0
        %1244 = vmatpush2.bf16.xpose.msra.mxu0 0
        %1245 = vmatprep.subr.bf16.mxu0 0
        %1246 = vmatpush2.bf16.xpose.msra.mxu0 0
        %1247 = vmatprep.subr.bf16.mxu0 0
        %1248 = vmatpush2.bf16.xpose.msra.mxu0 0
        %1249 = vmatprep.subr.bf16.mxu0 0
        %1250 = vmatpush2.bf16.xpose.msra.mxu0 0
        %1251 = vmatprep.subr.bf16.mxu0 0
        %1252 = vmatpush2.bf16.xpose.msra.mxu0 0
        %1253 = vmatprep.subr.bf16.mxu0 0
        %1254 = vmatpush2.bf16.xpose.msra.mxu0 0
        %1255 = vmatprep.subr.bf16.mxu0 0
        %1256 = vmatpush2.bf16.xpose.msra.mxu0 0
        %1257 = vmatprep.subr.bf16.mxu0 0
        %1258 = vmatpush2.bf16.xpose.msra.mxu0 0
        %1259 = vmatprep.mubr.bf16.mxu0 0
        %1260 = vmatmul.mubr.bf16.gmra.mxu0 %v1225
        %v1261 = vpop.f32.mrf.mxu0
        %v1262 = vadd.f32 0.0, %v1261
        %v1263 = vpop.f32.mrf.mxu0
        %v1264 = vpop.f32.mrf.mxu0
        %v1265 = vadd.f32 0.0, %v1264
        %v1266 = vpop.f32.mrf.mxu0
        %1267 = vdwg.mxu0
        %s1268 = scalar_lea.vmem [#allocation7], 160
        %v1269 = vld [vmem:[%s1268] sm:$0xff]
        %v1270 = vld [vmem:[%s1268 + $0x8] sm:$0xff]
        %v1271 = vld [vmem:[%s1268 + $0x10] sm:$0xff]
        %v1272 = vld [vmem:[%s1268 + $0x18] sm:$0xff]
        %v1274 = vsel %vm552, %v1262, 0
        %v1277 = vsel %vm552, %v1265, 0
        %1279 = vmatprep.subr.mxu0 0.0
        %1280 = vmatpush1.msra.mxu0 0.0
        %1281 = vmatprep.subr.mxu0 0.0
        %1282 = vmatpush1.msra.mxu0 0.0
        %1283 = vmatprep.subr.mxu0 0.0
        %1284 = vmatpush1.msra.mxu0 0.0
        %1285 = vmatprep.subr.mxu0 0.0
        %1286 = vmatpush1.msra.mxu0 0.0
        %1287 = vmatprep.subr.mxu0 0.0
        %1288 = vmatpush1.msra.mxu0 0.0
        %1289 = vmatprep.subr.mxu0 0.0
        %1290 = vmatpush1.msra.mxu0 0.0
        %1291 = vmatprep.subr.mxu0 0.0
        %1292 = vmatpush1.msra.mxu0 0.0
        %1293 = vmatprep.subr.mxu0 0.0
        %1294 = vmatpush1.msra.mxu0 0.0
        %1295 = vmatprep.subr.mxu0 0.0
        %1296 = vmatpush1.msra.mxu0 0.0
        %1297 = vmatprep.subr.mxu0 0.0
        %1298 = vmatpush1.msra.mxu0 0.0
        %1299 = vmatprep.subr.mxu0 0.0
        %1300 = vmatpush1.msra.mxu0 0.0
        %1301 = vmatprep.subr.mxu0 0.0
        %1302 = vmatpush1.msra.mxu0 0.0
        %1303 = vmatprep.subr.mxu0 0.0
        %1304 = vmatpush1.msra.mxu0 0.0
        %1305 = vmatprep.subr.mxu0 0.0
        %1306 = vmatpush1.msra.mxu0 0.0
        %1307 = vmatprep.subr.mxu0 %v1272
        %1308 = vmatpush1.msra.mxu0 %v1271
        %1309 = vmatprep.subr.mxu0 %v1270
        %1310 = vmatpush1.msra.mxu0 %v1269
        %1311 = vmatprep.subr.mxu0 0.0
        %1312 = vmatpush2.msra.mxu0 0.0
        %1313 = vmatprep.subr.mxu0 0.0
        %1314 = vmatpush2.msra.mxu0 0.0
        %1315 = vmatprep.subr.mxu0 0.0
        %1316 = vmatpush2.msra.mxu0 0.0
        %1317 = vmatprep.subr.mxu0 0.0
        %1318 = vmatpush2.msra.mxu0 0.0
        %1319 = vmatprep.subr.mxu0 0.0
        %1320 = vmatpush2.msra.mxu0 0.0
        %1321 = vmatprep.subr.mxu0 0.0
        %1322 = vmatpush2.msra.mxu0 0.0
        %1323 = vmatprep.subr.mxu0 0.0
        %1324 = vmatpush2.msra.mxu0 0.0
        %1325 = vmatprep.subr.mxu0 0.0
        %1326 = vmatpush2.msra.mxu0 0.0
        %1327 = vmatprep.subr.mxu0 0.0
        %1328 = vmatpush2.msra.mxu0 0.0
        %1329 = vmatprep.subr.mxu0 0.0
        %1330 = vmatpush2.msra.mxu0 0.0
        %1331 = vmatprep.subr.mxu0 0.0
        %1332 = vmatpush2.msra.mxu0 0.0
        %1333 = vmatprep.subr.mxu0 0.0
        %1334 = vmatpush2.msra.mxu0 0.0
        %1335 = vmatprep.subr.mxu0 0.0
        %1336 = vmatpush2.msra.mxu0 0.0
        %1337 = vmatprep.subr.mxu0 0.0
        %1338 = vmatpush2.msra.mxu0 0.0
        %1339 = vmatprep.subr.mxu0 0.0
        %1340 = vmatpush2.msra.mxu0 0.0
        %1341 = vmatprep.subr.mxu0 0.0
        %1342 = vmatpush2.msra.mxu0 0.0
        %1343 = vmatprep.mubr.f32.mxu0 0.0
        %1344 = vmatmul.mubr.f32.gmra.mxu0 %v1274
        %v1345 = vpop.f32.mrf.mxu0
        %v1346 = vadd.f32 0.0, %v1345
        %v1347 = vpop.f32.mrf.mxu0
        %v1348 = vadd.f32 0.0, %v1347
        %1349 = vmatprep.mubr.f32.mxu0 0.0
        %1350 = vmatmul.mubr.f32.gmra.mxu0 %v1277
        %v1351 = vpop.f32.mrf.mxu0
        %v1352 = vadd.f32 0.0, %v1351
        %v1353 = vpop.f32.mrf.mxu0
        %v1354 = vadd.f32 0.0, %v1353
        %1355 = vdwg.mxu0
        %v1356 = vadd.f32 %v1212, %v1346
        %v1357 = vadd.f32 %v1213, %v1348
        %v1358 = vadd.f32 %v1214, %v1352
        %v1359 = vadd.f32 %v1215, %v1354
        %s1360 = scalar_lea.vmem [#allocation4], 48
        %v1361 = vld [vmem:[%s1360] sm:$0xf]
        %v1362 = vld [vmem:[%s1360 + $0x4] sm:$0xf]
        %v1365 = vunpack.c.l.b16 %v1361
        %v1366 = vunpack.c.l.b16 %v1362
        %v1367 = vpack.c.b16 %v1366, %v1365
        %v1369 = vsel %vm500, %v1367, 0
        %1371 = vmatprep.subr.bf16.mxu0 0
        %1372 = vmatpush1.bf16.xpose.msra.mxu0 0
        %1373 = vmatprep.subr.bf16.mxu0 0
        %1374 = vmatpush1.bf16.xpose.msra.mxu0 0
        %1375 = vmatprep.subr.bf16.mxu0 0
        %1376 = vmatpush1.bf16.xpose.msra.mxu0 0
        %1377 = vmatprep.subr.bf16.mxu0 0
        %1378 = vmatpush1.bf16.xpose.msra.mxu0 0
        %1379 = vmatprep.subr.bf16.mxu0 0
        %1380 = vmatpush1.bf16.xpose.msra.mxu0 0
        %1381 = vmatprep.subr.bf16.mxu0 0
        %1382 = vmatpush1.bf16.xpose.msra.mxu0 0
        %1383 = vmatprep.subr.bf16.mxu0 0
        %1384 = vmatpush1.bf16.xpose.msra.mxu0 0
        %1385 = vmatprep.subr.bf16.mxu0 0
        %1386 = vmatpush1.bf16.xpose.msra.mxu0 %v505
        %1387 = vmatprep.subr.bf16.mxu0 0
        %1388 = vmatpush2.bf16.xpose.msra.mxu0 0
        %1389 = vmatprep.subr.bf16.mxu0 0
        %1390 = vmatpush2.bf16.xpose.msra.mxu0 0
        %1391 = vmatprep.subr.bf16.mxu0 0
        %1392 = vmatpush2.bf16.xpose.msra.mxu0 0
        %1393 = vmatprep.subr.bf16.mxu0 0
        %1394 = vmatpush2.bf16.xpose.msra.mxu0 0
        %1395 = vmatprep.subr.bf16.mxu0 0
        %1396 = vmatpush2.bf16.xpose.msra.mxu0 0
        %1397 = vmatprep.subr.bf16.mxu0 0
        %1398 = vmatpush2.bf16.xpose.msra.mxu0 0
        %1399 = vmatprep.subr.bf16.mxu0 0
        %1400 = vmatpush2.bf16.xpose.msra.mxu0 0
        %1401 = vmatprep.subr.bf16.mxu0 0
        %1402 = vmatpush2.bf16.xpose.msra.mxu0 0
        %1403 = vmatprep.mubr.bf16.mxu0 0
        %1404 = vmatmul.mubr.bf16.gmra.mxu0 %v1369
        %v1405 = vpop.f32.mrf.mxu0
        %v1406 = vadd.f32 0.0, %v1405
        %v1407 = vpop.f32.mrf.mxu0
        %v1408 = vpop.f32.mrf.mxu0
        %v1409 = vadd.f32 0.0, %v1408
        %v1410 = vpop.f32.mrf.mxu0
        %1411 = vdwg.mxu0
        %s1412 = scalar_lea.vmem [#allocation7], 192
        %v1413 = vld [vmem:[%s1412] sm:$0xff]
        %v1414 = vld [vmem:[%s1412 + $0x8] sm:$0xff]
        %v1415 = vld [vmem:[%s1412 + $0x10] sm:$0xff]
        %v1416 = vld [vmem:[%s1412 + $0x18] sm:$0xff]
        %v1418 = vsel %vm552, %v1406, 0
        %v1421 = vsel %vm552, %v1409, 0
        %1423 = vmatprep.subr.mxu0 0.0
        %1424 = vmatpush1.msra.mxu0 0.0
        %1425 = vmatprep.subr.mxu0 0.0
        %1426 = vmatpush1.msra.mxu0 0.0
        %1427 = vmatprep.subr.mxu0 0.0
        %1428 = vmatpush1.msra.mxu0 0.0
        %1429 = vmatprep.subr.mxu0 0.0
        %1430 = vmatpush1.msra.mxu0 0.0
        %1431 = vmatprep.subr.mxu0 0.0
        %1432 = vmatpush1.msra.mxu0 0.0
        %1433 = vmatprep.subr.mxu0 0.0
        %1434 = vmatpush1.msra.mxu0 0.0
        %1435 = vmatprep.subr.mxu0 0.0
        %1436 = vmatpush1.msra.mxu0 0.0
        %1437 = vmatprep.subr.mxu0 0.0
        %1438 = vmatpush1.msra.mxu0 0.0
        %1439 = vmatprep.subr.mxu0 0.0
        %1440 = vmatpush1.msra.mxu0 0.0
        %1441 = vmatprep.subr.mxu0 0.0
        %1442 = vmatpush1.msra.mxu0 0.0
        %1443 = vmatprep.subr.mxu0 0.0
        %1444 = vmatpush1.msra.mxu0 0.0
        %1445 = vmatprep.subr.mxu0 0.0
        %1446 = vmatpush1.msra.mxu0 0.0
        %1447 = vmatprep.subr.mxu0 0.0
        %1448 = vmatpush1.msra.mxu0 0.0
        %1449 = vmatprep.subr.mxu0 0.0
        %1450 = vmatpush1.msra.mxu0 0.0
        %1451 = vmatprep.subr.mxu0 %v1416
        %1452 = vmatpush1.msra.mxu0 %v1415
        %1453 = vmatprep.subr.mxu0 %v1414
        %1454 = vmatpush1.msra.mxu0 %v1413
        %1455 = vmatprep.subr.mxu0 0.0
        %1456 = vmatpush2.msra.mxu0 0.0
        %1457 = vmatprep.subr.mxu0 0.0
        %1458 = vmatpush2.msra.mxu0 0.0
        %1459 = vmatprep.subr.mxu0 0.0
        %1460 = vmatpush2.msra.mxu0 0.0
        %1461 = vmatprep.subr.mxu0 0.0
        %1462 = vmatpush2.msra.mxu0 0.0
        %1463 = vmatprep.subr.mxu0 0.0
        %1464 = vmatpush2.msra.mxu0 0.0
        %1465 = vmatprep.subr.mxu0 0.0
        %1466 = vmatpush2.msra.mxu0 0.0
        %1467 = vmatprep.subr.mxu0 0.0
        %1468 = vmatpush2.msra.mxu0 0.0
        %1469 = vmatprep.subr.mxu0 0.0
        %1470 = vmatpush2.msra.mxu0 0.0
        %1471 = vmatprep.subr.mxu0 0.0
        %1472 = vmatpush2.msra.mxu0 0.0
        %1473 = vmatprep.subr.mxu0 0.0
        %1474 = vmatpush2.msra.mxu0 0.0
        %1475 = vmatprep.subr.mxu0 0.0
        %1476 = vmatpush2.msra.mxu0 0.0
        %1477 = vmatprep.subr.mxu0 0.0
        %1478 = vmatpush2.msra.mxu0 0.0
        %1479 = vmatprep.subr.mxu0 0.0
        %1480 = vmatpush2.msra.mxu0 0.0
        %1481 = vmatprep.subr.mxu0 0.0
        %1482 = vmatpush2.msra.mxu0 0.0
        %1483 = vmatprep.subr.mxu0 0.0
        %1484 = vmatpush2.msra.mxu0 0.0
        %1485 = vmatprep.subr.mxu0 0.0
        %1486 = vmatpush2.msra.mxu0 0.0
        %1487 = vmatprep.mubr.f32.mxu0 0.0
        %1488 = vmatmul.mubr.f32.gmra.mxu0 %v1418
        %v1489 = vpop.f32.mrf.mxu0
        %v1490 = vadd.f32 0.0, %v1489
        %v1491 = vpop.f32.mrf.mxu0
        %v1492 = vadd.f32 0.0, %v1491
        %1493 = vmatprep.mubr.f32.mxu0 0.0
        %1494 = vmatmul.mubr.f32.gmra.mxu0 %v1421
        %v1495 = vpop.f32.mrf.mxu0
        %v1496 = vadd.f32 0.0, %v1495
        %v1497 = vpop.f32.mrf.mxu0
        %v1498 = vadd.f32 0.0, %v1497
        %1499 = vdwg.mxu0
        %v1500 = vadd.f32 %v1356, %v1490
        %v1501 = vadd.f32 %v1357, %v1492
        %v1502 = vadd.f32 %v1358, %v1496
        %v1503 = vadd.f32 %v1359, %v1498
        %s1504 = scalar_lea.vmem [#allocation4], 56
        %v1505 = vld [vmem:[%s1504] sm:$0xf]
        %v1506 = vld [vmem:[%s1504 + $0x4] sm:$0xf]
        %v1509 = vunpack.c.l.b16 %v1505
        %v1510 = vunpack.c.l.b16 %v1506
        %v1511 = vpack.c.b16 %v1510, %v1509
        %v1513 = vsel %vm500, %v1511, 0
        %1515 = vmatprep.subr.bf16.mxu0 0
        %1516 = vmatpush1.bf16.xpose.msra.mxu0 0
        %1517 = vmatprep.subr.bf16.mxu0 0
        %1518 = vmatpush1.bf16.xpose.msra.mxu0 0
        %1519 = vmatprep.subr.bf16.mxu0 0
        %1520 = vmatpush1.bf16.xpose.msra.mxu0 0
        %1521 = vmatprep.subr.bf16.mxu0 0
        %1522 = vmatpush1.bf16.xpose.msra.mxu0 0
        %1523 = vmatprep.subr.bf16.mxu0 0
        %1524 = vmatpush1.bf16.xpose.msra.mxu0 0
        %1525 = vmatprep.subr.bf16.mxu0 0
        %1526 = vmatpush1.bf16.xpose.msra.mxu0 0
        %1527 = vmatprep.subr.bf16.mxu0 0
        %1528 = vmatpush1.bf16.xpose.msra.mxu0 0
        %1529 = vmatprep.subr.bf16.mxu0 0
        %1530 = vmatpush1.bf16.xpose.msra.mxu0 %v505
        %1531 = vmatprep.subr.bf16.mxu0 0
        %1532 = vmatpush2.bf16.xpose.msra.mxu0 0
        %1533 = vmatprep.subr.bf16.mxu0 0
        %1534 = vmatpush2.bf16.xpose.msra.mxu0 0
        %1535 = vmatprep.subr.bf16.mxu0 0
        %1536 = vmatpush2.bf16.xpose.msra.mxu0 0
        %1537 = vmatprep.subr.bf16.mxu0 0
        %1538 = vmatpush2.bf16.xpose.msra.mxu0 0
        %1539 = vmatprep.subr.bf16.mxu0 0
        %1540 = vmatpush2.bf16.xpose.msra.mxu0 0
        %1541 = vmatprep.subr.bf16.mxu0 0
        %1542 = vmatpush2.bf16.xpose.msra.mxu0 0
        %1543 = vmatprep.subr.bf16.mxu0 0
        %1544 = vmatpush2.bf16.xpose.msra.mxu0 0
        %1545 = vmatprep.subr.bf16.mxu0 0
        %1546 = vmatpush2.bf16.xpose.msra.mxu0 0
        %1547 = vmatprep.mubr.bf16.mxu0 0
        %1548 = vmatmul.mubr.bf16.gmra.mxu0 %v1513
        %v1549 = vpop.f32.mrf.mxu0
        %v1550 = vadd.f32 0.0, %v1549
        %v1551 = vpop.f32.mrf.mxu0
        %v1552 = vpop.f32.mrf.mxu0
        %v1553 = vadd.f32 0.0, %v1552
        %v1554 = vpop.f32.mrf.mxu0
        %1555 = vdwg.mxu0
        %s1556 = scalar_lea.vmem [#allocation7], 224
        %v1557 = vld [vmem:[%s1556] sm:$0xff]
        %v1558 = vld [vmem:[%s1556 + $0x8] sm:$0xff]
        %v1559 = vld [vmem:[%s1556 + $0x10] sm:$0xff]
        %v1560 = vld [vmem:[%s1556 + $0x18] sm:$0xff]
        %v1562 = vsel %vm552, %v1550, 0
        %v1565 = vsel %vm552, %v1553, 0
        %1567 = vmatprep.subr.mxu0 0.0
        %1568 = vmatpush1.msra.mxu0 0.0
        %1569 = vmatprep.subr.mxu0 0.0
        %1570 = vmatpush1.msra.mxu0 0.0
        %1571 = vmatprep.subr.mxu0 0.0
        %1572 = vmatpush1.msra.mxu0 0.0
        %1573 = vmatprep.subr.mxu0 0.0
        %1574 = vmatpush1.msra.mxu0 0.0
        %1575 = vmatprep.subr.mxu0 0.0
        %1576 = vmatpush1.msra.mxu0 0.0
        %1577 = vmatprep.subr.mxu0 0.0
        %1578 = vmatpush1.msra.mxu0 0.0
        %1579 = vmatprep.subr.mxu0 0.0
        %1580 = vmatpush1.msra.mxu0 0.0
        %1581 = vmatprep.subr.mxu0 0.0
        %1582 = vmatpush1.msra.mxu0 0.0
        %1583 = vmatprep.subr.mxu0 0.0
        %1584 = vmatpush1.msra.mxu0 0.0
        %1585 = vmatprep.subr.mxu0 0.0
        %1586 = vmatpush1.msra.mxu0 0.0
        %1587 = vmatprep.subr.mxu0 0.0
        %1588 = vmatpush1.msra.mxu0 0.0
        %1589 = vmatprep.subr.mxu0 0.0
        %1590 = vmatpush1.msra.mxu0 0.0
        %1591 = vmatprep.subr.mxu0 0.0
        %1592 = vmatpush1.msra.mxu0 0.0
        %1593 = vmatprep.subr.mxu0 0.0
        %1594 = vmatpush1.msra.mxu0 0.0
        %1595 = vmatprep.subr.mxu0 %v1560
        %1596 = vmatpush1.msra.mxu0 %v1559
        %1597 = vmatprep.subr.mxu0 %v1558
        %1598 = vmatpush1.msra.mxu0 %v1557
        %1599 = vmatprep.subr.mxu0 0.0
        %1600 = vmatpush2.msra.mxu0 0.0
        %1601 = vmatprep.subr.mxu0 0.0
        %1602 = vmatpush2.msra.mxu0 0.0
        %1603 = vmatprep.subr.mxu0 0.0
        %1604 = vmatpush2.msra.mxu0 0.0
        %1605 = vmatprep.subr.mxu0 0.0
        %1606 = vmatpush2.msra.mxu0 0.0
        %1607 = vmatprep.subr.mxu0 0.0
        %1608 = vmatpush2.msra.mxu0 0.0
        %1609 = vmatprep.subr.mxu0 0.0
        %1610 = vmatpush2.msra.mxu0 0.0
        %1611 = vmatprep.subr.mxu0 0.0
        %1612 = vmatpush2.msra.mxu0 0.0
        %1613 = vmatprep.subr.mxu0 0.0
        %1614 = vmatpush2.msra.mxu0 0.0
        %1615 = vmatprep.subr.mxu0 0.0
        %1616 = vmatpush2.msra.mxu0 0.0
        %1617 = vmatprep.subr.mxu0 0.0
        %1618 = vmatpush2.msra.mxu0 0.0
        %1619 = vmatprep.subr.mxu0 0.0
        %1620 = vmatpush2.msra.mxu0 0.0
        %1621 = vmatprep.subr.mxu0 0.0
        %1622 = vmatpush2.msra.mxu0 0.0
        %1623 = vmatprep.subr.mxu0 0.0
        %1624 = vmatpush2.msra.mxu0 0.0
        %1625 = vmatprep.subr.mxu0 0.0
        %1626 = vmatpush2.msra.mxu0 0.0
        %1627 = vmatprep.subr.mxu0 0.0
        %1628 = vmatpush2.msra.mxu0 0.0
        %1629 = vmatprep.subr.mxu0 0.0
        %1630 = vmatpush2.msra.mxu0 0.0
        %1631 = vmatprep.mubr.f32.mxu0 0.0
        %1632 = vmatmul.mubr.f32.gmra.mxu0 %v1562
        %v1633 = vpop.f32.mrf.mxu0
        %v1634 = vadd.f32 0.0, %v1633
        %v1635 = vpop.f32.mrf.mxu0
        %v1636 = vadd.f32 0.0, %v1635
        %1637 = vmatprep.mubr.f32.mxu0 0.0
        %1638 = vmatmul.mubr.f32.gmra.mxu0 %v1565
        %v1639 = vpop.f32.mrf.mxu0
        %v1640 = vadd.f32 0.0, %v1639
        %v1641 = vpop.f32.mrf.mxu0
        %v1642 = vadd.f32 0.0, %v1641
        %1643 = vdwg.mxu0
        %v1644 = vadd.f32 %v1500, %v1634
        %v1645 = vadd.f32 %v1501, %v1636
        %v1646 = vadd.f32 %v1502, %v1640
        %v1647 = vadd.f32 %v1503, %v1642
        %s1648 = scalar_lea.vmem [#allocation4], 64
        %v1649 = vld [vmem:[%s1648] sm:$0xf]
        %v1650 = vld [vmem:[%s1648 + $0x4] sm:$0xf]
        %v1653 = vunpack.c.l.b16 %v1649
        %v1654 = vunpack.c.l.b16 %v1650
        %v1655 = vpack.c.b16 %v1654, %v1653
        %v1657 = vsel %vm500, %v1655, 0
        %1659 = vmatprep.subr.bf16.mxu0 0
        %1660 = vmatpush1.bf16.xpose.msra.mxu0 0
        %1661 = vmatprep.subr.bf16.mxu0 0
        %1662 = vmatpush1.bf16.xpose.msra.mxu0 0
        %1663 = vmatprep.subr.bf16.mxu0 0
        %1664 = vmatpush1.bf16.xpose.msra.mxu0 0
        %1665 = vmatprep.subr.bf16.mxu0 0
        %1666 = vmatpush1.bf16.xpose.msra.mxu0 0
        %1667 = vmatprep.subr.bf16.mxu0 0
        %1668 = vmatpush1.bf16.xpose.msra.mxu0 0
        %1669 = vmatprep.subr.bf16.mxu0 0
        %1670 = vmatpush1.bf16.xpose.msra.mxu0 0
        %1671 = vmatprep.subr.bf16.mxu0 0
        %1672 = vmatpush1.bf16.xpose.msra.mxu0 0
        %1673 = vmatprep.subr.bf16.mxu0 0
        %1674 = vmatpush1.bf16.xpose.msra.mxu0 %v505
        %1675 = vmatprep.subr.bf16.mxu0 0
        %1676 = vmatpush2.bf16.xpose.msra.mxu0 0
        %1677 = vmatprep.subr.bf16.mxu0 0
        %1678 = vmatpush2.bf16.xpose.msra.mxu0 0
        %1679 = vmatprep.subr.bf16.mxu0 0
        %1680 = vmatpush2.bf16.xpose.msra.mxu0 0
        %1681 = vmatprep.subr.bf16.mxu0 0
        %1682 = vmatpush2.bf16.xpose.msra.mxu0 0
        %1683 = vmatprep.subr.bf16.mxu0 0
        %1684 = vmatpush2.bf16.xpose.msra.mxu0 0
        %1685 = vmatprep.subr.bf16.mxu0 0
        %1686 = vmatpush2.bf16.xpose.msra.mxu0 0
        %1687 = vmatprep.subr.bf16.mxu0 0
        %1688 = vmatpush2.bf16.xpose.msra.mxu0 0
        %1689 = vmatprep.subr.bf16.mxu0 0
        %1690 = vmatpush2.bf16.xpose.msra.mxu0 0
        %1691 = vmatprep.mubr.bf16.mxu0 0
        %1692 = vmatmul.mubr.bf16.gmra.mxu0 %v1657
        %v1693 = vpop.f32.mrf.mxu0
        %v1694 = vadd.f32 0.0, %v1693
        %v1695 = vpop.f32.mrf.mxu0
        %v1696 = vpop.f32.mrf.mxu0
        %v1697 = vadd.f32 0.0, %v1696
        %v1698 = vpop.f32.mrf.mxu0
        %1699 = vdwg.mxu0
        %s1700 = scalar_lea.vmem [#allocation7], 256
        %v1701 = vld [vmem:[%s1700] sm:$0xff]
        %v1702 = vld [vmem:[%s1700 + $0x8] sm:$0xff]
        %v1703 = vld [vmem:[%s1700 + $0x10] sm:$0xff]
        %v1704 = vld [vmem:[%s1700 + $0x18] sm:$0xff]
        %v1706 = vsel %vm552, %v1694, 0
        %v1709 = vsel %vm552, %v1697, 0
        %1711 = vmatprep.subr.mxu0 0.0
        %1712 = vmatpush1.msra.mxu0 0.0
        %1713 = vmatprep.subr.mxu0 0.0
        %1714 = vmatpush1.msra.mxu0 0.0
        %1715 = vmatprep.subr.mxu0 0.0
        %1716 = vmatpush1.msra.mxu0 0.0
        %1717 = vmatprep.subr.mxu0 0.0
        %1718 = vmatpush1.msra.mxu0 0.0
        %1719 = vmatprep.subr.mxu0 0.0
        %1720 = vmatpush1.msra.mxu0 0.0
        %1721 = vmatprep.subr.mxu0 0.0
        %1722 = vmatpush1.msra.mxu0 0.0
        %1723 = vmatprep.subr.mxu0 0.0
        %1724 = vmatpush1.msra.mxu0 0.0
        %1725 = vmatprep.subr.mxu0 0.0
        %1726 = vmatpush1.msra.mxu0 0.0
        %1727 = vmatprep.subr.mxu0 0.0
        %1728 = vmatpush1.msra.mxu0 0.0
        %1729 = vmatprep.subr.mxu0 0.0
        %1730 = vmatpush1.msra.mxu0 0.0
        %1731 = vmatprep.subr.mxu0 0.0
        %1732 = vmatpush1.msra.mxu0 0.0
        %1733 = vmatprep.subr.mxu0 0.0
        %1734 = vmatpush1.msra.mxu0 0.0
        %1735 = vmatprep.subr.mxu0 0.0
        %1736 = vmatpush1.msra.mxu0 0.0
        %1737 = vmatprep.subr.mxu0 0.0
        %1738 = vmatpush1.msra.mxu0 0.0
        %1739 = vmatprep.subr.mxu0 %v1704
        %1740 = vmatpush1.msra.mxu0 %v1703
        %1741 = vmatprep.subr.mxu0 %v1702
        %1742 = vmatpush1.msra.mxu0 %v1701
        %1743 = vmatprep.subr.mxu0 0.0
        %1744 = vmatpush2.msra.mxu0 0.0
        %1745 = vmatprep.subr.mxu0 0.0
        %1746 = vmatpush2.msra.mxu0 0.0
        %1747 = vmatprep.subr.mxu0 0.0
        %1748 = vmatpush2.msra.mxu0 0.0
        %1749 = vmatprep.subr.mxu0 0.0
        %1750 = vmatpush2.msra.mxu0 0.0
        %1751 = vmatprep.subr.mxu0 0.0
        %1752 = vmatpush2.msra.mxu0 0.0
        %1753 = vmatprep.subr.mxu0 0.0
        %1754 = vmatpush2.msra.mxu0 0.0
        %1755 = vmatprep.subr.mxu0 0.0
        %1756 = vmatpush2.msra.mxu0 0.0
        %1757 = vmatprep.subr.mxu0 0.0
        %1758 = vmatpush2.msra.mxu0 0.0
        %1759 = vmatprep.subr.mxu0 0.0
        %1760 = vmatpush2.msra.mxu0 0.0
        %1761 = vmatprep.subr.mxu0 0.0
        %1762 = vmatpush2.msra.mxu0 0.0
        %1763 = vmatprep.subr.mxu0 0.0
        %1764 = vmatpush2.msra.mxu0 0.0
        %1765 = vmatprep.subr.mxu0 0.0
        %1766 = vmatpush2.msra.mxu0 0.0
        %1767 = vmatprep.subr.mxu0 0.0
        %1768 = vmatpush2.msra.mxu0 0.0
        %1769 = vmatprep.subr.mxu0 0.0
        %1770 = vmatpush2.msra.mxu0 0.0
        %1771 = vmatprep.subr.mxu0 0.0
        %1772 = vmatpush2.msra.mxu0 0.0
        %1773 = vmatprep.subr.mxu0 0.0
        %1774 = vmatpush2.msra.mxu0 0.0
        %1775 = vmatprep.mubr.f32.mxu0 0.0
        %1776 = vmatmul.mubr.f32.gmra.mxu0 %v1706
        %v1777 = vpop.f32.mrf.mxu0
        %v1778 = vadd.f32 0.0, %v1777
        %v1779 = vpop.f32.mrf.mxu0
        %v1780 = vadd.f32 0.0, %v1779
        %1781 = vmatprep.mubr.f32.mxu0 0.0
        %1782 = vmatmul.mubr.f32.gmra.mxu0 %v1709
        %v1783 = vpop.f32.mrf.mxu0
        %v1784 = vadd.f32 0.0, %v1783
        %v1785 = vpop.f32.mrf.mxu0
        %v1786 = vadd.f32 0.0, %v1785
        %1787 = vdwg.mxu0
        %v1788 = vadd.f32 %v1644, %v1778
        %v1789 = vadd.f32 %v1645, %v1780
        %v1790 = vadd.f32 %v1646, %v1784
        %v1791 = vadd.f32 %v1647, %v1786
        %s1792 = scalar_lea.vmem [#allocation4], 72
        %v1793 = vld [vmem:[%s1792] sm:$0xf]
        %v1794 = vld [vmem:[%s1792 + $0x4] sm:$0xf]
        %v1797 = vunpack.c.l.b16 %v1793
        %v1798 = vunpack.c.l.b16 %v1794
        %v1799 = vpack.c.b16 %v1798, %v1797
        %v1801 = vsel %vm500, %v1799, 0
        %1803 = vmatprep.subr.bf16.mxu0 0
        %1804 = vmatpush1.bf16.xpose.msra.mxu0 0
        %1805 = vmatprep.subr.bf16.mxu0 0
        %1806 = vmatpush1.bf16.xpose.msra.mxu0 0
        %1807 = vmatprep.subr.bf16.mxu0 0
        %1808 = vmatpush1.bf16.xpose.msra.mxu0 0
        %1809 = vmatprep.subr.bf16.mxu0 0
        %1810 = vmatpush1.bf16.xpose.msra.mxu0 0
        %1811 = vmatprep.subr.bf16.mxu0 0
        %1812 = vmatpush1.bf16.xpose.msra.mxu0 0
        %1813 = vmatprep.subr.bf16.mxu0 0
        %1814 = vmatpush1.bf16.xpose.msra.mxu0 0
        %1815 = vmatprep.subr.bf16.mxu0 0
        %1816 = vmatpush1.bf16.xpose.msra.mxu0 0
        %1817 = vmatprep.subr.bf16.mxu0 0
        %1818 = vmatpush1.bf16.xpose.msra.mxu0 %v505
        %1819 = vmatprep.subr.bf16.mxu0 0
        %1820 = vmatpush2.bf16.xpose.msra.mxu0 0
        %1821 = vmatprep.subr.bf16.mxu0 0
        %1822 = vmatpush2.bf16.xpose.msra.mxu0 0
        %1823 = vmatprep.subr.bf16.mxu0 0
        %1824 = vmatpush2.bf16.xpose.msra.mxu0 0
        %1825 = vmatprep.subr.bf16.mxu0 0
        %1826 = vmatpush2.bf16.xpose.msra.mxu0 0
        %1827 = vmatprep.subr.bf16.mxu0 0
        %1828 = vmatpush2.bf16.xpose.msra.mxu0 0
        %1829 = vmatprep.subr.bf16.mxu0 0
        %1830 = vmatpush2.bf16.xpose.msra.mxu0 0
        %1831 = vmatprep.subr.bf16.mxu0 0
        %1832 = vmatpush2.bf16.xpose.msra.mxu0 0
        %1833 = vmatprep.subr.bf16.mxu0 0
        %1834 = vmatpush2.bf16.xpose.msra.mxu0 0
        %1835 = vmatprep.mubr.bf16.mxu0 0
        %1836 = vmatmul.mubr.bf16.gmra.mxu0 %v1801
        %v1837 = vpop.f32.mrf.mxu0
        %v1838 = vadd.f32 0.0, %v1837
        %v1839 = vpop.f32.mrf.mxu0
        %v1840 = vpop.f32.mrf.mxu0
        %v1841 = vadd.f32 0.0, %v1840
        %v1842 = vpop.f32.mrf.mxu0
        %1843 = vdwg.mxu0
        %s1844 = scalar_lea.vmem [#allocation7], 288
        %v1845 = vld [vmem:[%s1844] sm:$0xff]
        %v1846 = vld [vmem:[%s1844 + $0x8] sm:$0xff]
        %v1847 = vld [vmem:[%s1844 + $0x10] sm:$0xff]
        %v1848 = vld [vmem:[%s1844 + $0x18] sm:$0xff]
        %v1850 = vsel %vm552, %v1838, 0
        %v1853 = vsel %vm552, %v1841, 0
        %1855 = vmatprep.subr.mxu0 0.0
        %1856 = vmatpush1.msra.mxu0 0.0
        %1857 = vmatprep.subr.mxu0 0.0
        %1858 = vmatpush1.msra.mxu0 0.0
        %1859 = vmatprep.subr.mxu0 0.0
        %1860 = vmatpush1.msra.mxu0 0.0
        %1861 = vmatprep.subr.mxu0 0.0
        %1862 = vmatpush1.msra.mxu0 0.0
        %1863 = vmatprep.subr.mxu0 0.0
        %1864 = vmatpush1.msra.mxu0 0.0
        %1865 = vmatprep.subr.mxu0 0.0
        %1866 = vmatpush1.msra.mxu0 0.0
        %1867 = vmatprep.subr.mxu0 0.0
        %1868 = vmatpush1.msra.mxu0 0.0
        %1869 = vmatprep.subr.mxu0 0.0
        %1870 = vmatpush1.msra.mxu0 0.0
        %1871 = vmatprep.subr.mxu0 0.0
        %1872 = vmatpush1.msra.mxu0 0.0
        %1873 = vmatprep.subr.mxu0 0.0
        %1874 = vmatpush1.msra.mxu0 0.0
        %1875 = vmatprep.subr.mxu0 0.0
        %1876 = vmatpush1.msra.mxu0 0.0
        %1877 = vmatprep.subr.mxu0 0.0
        %1878 = vmatpush1.msra.mxu0 0.0
        %1879 = vmatprep.subr.mxu0 0.0
        %1880 = vmatpush1.msra.mxu0 0.0
        %1881 = vmatprep.subr.mxu0 0.0
        %1882 = vmatpush1.msra.mxu0 0.0
        %1883 = vmatprep.subr.mxu0 %v1848
        %1884 = vmatpush1.msra.mxu0 %v1847
        %1885 = vmatprep.subr.mxu0 %v1846
        %1886 = vmatpush1.msra.mxu0 %v1845
        %1887 = vmatprep.subr.mxu0 0.0
        %1888 = vmatpush2.msra.mxu0 0.0
        %1889 = vmatprep.subr.mxu0 0.0
        %1890 = vmatpush2.msra.mxu0 0.0
        %1891 = vmatprep.subr.mxu0 0.0
        %1892 = vmatpush2.msra.mxu0 0.0
        %1893 = vmatprep.subr.mxu0 0.0
        %1894 = vmatpush2.msra.mxu0 0.0
        %1895 = vmatprep.subr.mxu0 0.0
        %1896 = vmatpush2.msra.mxu0 0.0
        %1897 = vmatprep.subr.mxu0 0.0
        %1898 = vmatpush2.msra.mxu0 0.0
        %1899 = vmatprep.subr.mxu0 0.0
        %1900 = vmatpush2.msra.mxu0 0.0
        %1901 = vmatprep.subr.mxu0 0.0
        %1902 = vmatpush2.msra.mxu0 0.0
        %1903 = vmatprep.subr.mxu0 0.0
        %1904 = vmatpush2.msra.mxu0 0.0
        %1905 = vmatprep.subr.mxu0 0.0
        %1906 = vmatpush2.msra.mxu0 0.0
        %1907 = vmatprep.subr.mxu0 0.0
        %1908 = vmatpush2.msra.mxu0 0.0
        %1909 = vmatprep.subr.mxu0 0.0
        %1910 = vmatpush2.msra.mxu0 0.0
        %1911 = vmatprep.subr.mxu0 0.0
        %1912 = vmatpush2.msra.mxu0 0.0
        %1913 = vmatprep.subr.mxu0 0.0
        %1914 = vmatpush2.msra.mxu0 0.0
        %1915 = vmatprep.subr.mxu0 0.0
        %1916 = vmatpush2.msra.mxu0 0.0
        %1917 = vmatprep.subr.mxu0 0.0
        %1918 = vmatpush2.msra.mxu0 0.0
        %1919 = vmatprep.mubr.f32.mxu0 0.0
        %1920 = vmatmul.mubr.f32.gmra.mxu0 %v1850
        %v1921 = vpop.f32.mrf.mxu0
        %v1922 = vadd.f32 0.0, %v1921
        %v1923 = vpop.f32.mrf.mxu0
        %v1924 = vadd.f32 0.0, %v1923
        %1925 = vmatprep.mubr.f32.mxu0 0.0
        %1926 = vmatmul.mubr.f32.gmra.mxu0 %v1853
        %v1927 = vpop.f32.mrf.mxu0
        %v1928 = vadd.f32 0.0, %v1927
        %v1929 = vpop.f32.mrf.mxu0
        %v1930 = vadd.f32 0.0, %v1929
        %1931 = vdwg.mxu0
        %v1932 = vadd.f32 %v1788, %v1922
        %v1933 = vadd.f32 %v1789, %v1924
        %v1934 = vadd.f32 %v1790, %v1928
        %v1935 = vadd.f32 %v1791, %v1930
        %s1936 = scalar_lea.vmem [#allocation4], 80
        %v1937 = vld [vmem:[%s1936] sm:$0xf]
        %v1938 = vld [vmem:[%s1936 + $0x4] sm:$0xf]
        %v1941 = vunpack.c.l.b16 %v1937
        %v1942 = vunpack.c.l.b16 %v1938
        %v1943 = vpack.c.b16 %v1942, %v1941
        %v1945 = vsel %vm500, %v1943, 0
        %1947 = vmatprep.subr.bf16.mxu0 0
        %1948 = vmatpush1.bf16.xpose.msra.mxu0 0
        %1949 = vmatprep.subr.bf16.mxu0 0
        %1950 = vmatpush1.bf16.xpose.msra.mxu0 0
        %1951 = vmatprep.subr.bf16.mxu0 0
        %1952 = vmatpush1.bf16.xpose.msra.mxu0 0
        %1953 = vmatprep.subr.bf16.mxu0 0
        %1954 = vmatpush1.bf16.xpose.msra.mxu0 0
        %1955 = vmatprep.subr.bf16.mxu0 0
        %1956 = vmatpush1.bf16.xpose.msra.mxu0 0
        %1957 = vmatprep.subr.bf16.mxu0 0
        %1958 = vmatpush1.bf16.xpose.msra.mxu0 0
        %1959 = vmatprep.subr.bf16.mxu0 0
        %1960 = vmatpush1.bf16.xpose.msra.mxu0 0
        %1961 = vmatprep.subr.bf16.mxu0 0
        %1962 = vmatpush1.bf16.xpose.msra.mxu0 %v505
        %1963 = vmatprep.subr.bf16.mxu0 0
        %1964 = vmatpush2.bf16.xpose.msra.mxu0 0
        %1965 = vmatprep.subr.bf16.mxu0 0
        %1966 = vmatpush2.bf16.xpose.msra.mxu0 0
        %1967 = vmatprep.subr.bf16.mxu0 0
        %1968 = vmatpush2.bf16.xpose.msra.mxu0 0
        %1969 = vmatprep.subr.bf16.mxu0 0
        %1970 = vmatpush2.bf16.xpose.msra.mxu0 0
        %1971 = vmatprep.subr.bf16.mxu0 0
        %1972 = vmatpush2.bf16.xpose.msra.mxu0 0
        %1973 = vmatprep.subr.bf16.mxu0 0
        %1974 = vmatpush2.bf16.xpose.msra.mxu0 0
        %1975 = vmatprep.subr.bf16.mxu0 0
        %1976 = vmatpush2.bf16.xpose.msra.mxu0 0
        %1977 = vmatprep.subr.bf16.mxu0 0
        %1978 = vmatpush2.bf16.xpose.msra.mxu0 0
        %1979 = vmatprep.mubr.bf16.mxu0 0
        %1980 = vmatmul.mubr.bf16.gmra.mxu0 %v1945
        %v1981 = vpop.f32.mrf.mxu0
        %v1982 = vadd.f32 0.0, %v1981
        %v1983 = vpop.f32.mrf.mxu0
        %v1984 = vpop.f32.mrf.mxu0
        %v1985 = vadd.f32 0.0, %v1984
        %v1986 = vpop.f32.mrf.mxu0
        %1987 = vdwg.mxu0
        %s1988 = scalar_lea.vmem [#allocation7], 320
        %v1989 = vld [vmem:[%s1988] sm:$0xff]
        %v1990 = vld [vmem:[%s1988 + $0x8] sm:$0xff]
        %v1991 = vld [vmem:[%s1988 + $0x10] sm:$0xff]
        %v1992 = vld [vmem:[%s1988 + $0x18] sm:$0xff]
        %v1994 = vsel %vm552, %v1982, 0
        %v1997 = vsel %vm552, %v1985, 0
        %1999 = vmatprep.subr.mxu0 0.0
        %2000 = vmatpush1.msra.mxu0 0.0
        %2001 = vmatprep.subr.mxu0 0.0
        %2002 = vmatpush1.msra.mxu0 0.0
        %2003 = vmatprep.subr.mxu0 0.0
        %2004 = vmatpush1.msra.mxu0 0.0
        %2005 = vmatprep.subr.mxu0 0.0
        %2006 = vmatpush1.msra.mxu0 0.0
        %2007 = vmatprep.subr.mxu0 0.0
        %2008 = vmatpush1.msra.mxu0 0.0
        %2009 = vmatprep.subr.mxu0 0.0
        %2010 = vmatpush1.msra.mxu0 0.0
        %2011 = vmatprep.subr.mxu0 0.0
        %2012 = vmatpush1.msra.mxu0 0.0
        %2013 = vmatprep.subr.mxu0 0.0
        %2014 = vmatpush1.msra.mxu0 0.0
        %2015 = vmatprep.subr.mxu0 0.0
        %2016 = vmatpush1.msra.mxu0 0.0
        %2017 = vmatprep.subr.mxu0 0.0
        %2018 = vmatpush1.msra.mxu0 0.0
        %2019 = vmatprep.subr.mxu0 0.0
        %2020 = vmatpush1.msra.mxu0 0.0
        %2021 = vmatprep.subr.mxu0 0.0
        %2022 = vmatpush1.msra.mxu0 0.0
        %2023 = vmatprep.subr.mxu0 0.0
        %2024 = vmatpush1.msra.mxu0 0.0
        %2025 = vmatprep.subr.mxu0 0.0
        %2026 = vmatpush1.msra.mxu0 0.0
        %2027 = vmatprep.subr.mxu0 %v1992
        %2028 = vmatpush1.msra.mxu0 %v1991
        %2029 = vmatprep.subr.mxu0 %v1990
        %2030 = vmatpush1.msra.mxu0 %v1989
        %2031 = vmatprep.subr.mxu0 0.0
        %2032 = vmatpush2.msra.mxu0 0.0
        %2033 = vmatprep.subr.mxu0 0.0
        %2034 = vmatpush2.msra.mxu0 0.0
        %2035 = vmatprep.subr.mxu0 0.0
        %2036 = vmatpush2.msra.mxu0 0.0
        %2037 = vmatprep.subr.mxu0 0.0
        %2038 = vmatpush2.msra.mxu0 0.0
        %2039 = vmatprep.subr.mxu0 0.0
        %2040 = vmatpush2.msra.mxu0 0.0
        %2041 = vmatprep.subr.mxu0 0.0
        %2042 = vmatpush2.msra.mxu0 0.0
        %2043 = vmatprep.subr.mxu0 0.0
        %2044 = vmatpush2.msra.mxu0 0.0
        %2045 = vmatprep.subr.mxu0 0.0
        %2046 = vmatpush2.msra.mxu0 0.0
        %2047 = vmatprep.subr.mxu0 0.0
        %2048 = vmatpush2.msra.mxu0 0.0
        %2049 = vmatprep.subr.mxu0 0.0
        %2050 = vmatpush2.msra.mxu0 0.0
        %2051 = vmatprep.subr.mxu0 0.0
        %2052 = vmatpush2.msra.mxu0 0.0
        %2053 = vmatprep.subr.mxu0 0.0
        %2054 = vmatpush2.msra.mxu0 0.0
        %2055 = vmatprep.subr.mxu0 0.0
        %2056 = vmatpush2.msra.mxu0 0.0
        %2057 = vmatprep.subr.mxu0 0.0
        %2058 = vmatpush2.msra.mxu0 0.0
        %2059 = vmatprep.subr.mxu0 0.0
        %2060 = vmatpush2.msra.mxu0 0.0
        %2061 = vmatprep.subr.mxu0 0.0
        %2062 = vmatpush2.msra.mxu0 0.0
        %2063 = vmatprep.mubr.f32.mxu0 0.0
        %2064 = vmatmul.mubr.f32.gmra.mxu0 %v1994
        %v2065 = vpop.f32.mrf.mxu0
        %v2066 = vadd.f32 0.0, %v2065
        %v2067 = vpop.f32.mrf.mxu0
        %v2068 = vadd.f32 0.0, %v2067
        %2069 = vmatprep.mubr.f32.mxu0 0.0
        %2070 = vmatmul.mubr.f32.gmra.mxu0 %v1997
        %v2071 = vpop.f32.mrf.mxu0
        %v2072 = vadd.f32 0.0, %v2071
        %v2073 = vpop.f32.mrf.mxu0
        %v2074 = vadd.f32 0.0, %v2073
        %2075 = vdwg.mxu0
        %v2076 = vadd.f32 %v1932, %v2066
        %v2077 = vadd.f32 %v1933, %v2068
        %v2078 = vadd.f32 %v1934, %v2072
        %v2079 = vadd.f32 %v1935, %v2074
        %s2080 = scalar_lea.vmem [#allocation4], 88
        %v2081 = vld [vmem:[%s2080] sm:$0xf]
        %v2082 = vld [vmem:[%s2080 + $0x4] sm:$0xf]
        %v2085 = vunpack.c.l.b16 %v2081
        %v2086 = vunpack.c.l.b16 %v2082
        %v2087 = vpack.c.b16 %v2086, %v2085
        %v2089 = vsel %vm500, %v2087, 0
        %2091 = vmatprep.subr.bf16.mxu0 0
        %2092 = vmatpush1.bf16.xpose.msra.mxu0 0
        %2093 = vmatprep.subr.bf16.mxu0 0
        %2094 = vmatpush1.bf16.xpose.msra.mxu0 0
        %2095 = vmatprep.subr.bf16.mxu0 0
        %2096 = vmatpush1.bf16.xpose.msra.mxu0 0
        %2097 = vmatprep.subr.bf16.mxu0 0
        %2098 = vmatpush1.bf16.xpose.msra.mxu0 0
        %2099 = vmatprep.subr.bf16.mxu0 0
        %2100 = vmatpush1.bf16.xpose.msra.mxu0 0
        %2101 = vmatprep.subr.bf16.mxu0 0
        %2102 = vmatpush1.bf16.xpose.msra.mxu0 0
        %2103 = vmatprep.subr.bf16.mxu0 0
        %2104 = vmatpush1.bf16.xpose.msra.mxu0 0
        %2105 = vmatprep.subr.bf16.mxu0 0
        %2106 = vmatpush1.bf16.xpose.msra.mxu0 %v505
        %2107 = vmatprep.subr.bf16.mxu0 0
        %2108 = vmatpush2.bf16.xpose.msra.mxu0 0
        %2109 = vmatprep.subr.bf16.mxu0 0
        %2110 = vmatpush2.bf16.xpose.msra.mxu0 0
        %2111 = vmatprep.subr.bf16.mxu0 0
        %2112 = vmatpush2.bf16.xpose.msra.mxu0 0
        %2113 = vmatprep.subr.bf16.mxu0 0
        %2114 = vmatpush2.bf16.xpose.msra.mxu0 0
        %2115 = vmatprep.subr.bf16.mxu0 0
        %2116 = vmatpush2.bf16.xpose.msra.mxu0 0
        %2117 = vmatprep.subr.bf16.mxu0 0
        %2118 = vmatpush2.bf16.xpose.msra.mxu0 0
        %2119 = vmatprep.subr.bf16.mxu0 0
        %2120 = vmatpush2.bf16.xpose.msra.mxu0 0
        %2121 = vmatprep.subr.bf16.mxu0 0
        %2122 = vmatpush2.bf16.xpose.msra.mxu0 0
        %2123 = vmatprep.mubr.bf16.mxu0 0
        %2124 = vmatmul.mubr.bf16.gmra.mxu0 %v2089
        %v2125 = vpop.f32.mrf.mxu0
        %v2126 = vadd.f32 0.0, %v2125
        %v2127 = vpop.f32.mrf.mxu0
        %v2128 = vpop.f32.mrf.mxu0
        %v2129 = vadd.f32 0.0, %v2128
        %v2130 = vpop.f32.mrf.mxu0
        %2131 = vdwg.mxu0
        %s2132 = scalar_lea.vmem [#allocation7], 352
        %v2133 = vld [vmem:[%s2132] sm:$0xff]
        %v2134 = vld [vmem:[%s2132 + $0x8] sm:$0xff]
        %v2135 = vld [vmem:[%s2132 + $0x10] sm:$0xff]
        %v2136 = vld [vmem:[%s2132 + $0x18] sm:$0xff]
        %v2138 = vsel %vm552, %v2126, 0
        %v2141 = vsel %vm552, %v2129, 0
        %2143 = vmatprep.subr.mxu0 0.0
        %2144 = vmatpush1.msra.mxu0 0.0
        %2145 = vmatprep.subr.mxu0 0.0
        %2146 = vmatpush1.msra.mxu0 0.0
        %2147 = vmatprep.subr.mxu0 0.0
        %2148 = vmatpush1.msra.mxu0 0.0
        %2149 = vmatprep.subr.mxu0 0.0
        %2150 = vmatpush1.msra.mxu0 0.0
        %2151 = vmatprep.subr.mxu0 0.0
        %2152 = vmatpush1.msra.mxu0 0.0
        %2153 = vmatprep.subr.mxu0 0.0
        %2154 = vmatpush1.msra.mxu0 0.0
        %2155 = vmatprep.subr.mxu0 0.0
        %2156 = vmatpush1.msra.mxu0 0.0
        %2157 = vmatprep.subr.mxu0 0.0
        %2158 = vmatpush1.msra.mxu0 0.0
        %2159 = vmatprep.subr.mxu0 0.0
        %2160 = vmatpush1.msra.mxu0 0.0
        %2161 = vmatprep.subr.mxu0 0.0
        %2162 = vmatpush1.msra.mxu0 0.0
        %2163 = vmatprep.subr.mxu0 0.0
        %2164 = vmatpush1.msra.mxu0 0.0
        %2165 = vmatprep.subr.mxu0 0.0
        %2166 = vmatpush1.msra.mxu0 0.0
        %2167 = vmatprep.subr.mxu0 0.0
        %2168 = vmatpush1.msra.mxu0 0.0
        %2169 = vmatprep.subr.mxu0 0.0
        %2170 = vmatpush1.msra.mxu0 0.0
        %2171 = vmatprep.subr.mxu0 %v2136
        %2172 = vmatpush1.msra.mxu0 %v2135
        %2173 = vmatprep.subr.mxu0 %v2134
        %2174 = vmatpush1.msra.mxu0 %v2133
        %2175 = vmatprep.subr.mxu0 0.0
        %2176 = vmatpush2.msra.mxu0 0.0
        %2177 = vmatprep.subr.mxu0 0.0
        %2178 = vmatpush2.msra.mxu0 0.0
        %2179 = vmatprep.subr.mxu0 0.0
        %2180 = vmatpush2.msra.mxu0 0.0
        %2181 = vmatprep.subr.mxu0 0.0
        %2182 = vmatpush2.msra.mxu0 0.0
        %2183 = vmatprep.subr.mxu0 0.0
        %2184 = vmatpush2.msra.mxu0 0.0
        %2185 = vmatprep.subr.mxu0 0.0
        %2186 = vmatpush2.msra.mxu0 0.0
        %2187 = vmatprep.subr.mxu0 0.0
        %2188 = vmatpush2.msra.mxu0 0.0
        %2189 = vmatprep.subr.mxu0 0.0
        %2190 = vmatpush2.msra.mxu0 0.0
        %2191 = vmatprep.subr.mxu0 0.0
        %2192 = vmatpush2.msra.mxu0 0.0
        %2193 = vmatprep.subr.mxu0 0.0
        %2194 = vmatpush2.msra.mxu0 0.0
        %2195 = vmatprep.subr.mxu0 0.0
        %2196 = vmatpush2.msra.mxu0 0.0
        %2197 = vmatprep.subr.mxu0 0.0
        %2198 = vmatpush2.msra.mxu0 0.0
        %2199 = vmatprep.subr.mxu0 0.0
        %2200 = vmatpush2.msra.mxu0 0.0
        %2201 = vmatprep.subr.mxu0 0.0
        %2202 = vmatpush2.msra.mxu0 0.0
        %2203 = vmatprep.subr.mxu0 0.0
        %2204 = vmatpush2.msra.mxu0 0.0
        %2205 = vmatprep.subr.mxu0 0.0
        %2206 = vmatpush2.msra.mxu0 0.0
        %2207 = vmatprep.mubr.f32.mxu0 0.0
        %2208 = vmatmul.mubr.f32.gmra.mxu0 %v2138
        %v2209 = vpop.f32.mrf.mxu0
        %v2210 = vadd.f32 0.0, %v2209
        %v2211 = vpop.f32.mrf.mxu0
        %v2212 = vadd.f32 0.0, %v2211
        %2213 = vmatprep.mubr.f32.mxu0 0.0
        %2214 = vmatmul.mubr.f32.gmra.mxu0 %v2141
        %v2215 = vpop.f32.mrf.mxu0
        %v2216 = vadd.f32 0.0, %v2215
        %v2217 = vpop.f32.mrf.mxu0
        %v2218 = vadd.f32 0.0, %v2217
        %2219 = vdwg.mxu0
        %v2220 = vadd.f32 %v2076, %v2210
        %v2221 = vadd.f32 %v2077, %v2212
        %v2222 = vadd.f32 %v2078, %v2216
        %v2223 = vadd.f32 %v2079, %v2218
        %s2224 = scalar_lea.vmem [#allocation4], 96
        %v2225 = vld [vmem:[%s2224] sm:$0xf]
        %v2226 = vld [vmem:[%s2224 + $0x4] sm:$0xf]
        %v2229 = vunpack.c.l.b16 %v2225
        %v2230 = vunpack.c.l.b16 %v2226
        %v2231 = vpack.c.b16 %v2230, %v2229
        %v2233 = vsel %vm500, %v2231, 0
        %2235 = vmatprep.subr.bf16.mxu0 0
        %2236 = vmatpush1.bf16.xpose.msra.mxu0 0
        %2237 = vmatprep.subr.bf16.mxu0 0
        %2238 = vmatpush1.bf16.xpose.msra.mxu0 0
        %2239 = vmatprep.subr.bf16.mxu0 0
        %2240 = vmatpush1.bf16.xpose.msra.mxu0 0
        %2241 = vmatprep.subr.bf16.mxu0 0
        %2242 = vmatpush1.bf16.xpose.msra.mxu0 0
        %2243 = vmatprep.subr.bf16.mxu0 0
        %2244 = vmatpush1.bf16.xpose.msra.mxu0 0
        %2245 = vmatprep.subr.bf16.mxu0 0
        %2246 = vmatpush1.bf16.xpose.msra.mxu0 0
        %2247 = vmatprep.subr.bf16.mxu0 0
        %2248 = vmatpush1.bf16.xpose.msra.mxu0 0
        %2249 = vmatprep.subr.bf16.mxu0 0
        %2250 = vmatpush1.bf16.xpose.msra.mxu0 %v505
        %2251 = vmatprep.subr.bf16.mxu0 0
        %2252 = vmatpush2.bf16.xpose.msra.mxu0 0
        %2253 = vmatprep.subr.bf16.mxu0 0
        %2254 = vmatpush2.bf16.xpose.msra.mxu0 0
        %2255 = vmatprep.subr.bf16.mxu0 0
        %2256 = vmatpush2.bf16.xpose.msra.mxu0 0
        %2257 = vmatprep.subr.bf16.mxu0 0
        %2258 = vmatpush2.bf16.xpose.msra.mxu0 0
        %2259 = vmatprep.subr.bf16.mxu0 0
        %2260 = vmatpush2.bf16.xpose.msra.mxu0 0
        %2261 = vmatprep.subr.bf16.mxu0 0
        %2262 = vmatpush2.bf16.xpose.msra.mxu0 0
        %2263 = vmatprep.subr.bf16.mxu0 0
        %2264 = vmatpush2.bf16.xpose.msra.mxu0 0
        %2265 = vmatprep.subr.bf16.mxu0 0
        %2266 = vmatpush2.bf16.xpose.msra.mxu0 0
        %2267 = vmatprep.mubr.bf16.mxu0 0
        %2268 = vmatmul.mubr.bf16.gmra.mxu0 %v2233
        %v2269 = vpop.f32.mrf.mxu0
        %v2270 = vadd.f32 0.0, %v2269
        %v2271 = vpop.f32.mrf.mxu0
        %v2272 = vpop.f32.mrf.mxu0
        %v2273 = vadd.f32 0.0, %v2272
        %v2274 = vpop.f32.mrf.mxu0
        %2275 = vdwg.mxu0
        %s2276 = scalar_lea.vmem [#allocation7], 384
        %v2277 = vld [vmem:[%s2276] sm:$0xff]
        %v2278 = vld [vmem:[%s2276 + $0x8] sm:$0xff]
        %v2279 = vld [vmem:[%s2276 + $0x10] sm:$0xff]
        %v2280 = vld [vmem:[%s2276 + $0x18] sm:$0xff]
        %v2282 = vsel %vm552, %v2270, 0
        %v2285 = vsel %vm552, %v2273, 0
        %2287 = vmatprep.subr.mxu0 0.0
        %2288 = vmatpush1.msra.mxu0 0.0
        %2289 = vmatprep.subr.mxu0 0.0
        %2290 = vmatpush1.msra.mxu0 0.0
        %2291 = vmatprep.subr.mxu0 0.0
        %2292 = vmatpush1.msra.mxu0 0.0
        %2293 = vmatprep.subr.mxu0 0.0
        %2294 = vmatpush1.msra.mxu0 0.0
        %2295 = vmatprep.subr.mxu0 0.0
        %2296 = vmatpush1.msra.mxu0 0.0
        %2297 = vmatprep.subr.mxu0 0.0
        %2298 = vmatpush1.msra.mxu0 0.0
        %2299 = vmatprep.subr.mxu0 0.0
        %2300 = vmatpush1.msra.mxu0 0.0
        %2301 = vmatprep.subr.mxu0 0.0
        %2302 = vmatpush1.msra.mxu0 0.0
        %2303 = vmatprep.subr.mxu0 0.0
        %2304 = vmatpush1.msra.mxu0 0.0
        %2305 = vmatprep.subr.mxu0 0.0
        %2306 = vmatpush1.msra.mxu0 0.0
        %2307 = vmatprep.subr.mxu0 0.0
        %2308 = vmatpush1.msra.mxu0 0.0
        %2309 = vmatprep.subr.mxu0 0.0
        %2310 = vmatpush1.msra.mxu0 0.0
        %2311 = vmatprep.subr.mxu0 0.0
        %2312 = vmatpush1.msra.mxu0 0.0
        %2313 = vmatprep.subr.mxu0 0.0
        %2314 = vmatpush1.msra.mxu0 0.0
        %2315 = vmatprep.subr.mxu0 %v2280
        %2316 = vmatpush1.msra.mxu0 %v2279
        %2317 = vmatprep.subr.mxu0 %v2278
        %2318 = vmatpush1.msra.mxu0 %v2277
        %2319 = vmatprep.subr.mxu0 0.0
        %2320 = vmatpush2.msra.mxu0 0.0
        %2321 = vmatprep.subr.mxu0 0.0
        %2322 = vmatpush2.msra.mxu0 0.0
        %2323 = vmatprep.subr.mxu0 0.0
        %2324 = vmatpush2.msra.mxu0 0.0
        %2325 = vmatprep.subr.mxu0 0.0
        %2326 = vmatpush2.msra.mxu0 0.0
        %2327 = vmatprep.subr.mxu0 0.0
        %2328 = vmatpush2.msra.mxu0 0.0
        %2329 = vmatprep.subr.mxu0 0.0
        %2330 = vmatpush2.msra.mxu0 0.0
        %2331 = vmatprep.subr.mxu0 0.0
        %2332 = vmatpush2.msra.mxu0 0.0
        %2333 = vmatprep.subr.mxu0 0.0
        %2334 = vmatpush2.msra.mxu0 0.0
        %2335 = vmatprep.subr.mxu0 0.0
        %2336 = vmatpush2.msra.mxu0 0.0
        %2337 = vmatprep.subr.mxu0 0.0
        %2338 = vmatpush2.msra.mxu0 0.0
        %2339 = vmatprep.subr.mxu0 0.0
        %2340 = vmatpush2.msra.mxu0 0.0
        %2341 = vmatprep.subr.mxu0 0.0
        %2342 = vmatpush2.msra.mxu0 0.0
        %2343 = vmatprep.subr.mxu0 0.0
        %2344 = vmatpush2.msra.mxu0 0.0
        %2345 = vmatprep.subr.mxu0 0.0
        %2346 = vmatpush2.msra.mxu0 0.0
        %2347 = vmatprep.subr.mxu0 0.0
        %2348 = vmatpush2.msra.mxu0 0.0
        %2349 = vmatprep.subr.mxu0 0.0
        %2350 = vmatpush2.msra.mxu0 0.0
        %2351 = vmatprep.mubr.f32.mxu0 0.0
        %2352 = vmatmul.mubr.f32.gmra.mxu0 %v2282
        %v2353 = vpop.f32.mrf.mxu0
        %v2354 = vadd.f32 0.0, %v2353
        %v2355 = vpop.f32.mrf.mxu0
        %v2356 = vadd.f32 0.0, %v2355
        %2357 = vmatprep.mubr.f32.mxu0 0.0
        %2358 = vmatmul.mubr.f32.gmra.mxu0 %v2285
        %v2359 = vpop.f32.mrf.mxu0
        %v2360 = vadd.f32 0.0, %v2359
        %v2361 = vpop.f32.mrf.mxu0
        %v2362 = vadd.f32 0.0, %v2361
        %2363 = vdwg.mxu0
        %v2364 = vadd.f32 %v2220, %v2354
        %v2365 = vadd.f32 %v2221, %v2356
        %v2366 = vadd.f32 %v2222, %v2360
        %v2367 = vadd.f32 %v2223, %v2362
        %s2368 = scalar_lea.vmem [#allocation4], 104
        %v2369 = vld [vmem:[%s2368] sm:$0xf]
        %v2370 = vld [vmem:[%s2368 + $0x4] sm:$0xf]
        %v2373 = vunpack.c.l.b16 %v2369
        %v2374 = vunpack.c.l.b16 %v2370
        %v2375 = vpack.c.b16 %v2374, %v2373
        %v2377 = vsel %vm500, %v2375, 0
        %2379 = vmatprep.subr.bf16.mxu0 0
        %2380 = vmatpush1.bf16.xpose.msra.mxu0 0
        %2381 = vmatprep.subr.bf16.mxu0 0
        %2382 = vmatpush1.bf16.xpose.msra.mxu0 0
        %2383 = vmatprep.subr.bf16.mxu0 0
        %2384 = vmatpush1.bf16.xpose.msra.mxu0 0
        %2385 = vmatprep.subr.bf16.mxu0 0
        %2386 = vmatpush1.bf16.xpose.msra.mxu0 0
        %2387 = vmatprep.subr.bf16.mxu0 0
        %2388 = vmatpush1.bf16.xpose.msra.mxu0 0
        %2389 = vmatprep.subr.bf16.mxu0 0
        %2390 = vmatpush1.bf16.xpose.msra.mxu0 0
        %2391 = vmatprep.subr.bf16.mxu0 0
        %2392 = vmatpush1.bf16.xpose.msra.mxu0 0
        %2393 = vmatprep.subr.bf16.mxu0 0
        %2394 = vmatpush1.bf16.xpose.msra.mxu0 %v505
        %2395 = vmatprep.subr.bf16.mxu0 0
        %2396 = vmatpush2.bf16.xpose.msra.mxu0 0
        %2397 = vmatprep.subr.bf16.mxu0 0
        %2398 = vmatpush2.bf16.xpose.msra.mxu0 0
        %2399 = vmatprep.subr.bf16.mxu0 0
        %2400 = vmatpush2.bf16.xpose.msra.mxu0 0
        %2401 = vmatprep.subr.bf16.mxu0 0
        %2402 = vmatpush2.bf16.xpose.msra.mxu0 0
        %2403 = vmatprep.subr.bf16.mxu0 0
        %2404 = vmatpush2.bf16.xpose.msra.mxu0 0
        %2405 = vmatprep.subr.bf16.mxu0 0
        %2406 = vmatpush2.bf16.xpose.msra.mxu0 0
        %2407 = vmatprep.subr.bf16.mxu0 0
        %2408 = vmatpush2.bf16.xpose.msra.mxu0 0
        %2409 = vmatprep.subr.bf16.mxu0 0
        %2410 = vmatpush2.bf16.xpose.msra.mxu0 0
        %2411 = vmatprep.mubr.bf16.mxu0 0
        %2412 = vmatmul.mubr.bf16.gmra.mxu0 %v2377
        %v2413 = vpop.f32.mrf.mxu0
        %v2414 = vadd.f32 0.0, %v2413
        %v2415 = vpop.f32.mrf.mxu0
        %v2416 = vpop.f32.mrf.mxu0
        %v2417 = vadd.f32 0.0, %v2416
        %v2418 = vpop.f32.mrf.mxu0
        %2419 = vdwg.mxu0
        %s2420 = scalar_lea.vmem [#allocation7], 416
        %v2421 = vld [vmem:[%s2420] sm:$0xff]
        %v2422 = vld [vmem:[%s2420 + $0x8] sm:$0xff]
        %v2423 = vld [vmem:[%s2420 + $0x10] sm:$0xff]
        %v2424 = vld [vmem:[%s2420 + $0x18] sm:$0xff]
        %v2426 = vsel %vm552, %v2414, 0
        %v2429 = vsel %vm552, %v2417, 0
        %2431 = vmatprep.subr.mxu0 0.0
        %2432 = vmatpush1.msra.mxu0 0.0
        %2433 = vmatprep.subr.mxu0 0.0
        %2434 = vmatpush1.msra.mxu0 0.0
        %2435 = vmatprep.subr.mxu0 0.0
        %2436 = vmatpush1.msra.mxu0 0.0
        %2437 = vmatprep.subr.mxu0 0.0
        %2438 = vmatpush1.msra.mxu0 0.0
        %2439 = vmatprep.subr.mxu0 0.0
        %2440 = vmatpush1.msra.mxu0 0.0
        %2441 = vmatprep.subr.mxu0 0.0
        %2442 = vmatpush1.msra.mxu0 0.0
        %2443 = vmatprep.subr.mxu0 0.0
        %2444 = vmatpush1.msra.mxu0 0.0
        %2445 = vmatprep.subr.mxu0 0.0
        %2446 = vmatpush1.msra.mxu0 0.0
        %2447 = vmatprep.subr.mxu0 0.0
        %2448 = vmatpush1.msra.mxu0 0.0
        %2449 = vmatprep.subr.mxu0 0.0
        %2450 = vmatpush1.msra.mxu0 0.0
        %2451 = vmatprep.subr.mxu0 0.0
        %2452 = vmatpush1.msra.mxu0 0.0
        %2453 = vmatprep.subr.mxu0 0.0
        %2454 = vmatpush1.msra.mxu0 0.0
        %2455 = vmatprep.subr.mxu0 0.0
        %2456 = vmatpush1.msra.mxu0 0.0
        %2457 = vmatprep.subr.mxu0 0.0
        %2458 = vmatpush1.msra.mxu0 0.0
        %2459 = vmatprep.subr.mxu0 %v2424
        %2460 = vmatpush1.msra.mxu0 %v2423
        %2461 = vmatprep.subr.mxu0 %v2422
        %2462 = vmatpush1.msra.mxu0 %v2421
        %2463 = vmatprep.subr.mxu0 0.0
        %2464 = vmatpush2.msra.mxu0 0.0
        %2465 = vmatprep.subr.mxu0 0.0
        %2466 = vmatpush2.msra.mxu0 0.0
        %2467 = vmatprep.subr.mxu0 0.0
        %2468 = vmatpush2.msra.mxu0 0.0
        %2469 = vmatprep.subr.mxu0 0.0
        %2470 = vmatpush2.msra.mxu0 0.0
        %2471 = vmatprep.subr.mxu0 0.0
        %2472 = vmatpush2.msra.mxu0 0.0
        %2473 = vmatprep.subr.mxu0 0.0
        %2474 = vmatpush2.msra.mxu0 0.0
        %2475 = vmatprep.subr.mxu0 0.0
        %2476 = vmatpush2.msra.mxu0 0.0
        %2477 = vmatprep.subr.mxu0 0.0
        %2478 = vmatpush2.msra.mxu0 0.0
        %2479 = vmatprep.subr.mxu0 0.0
        %2480 = vmatpush2.msra.mxu0 0.0
        %2481 = vmatprep.subr.mxu0 0.0
        %2482 = vmatpush2.msra.mxu0 0.0
        %2483 = vmatprep.subr.mxu0 0.0
        %2484 = vmatpush2.msra.mxu0 0.0
        %2485 = vmatprep.subr.mxu0 0.0
        %2486 = vmatpush2.msra.mxu0 0.0
        %2487 = vmatprep.subr.mxu0 0.0
        %2488 = vmatpush2.msra.mxu0 0.0
        %2489 = vmatprep.subr.mxu0 0.0
        %2490 = vmatpush2.msra.mxu0 0.0
        %2491 = vmatprep.subr.mxu0 0.0
        %2492 = vmatpush2.msra.mxu0 0.0
        %2493 = vmatprep.subr.mxu0 0.0
        %2494 = vmatpush2.msra.mxu0 0.0
        %2495 = vmatprep.mubr.f32.mxu0 0.0
        %2496 = vmatmul.mubr.f32.gmra.mxu0 %v2426
        %v2497 = vpop.f32.mrf.mxu0
        %v2498 = vadd.f32 0.0, %v2497
        %v2499 = vpop.f32.mrf.mxu0
        %v2500 = vadd.f32 0.0, %v2499
        %2501 = vmatprep.mubr.f32.mxu0 0.0
        %2502 = vmatmul.mubr.f32.gmra.mxu0 %v2429
        %v2503 = vpop.f32.mrf.mxu0
        %v2504 = vadd.f32 0.0, %v2503
        %v2505 = vpop.f32.mrf.mxu0
        %v2506 = vadd.f32 0.0, %v2505
        %2507 = vdwg.mxu0
        %v2508 = vadd.f32 %v2364, %v2498
        %v2509 = vadd.f32 %v2365, %v2500
        %v2510 = vadd.f32 %v2366, %v2504
        %v2511 = vadd.f32 %v2367, %v2506
        %s2512 = scalar_lea.vmem [#allocation4], 112
        %v2513 = vld [vmem:[%s2512] sm:$0xf]
        %v2514 = vld [vmem:[%s2512 + $0x4] sm:$0xf]
        %v2517 = vunpack.c.l.b16 %v2513
        %v2518 = vunpack.c.l.b16 %v2514
        %v2519 = vpack.c.b16 %v2518, %v2517
        %v2521 = vsel %vm500, %v2519, 0
        %2523 = vmatprep.subr.bf16.mxu0 0
        %2524 = vmatpush1.bf16.xpose.msra.mxu0 0
        %2525 = vmatprep.subr.bf16.mxu0 0
        %2526 = vmatpush1.bf16.xpose.msra.mxu0 0
        %2527 = vmatprep.subr.bf16.mxu0 0
        %2528 = vmatpush1.bf16.xpose.msra.mxu0 0
        %2529 = vmatprep.subr.bf16.mxu0 0
        %2530 = vmatpush1.bf16.xpose.msra.mxu0 0
        %2531 = vmatprep.subr.bf16.mxu0 0
        %2532 = vmatpush1.bf16.xpose.msra.mxu0 0
        %2533 = vmatprep.subr.bf16.mxu0 0
        %2534 = vmatpush1.bf16.xpose.msra.mxu0 0
        %2535 = vmatprep.subr.bf16.mxu0 0
        %2536 = vmatpush1.bf16.xpose.msra.mxu0 0
        %2537 = vmatprep.subr.bf16.mxu0 0
        %2538 = vmatpush1.bf16.xpose.msra.mxu0 %v505
        %2539 = vmatprep.subr.bf16.mxu0 0
        %2540 = vmatpush2.bf16.xpose.msra.mxu0 0
        %2541 = vmatprep.subr.bf16.mxu0 0
        %2542 = vmatpush2.bf16.xpose.msra.mxu0 0
        %2543 = vmatprep.subr.bf16.mxu0 0
        %2544 = vmatpush2.bf16.xpose.msra.mxu0 0
        %2545 = vmatprep.subr.bf16.mxu0 0
        %2546 = vmatpush2.bf16.xpose.msra.mxu0 0
        %2547 = vmatprep.subr.bf16.mxu0 0
        %2548 = vmatpush2.bf16.xpose.msra.mxu0 0
        %2549 = vmatprep.subr.bf16.mxu0 0
        %2550 = vmatpush2.bf16.xpose.msra.mxu0 0
        %2551 = vmatprep.subr.bf16.mxu0 0
        %2552 = vmatpush2.bf16.xpose.msra.mxu0 0
        %2553 = vmatprep.subr.bf16.mxu0 0
        %2554 = vmatpush2.bf16.xpose.msra.mxu0 0
        %2555 = vmatprep.mubr.bf16.mxu0 0
        %2556 = vmatmul.mubr.bf16.gmra.mxu0 %v2521
        %v2557 = vpop.f32.mrf.mxu0
        %v2558 = vadd.f32 0.0, %v2557
        %v2559 = vpop.f32.mrf.mxu0
        %v2560 = vpop.f32.mrf.mxu0
        %v2561 = vadd.f32 0.0, %v2560
        %v2562 = vpop.f32.mrf.mxu0
        %2563 = vdwg.mxu0
        %s2564 = scalar_lea.vmem [#allocation7], 448
        %v2565 = vld [vmem:[%s2564] sm:$0xff]
        %v2566 = vld [vmem:[%s2564 + $0x8] sm:$0xff]
        %v2567 = vld [vmem:[%s2564 + $0x10] sm:$0xff]
        %v2568 = vld [vmem:[%s2564 + $0x18] sm:$0xff]
        %v2570 = vsel %vm552, %v2558, 0
        %v2573 = vsel %vm552, %v2561, 0
        %2575 = vmatprep.subr.mxu0 0.0
        %2576 = vmatpush1.msra.mxu0 0.0
        %2577 = vmatprep.subr.mxu0 0.0
        %2578 = vmatpush1.msra.mxu0 0.0
        %2579 = vmatprep.subr.mxu0 0.0
        %2580 = vmatpush1.msra.mxu0 0.0
        %2581 = vmatprep.subr.mxu0 0.0
        %2582 = vmatpush1.msra.mxu0 0.0
        %2583 = vmatprep.subr.mxu0 0.0
        %2584 = vmatpush1.msra.mxu0 0.0
        %2585 = vmatprep.subr.mxu0 0.0
        %2586 = vmatpush1.msra.mxu0 0.0
        %2587 = vmatprep.subr.mxu0 0.0
        %2588 = vmatpush1.msra.mxu0 0.0
        %2589 = vmatprep.subr.mxu0 0.0
        %2590 = vmatpush1.msra.mxu0 0.0
        %2591 = vmatprep.subr.mxu0 0.0
        %2592 = vmatpush1.msra.mxu0 0.0
        %2593 = vmatprep.subr.mxu0 0.0
        %2594 = vmatpush1.msra.mxu0 0.0
        %2595 = vmatprep.subr.mxu0 0.0
        %2596 = vmatpush1.msra.mxu0 0.0
        %2597 = vmatprep.subr.mxu0 0.0
        %2598 = vmatpush1.msra.mxu0 0.0
        %2599 = vmatprep.subr.mxu0 0.0
        %2600 = vmatpush1.msra.mxu0 0.0
        %2601 = vmatprep.subr.mxu0 0.0
        %2602 = vmatpush1.msra.mxu0 0.0
        %2603 = vmatprep.subr.mxu0 %v2568
        %2604 = vmatpush1.msra.mxu0 %v2567
        %2605 = vmatprep.subr.mxu0 %v2566
        %2606 = vmatpush1.msra.mxu0 %v2565
        %2607 = vmatprep.subr.mxu0 0.0
        %2608 = vmatpush2.msra.mxu0 0.0
        %2609 = vmatprep.subr.mxu0 0.0
        %2610 = vmatpush2.msra.mxu0 0.0
        %2611 = vmatprep.subr.mxu0 0.0
        %2612 = vmatpush2.msra.mxu0 0.0
        %2613 = vmatprep.subr.mxu0 0.0
        %2614 = vmatpush2.msra.mxu0 0.0
        %2615 = vmatprep.subr.mxu0 0.0
        %2616 = vmatpush2.msra.mxu0 0.0
        %2617 = vmatprep.subr.mxu0 0.0
        %2618 = vmatpush2.msra.mxu0 0.0
        %2619 = vmatprep.subr.mxu0 0.0
        %2620 = vmatpush2.msra.mxu0 0.0
        %2621 = vmatprep.subr.mxu0 0.0
        %2622 = vmatpush2.msra.mxu0 0.0
        %2623 = vmatprep.subr.mxu0 0.0
        %2624 = vmatpush2.msra.mxu0 0.0
        %2625 = vmatprep.subr.mxu0 0.0
        %2626 = vmatpush2.msra.mxu0 0.0
        %2627 = vmatprep.subr.mxu0 0.0
        %2628 = vmatpush2.msra.mxu0 0.0
        %2629 = vmatprep.subr.mxu0 0.0
        %2630 = vmatpush2.msra.mxu0 0.0
        %2631 = vmatprep.subr.mxu0 0.0
        %2632 = vmatpush2.msra.mxu0 0.0
        %2633 = vmatprep.subr.mxu0 0.0
        %2634 = vmatpush2.msra.mxu0 0.0
        %2635 = vmatprep.subr.mxu0 0.0
        %2636 = vmatpush2.msra.mxu0 0.0
        %2637 = vmatprep.subr.mxu0 0.0
        %2638 = vmatpush2.msra.mxu0 0.0
        %2639 = vmatprep.mubr.f32.mxu0 0.0
        %2640 = vmatmul.mubr.f32.gmra.mxu0 %v2570
        %v2641 = vpop.f32.mrf.mxu0
        %v2642 = vadd.f32 0.0, %v2641
        %v2643 = vpop.f32.mrf.mxu0
        %v2644 = vadd.f32 0.0, %v2643
        %2645 = vmatprep.mubr.f32.mxu0 0.0
        %2646 = vmatmul.mubr.f32.gmra.mxu0 %v2573
        %v2647 = vpop.f32.mrf.mxu0
        %v2648 = vadd.f32 0.0, %v2647
        %v2649 = vpop.f32.mrf.mxu0
        %v2650 = vadd.f32 0.0, %v2649
        %2651 = vdwg.mxu0
        %v2652 = vadd.f32 %v2508, %v2642
        %v2653 = vadd.f32 %v2509, %v2644
        %v2654 = vadd.f32 %v2510, %v2648
        %v2655 = vadd.f32 %v2511, %v2650
        %s2656 = scalar_lea.vmem [#allocation4], 120
        %v2657 = vld [vmem:[%s2656] sm:$0xf]
        %v2658 = vld [vmem:[%s2656 + $0x4] sm:$0xf]
        %v2661 = vunpack.c.l.b16 %v2657
        %v2662 = vunpack.c.l.b16 %v2658
        %v2663 = vpack.c.b16 %v2662, %v2661
        %v2665 = vsel %vm500, %v2663, 0
        %2667 = vmatprep.subr.bf16.mxu0 0
        %2668 = vmatpush1.bf16.xpose.msra.mxu0 0
        %2669 = vmatprep.subr.bf16.mxu0 0
        %2670 = vmatpush1.bf16.xpose.msra.mxu0 0
        %2671 = vmatprep.subr.bf16.mxu0 0
        %2672 = vmatpush1.bf16.xpose.msra.mxu0 0
        %2673 = vmatprep.subr.bf16.mxu0 0
        %2674 = vmatpush1.bf16.xpose.msra.mxu0 0
        %2675 = vmatprep.subr.bf16.mxu0 0
        %2676 = vmatpush1.bf16.xpose.msra.mxu0 0
        %2677 = vmatprep.subr.bf16.mxu0 0
        %2678 = vmatpush1.bf16.xpose.msra.mxu0 0
        %2679 = vmatprep.subr.bf16.mxu0 0
        %2680 = vmatpush1.bf16.xpose.msra.mxu0 0
        %2681 = vmatprep.subr.bf16.mxu0 0
        %2682 = vmatpush1.bf16.xpose.msra.mxu0 %v505
        %2683 = vmatprep.subr.bf16.mxu0 0
        %2684 = vmatpush2.bf16.xpose.msra.mxu0 0
        %2685 = vmatprep.subr.bf16.mxu0 0
        %2686 = vmatpush2.bf16.xpose.msra.mxu0 0
        %2687 = vmatprep.subr.bf16.mxu0 0
        %2688 = vmatpush2.bf16.xpose.msra.mxu0 0
        %2689 = vmatprep.subr.bf16.mxu0 0
        %2690 = vmatpush2.bf16.xpose.msra.mxu0 0
        %2691 = vmatprep.subr.bf16.mxu0 0
        %2692 = vmatpush2.bf16.xpose.msra.mxu0 0
        %2693 = vmatprep.subr.bf16.mxu0 0
        %2694 = vmatpush2.bf16.xpose.msra.mxu0 0
        %2695 = vmatprep.subr.bf16.mxu0 0
        %2696 = vmatpush2.bf16.xpose.msra.mxu0 0
        %2697 = vmatprep.subr.bf16.mxu0 0
        %2698 = vmatpush2.bf16.xpose.msra.mxu0 0
        %2699 = vmatprep.mubr.bf16.mxu0 0
        %2700 = vmatmul.mubr.bf16.gmra.mxu0 %v2665
        %v2701 = vpop.f32.mrf.mxu0
        %v2702 = vadd.f32 0.0, %v2701
        %v2703 = vpop.f32.mrf.mxu0
        %v2704 = vpop.f32.mrf.mxu0
        %v2705 = vadd.f32 0.0, %v2704
        %v2706 = vpop.f32.mrf.mxu0
        %2707 = vdwg.mxu0
        %s2708 = scalar_lea.vmem [#allocation7], 480
        %v2709 = vld [vmem:[%s2708] sm:$0xff]
        %v2710 = vld [vmem:[%s2708 + $0x8] sm:$0xff]
        %v2711 = vld [vmem:[%s2708 + $0x10] sm:$0xff]
        %v2712 = vld [vmem:[%s2708 + $0x18] sm:$0xff]
        %v2714 = vsel %vm552, %v2702, 0
        %v2717 = vsel %vm552, %v2705, 0
        %2719 = vmatprep.subr.mxu0 0.0
        %2720 = vmatpush1.msra.mxu0 0.0
        %2721 = vmatprep.subr.mxu0 0.0
        %2722 = vmatpush1.msra.mxu0 0.0
        %2723 = vmatprep.subr.mxu0 0.0
        %2724 = vmatpush1.msra.mxu0 0.0
        %2725 = vmatprep.subr.mxu0 0.0
        %2726 = vmatpush1.msra.mxu0 0.0
        %2727 = vmatprep.subr.mxu0 0.0
        %2728 = vmatpush1.msra.mxu0 0.0
        %2729 = vmatprep.subr.mxu0 0.0
        %2730 = vmatpush1.msra.mxu0 0.0
        %2731 = vmatprep.subr.mxu0 0.0
        %2732 = vmatpush1.msra.mxu0 0.0
        %2733 = vmatprep.subr.mxu0 0.0
        %2734 = vmatpush1.msra.mxu0 0.0
        %2735 = vmatprep.subr.mxu0 0.0
        %2736 = vmatpush1.msra.mxu0 0.0
        %2737 = vmatprep.subr.mxu0 0.0
        %2738 = vmatpush1.msra.mxu0 0.0
        %2739 = vmatprep.subr.mxu0 0.0
        %2740 = vmatpush1.msra.mxu0 0.0
        %2741 = vmatprep.subr.mxu0 0.0
        %2742 = vmatpush1.msra.mxu0 0.0
        %2743 = vmatprep.subr.mxu0 0.0
        %2744 = vmatpush1.msra.mxu0 0.0
        %2745 = vmatprep.subr.mxu0 0.0
        %2746 = vmatpush1.msra.mxu0 0.0
        %2747 = vmatprep.subr.mxu0 %v2712
        %2748 = vmatpush1.msra.mxu0 %v2711
        %2749 = vmatprep.subr.mxu0 %v2710
        %2750 = vmatpush1.msra.mxu0 %v2709
        %2751 = vmatprep.subr.mxu0 0.0
        %2752 = vmatpush2.msra.mxu0 0.0
        %2753 = vmatprep.subr.mxu0 0.0
        %2754 = vmatpush2.msra.mxu0 0.0
        %2755 = vmatprep.subr.mxu0 0.0
        %2756 = vmatpush2.msra.mxu0 0.0
        %2757 = vmatprep.subr.mxu0 0.0
        %2758 = vmatpush2.msra.mxu0 0.0
        %2759 = vmatprep.subr.mxu0 0.0
        %2760 = vmatpush2.msra.mxu0 0.0
        %2761 = vmatprep.subr.mxu0 0.0
        %2762 = vmatpush2.msra.mxu0 0.0
        %2763 = vmatprep.subr.mxu0 0.0
        %2764 = vmatpush2.msra.mxu0 0.0
        %2765 = vmatprep.subr.mxu0 0.0
        %2766 = vmatpush2.msra.mxu0 0.0
        %2767 = vmatprep.subr.mxu0 0.0
        %2768 = vmatpush2.msra.mxu0 0.0
        %2769 = vmatprep.subr.mxu0 0.0
        %2770 = vmatpush2.msra.mxu0 0.0
        %2771 = vmatprep.subr.mxu0 0.0
        %2772 = vmatpush2.msra.mxu0 0.0
        %2773 = vmatprep.subr.mxu0 0.0
        %2774 = vmatpush2.msra.mxu0 0.0
        %2775 = vmatprep.subr.mxu0 0.0
        %2776 = vmatpush2.msra.mxu0 0.0
        %2777 = vmatprep.subr.mxu0 0.0
        %2778 = vmatpush2.msra.mxu0 0.0
        %2779 = vmatprep.subr.mxu0 0.0
        %2780 = vmatpush2.msra.mxu0 0.0
        %2781 = vmatprep.subr.mxu0 0.0
        %2782 = vmatpush2.msra.mxu0 0.0
        %2783 = vmatprep.mubr.f32.mxu0 0.0
        %2784 = vmatmul.mubr.f32.gmra.mxu0 %v2714
        %v2785 = vpop.f32.mrf.mxu0
        %v2786 = vadd.f32 0.0, %v2785
        %v2787 = vpop.f32.mrf.mxu0
        %v2788 = vadd.f32 0.0, %v2787
        %2789 = vmatprep.mubr.f32.mxu0 0.0
        %2790 = vmatmul.mubr.f32.gmra.mxu0 %v2717
        %v2791 = vpop.f32.mrf.mxu0
        %v2792 = vadd.f32 0.0, %v2791
        %v2793 = vpop.f32.mrf.mxu0
        %v2794 = vadd.f32 0.0, %v2793
        %2795 = vdwg.mxu0
        %v2796 = vadd.f32 %v2652, %v2786
        %v2797 = vadd.f32 %v2653, %v2788
        %v2798 = vadd.f32 %v2654, %v2792
        %v2799 = vadd.f32 %v2655, %v2794
        %2800 = vst [vmem:[#allocation2] sm:$0xff] 0.0
        %2801 = vst [vmem:[#allocation2 + $0x8] sm:$0xff] 0.0
        %2802 = vst [vmem:[#allocation2 + $0x10] sm:$0xff] 0.0
        %2803 = vst [vmem:[#allocation2 + $0x18] sm:$0xff] 0.0
        %2804 = vst [vmem:[#allocation2 + $0x20] sm:$0xff] 0.0
        %2805 = vst [vmem:[#allocation2 + $0x28] sm:$0xff] 0.0
        %2806 = vst [vmem:[#allocation2 + $0x30] sm:$0xff] 0.0
        %2807 = vst [vmem:[#allocation2 + $0x38] sm:$0xff] 0.0
        %2808 = vst [vmem:[#allocation2 + $0x8] sm:$0xff] %v2796
        %2809 = vst [vmem:[#allocation2 + $0x10] sm:$0xff] %v2797
        %2810 = vst [vmem:[#allocation2 + $0x28] sm:$0xff] %v2798
        %2811 = vst [vmem:[#allocation2 + $0x30] sm:$0xff] %v2799
        %v2812 = vld [vmem:[#allocation2] sm:$0xff]
        %v2813 = vld [vmem:[#allocation2 + $0x8] sm:$0xff]
        %v2814 = vld [vmem:[#allocation2 + $0x10] sm:$0xff]
        %v2815 = vld [vmem:[#allocation2 + $0x18] sm:$0xff]
        %v2816 = vld [vmem:[#allocation2 + $0x20] sm:$0xff]
        %v2817 = vld [vmem:[#allocation2 + $0x28] sm:$0xff]
        %v2818 = vld [vmem:[#allocation2 + $0x30] sm:$0xff]
        %v2819 = vld [vmem:[#allocation2 + $0x38] sm:$0xff]
        %v2820 = vld [vmem:[#allocation9] sm:$0x3]
        %v2821 = vld [vmem:[#allocation10] sm:$0x3]
        %v2823 = vlaneseq
        %v2824 = vshrl.u32 %v2823, 7
        %v2825 = vsub.s32 0, %v2824
        %v2826 = vrot.slane %v2820, %v2825
        %v2827 = vlaneseq
        %v2828 = vshrl.u32 %v2827, 7
        %v2829 = vsub.s32 1, %v2828
        %v2830 = vrot.slane %v2820, %v2829
        %2831 = vrot.lane.b32.xlu0 %v2826, 95
        %v2832 = vpop.permute.xlu0 %2831
        %2833 = vrot.lane.b32.xlu0 %v2830, 95
        %v2834 = vpop.permute.xlu0 %2833
        %vm2835 = vcmask 777216
        %v2836 = vsel %vm2835, %v2832, %v2834
        %v2840 = vmul.f32 %v2812, %v2832
        %v2841 = vmul.f32 %v2813, %v2836
        %v2842 = vmul.f32 %v2814, %v2834
        %v2843 = vmul.f32 %v2816, %v2832
        %v2844 = vmul.f32 %v2817, %v2836
        %v2845 = vmul.f32 %v2818, %v2834
        %v2846 = vpack.c.bf16 %v2843, %v2840
        %v2847 = vpack.c.bf16 %v2844, %v2841
        %v2848 = vpack.c.bf16 %v2845, %v2842
        %v2852 = vunpack.c.l.b16 %v2846
        %v2853 = vunpack.c.l.b16 %v2847
        %v2854 = vunpack.c.l.b16 %v2848
        %v2855 = vunpack.c.h.b16 %v2846
        %v2856 = vunpack.c.h.b16 %v2847
        %v2857 = vunpack.c.h.b16 %v2848
        %v2858 = vpack.c.b16 %v2853, %v2852
        %v2859 = vpack.c.b16 %v2854, %v2854
        %v2860 = vpack.c.b16 %v2856, %v2855
        %v2861 = vpack.c.b16 %v2857, %v2857
        %2862 = vrot.lane.b32.xlu0 %v2858, 33
        %v2863 = vpop.permute.xlu0 %2862
        %2864 = vrot.lane.b32.xlu0 %v2859, 33
        %v2865 = vpop.permute.xlu0 %2864
        %2866 = vrot.lane.b32.xlu0 %v2860, 33
        %v2867 = vpop.permute.xlu0 %2866
        %2868 = vrot.lane.b32.xlu0 %v2861, 33
        %v2869 = vpop.permute.xlu0 %2868
        %v2870 = vrot.slane %v2863, 4
        %v2871 = vrot.slane %v2865, 4
        %v2872 = vrot.slane %v2867, 4
        %v2873 = vrot.slane %v2869, 4
        %vm2874 = vcmask 1043456
        %v2875 = vsel %vm2874, %v2870, %v2871
        %vm2876 = vcmask 269312
        %v2877 = vsel %vm2876, %v2863, %v2875
        %v2878 = vsel %vm2874, %v2872, %v2873
        %v2879 = vsel %vm2876, %v2867, %v2878
        %2882 = vst [vmem:[#allocation3] sm:$0xff] %v2877
        %2883 = vst [vmem:[#allocation3 + $0x8] sm:$0xff] %v2879
        %v2884 = vpack.c.bf16 %v2816, %v2812
        %v2885 = vpack.c.bf16 %v2817, %v2813
        %v2886 = vpack.c.bf16 %v2818, %v2814
        %v2890 = vunpack.c.l.b16 %v2884
        %v2891 = vunpack.c.l.b16 %v2885
        %v2892 = vunpack.c.l.b16 %v2886
        %v2893 = vunpack.c.h.b16 %v2884
        %v2894 = vunpack.c.h.b16 %v2885
        %v2895 = vunpack.c.h.b16 %v2886
        %v2896 = vpack.c.b16 %v2891, %v2890
        %v2897 = vpack.c.b16 %v2892, %v2892
        %v2898 = vpack.c.b16 %v2894, %v2893
        %v2899 = vpack.c.b16 %v2895, %v2895
        %2900 = vrot.lane.b32.xlu0 %v2896, 32
        %v2901 = vpop.permute.xlu0 %2900
        %2902 = vrot.lane.b32.xlu0 %v2897, 32
        %v2903 = vpop.permute.xlu0 %2902
        %2904 = vrot.lane.b32.xlu0 %v2898, 32
        %v2905 = vpop.permute.xlu0 %2904
        %2906 = vrot.lane.b32.xlu0 %v2899, 32
        %v2907 = vpop.permute.xlu0 %2906
        %v2908 = vrot.slane %v2901, 4
        %v2909 = vrot.slane %v2903, 4
        %v2910 = vrot.slane %v2905, 4
        %v2911 = vrot.slane %v2907, 4
        %v2912 = vsel %vm2874, %v2908, %v2909
        %vm2913 = vcmask 261120
        %v2914 = vsel %vm2913, %v2901, %v2912
        %v2915 = vsel %vm2874, %v2910, %v2911
        %v2916 = vsel %vm2913, %v2905, %v2915
        %2919 = vst [vmem:[#allocation3 + $0x10] sm:$0xff] %v2914
        %2920 = vst [vmem:[#allocation3 + $0x18] sm:$0xff] %v2916
        %v2922 = vlaneseq
        %v2923 = vshrl.u32 %v2922, 7
        %v2924 = vsub.s32 0, %v2923
        %v2925 = vrot.slane %v2821, %v2924
        %v2926 = vlaneseq
        %v2927 = vshrl.u32 %v2926, 7
        %v2928 = vsub.s32 1, %v2927
        %v2929 = vrot.slane %v2821, %v2928
        %2930 = vrot.lane.b32.xlu0 %v2925, 97
        %v2931 = vpop.permute.xlu0 %2930
        %2932 = vrot.lane.b32.xlu0 %v2929, 97
        %v2933 = vpop.permute.xlu0 %2932
        %vm2934 = vcmask 793600
        %v2935 = vsel %vm2934, %v2931, %v2933
        %v2939 = vmul.f32 %v2812, %v2931
        %v2940 = vmul.f32 %v2813, %v2935
        %v2941 = vmul.f32 %v2814, %v2933
        %v2942 = vmul.f32 %v2816, %v2931
        %v2943 = vmul.f32 %v2817, %v2935
        %v2944 = vmul.f32 %v2818, %v2933
        %v2945 = vpack.c.bf16 %v2942, %v2939
        %v2946 = vpack.c.bf16 %v2943, %v2940
        %v2947 = vpack.c.bf16 %v2944, %v2941
        %v2951 = vunpack.c.l.b16 %v2945
        %v2952 = vunpack.c.l.b16 %v2946
        %v2953 = vunpack.c.l.b16 %v2947
        %v2954 = vunpack.c.h.b16 %v2945
        %v2955 = vunpack.c.h.b16 %v2946
        %v2956 = vunpack.c.h.b16 %v2947
        %v2957 = vpack.c.b16 %v2952, %v2951
        %v2958 = vpack.c.b16 %v2953, %v2953
        %v2959 = vpack.c.b16 %v2955, %v2954
        %v2960 = vpack.c.b16 %v2956, %v2956
        %2961 = vrot.lane.b32.xlu0 %v2957, 31
        %v2962 = vpop.permute.xlu0 %2961
        %2963 = vrot.lane.b32.xlu0 %v2958, 31
        %v2964 = vpop.permute.xlu0 %2963
        %2965 = vrot.lane.b32.xlu0 %v2959, 31
        %v2966 = vpop.permute.xlu0 %2965
        %2967 = vrot.lane.b32.xlu0 %v2960, 31
        %v2968 = vpop.permute.xlu0 %2967
        %v2969 = vrot.slane %v2962, 4
        %v2970 = vrot.slane %v2964, 4
        %v2971 = vrot.slane %v2966, 4
        %v2972 = vrot.slane %v2968, 4
        %v2973 = vsel %vm2874, %v2969, %v2970
        %vm2974 = vcmask 252928
        %v2975 = vsel %vm2974, %v2962, %v2973
        %v2976 = vsel %vm2874, %v2971, %v2972
        %v2977 = vsel %vm2974, %v2966, %v2976
        %2980 = vst [vmem:[#allocation3 + $0x20] sm:$0xff] %v2975
        %2981 = vst [vmem:[#allocation3 + $0x28] sm:$0xff] %v2977
        %2982 = vrot.lane.b32.xlu0 %v2826, 127
        %v2983 = vpop.permute.xlu0 %2982
        %2984 = vrot.lane.b32.xlu0 %v2830, 127
        %v2985 = vpop.permute.xlu0 %2984
        %vm2986 = vcmask 1039360
        %v2987 = vsel %vm2986, %v2983, %v2985
        %v2991 = vmul.f32 %v2812, %v2983
        %v2992 = vmul.f32 %v2813, %v2987
        %v2993 = vmul.f32 %v2814, %v2985
        %v2994 = vmul.f32 %v2816, %v2983
        %v2995 = vmul.f32 %v2817, %v2987
        %v2996 = vmul.f32 %v2818, %v2985
        %v2997 = vpack.c.bf16 %v2994, %v2991
        %v2998 = vpack.c.bf16 %v2995, %v2992
        %v2999 = vpack.c.bf16 %v2996, %v2993
        %v3003 = vunpack.c.l.b16 %v2997
        %v3004 = vunpack.c.l.b16 %v2998
        %v3005 = vunpack.c.l.b16 %v2999
        %v3006 = vunpack.c.h.b16 %v2997
        %v3007 = vunpack.c.h.b16 %v2998
        %v3008 = vunpack.c.h.b16 %v2999
        %v3009 = vpack.c.b16 %v3004, %v3003
        %v3010 = vpack.c.b16 %v3005, %v3005
        %v3011 = vpack.c.b16 %v3007, %v3006
        %v3012 = vpack.c.b16 %v3008, %v3008
        %3013 = vrot.lane.b32.xlu0 %v3009, 1
        %v3014 = vpop.permute.xlu0 %3013
        %3015 = vrot.lane.b32.xlu0 %v3010, 1
        %v3016 = vpop.permute.xlu0 %3015
        %3017 = vrot.lane.b32.xlu0 %v3011, 1
        %v3018 = vpop.permute.xlu0 %3017
        %3019 = vrot.lane.b32.xlu0 %v3012, 1
        %v3020 = vpop.permute.xlu0 %3019
        %v3021 = vrot.slane %v3014, 4
        %v3022 = vrot.slane %v3016, 4
        %v3023 = vrot.slane %v3018, 4
        %v3024 = vrot.slane %v3020, 4
        %v3025 = vsel %vm2874, %v3021, %v3022
        %vm3026 = vcmask 7168
        %v3027 = vsel %vm3026, %v3014, %v3025
        %v3028 = vsel %vm2874, %v3023, %v3024
        %v3029 = vsel %vm3026, %v3018, %v3028
        %3032 = vst [vmem:[#allocation3 + $0x30] sm:$0xff] %v3027
        %3033 = vst [vmem:[#allocation3 + $0x38] sm:$0xff] %v3029
        %v3034 = vpack.c.b16 %v2892, %v2891
        %v3035 = vpack.c.b16 %v2895, %v2894
        %3038 = vst [vmem:[#allocation3 + $0x40] sm:$0xff] %v3034
        %3039 = vst [vmem:[#allocation3 + $0x48] sm:$0xff] %v3035
        %3040 = vrot.lane.b32.xlu0 %v2925, 1
        %v3041 = vpop.permute.xlu0 %3040
        %3042 = vrot.lane.b32.xlu0 %v2929, 1
        %v3043 = vpop.permute.xlu0 %3042
        %vm3044 = vcmask 7168
        %v3045 = vsel %vm3044, %v3041, %v3043
        %v3049 = vmul.f32 %v2813, %v3041
        %v3050 = vmul.f32 %v2814, %v3045
        %v3051 = vmul.f32 %v2815, %v3043
        %v3052 = vmul.f32 %v2817, %v3041
        %v3053 = vmul.f32 %v2818, %v3045
        %v3054 = vmul.f32 %v2819, %v3043
        %v3055 = vpack.c.bf16 %v3052, %v3049
        %v3056 = vpack.c.bf16 %v3053, %v3050
        %v3057 = vpack.c.bf16 %v3054, %v3051
        %v3061 = vunpack.c.l.b16 %v3055
        %v3062 = vunpack.c.l.b16 %v3056
        %v3063 = vunpack.c.l.b16 %v3057
        %v3064 = vunpack.c.h.b16 %v3055
        %v3065 = vunpack.c.h.b16 %v3056
        %v3066 = vunpack.c.h.b16 %v3057
        %v3067 = vpack.c.b16 %v3062, %v3061
        %v3068 = vpack.c.b16 %v3063, %v3063
        %v3069 = vpack.c.b16 %v3065, %v3064
        %v3070 = vpack.c.b16 %v3066, %v3066
        %3071 = vrot.lane.b32.xlu0 %v3067, 127
        %v3072 = vpop.permute.xlu0 %3071
        %3073 = vrot.lane.b32.xlu0 %v3068, 127
        %v3074 = vpop.permute.xlu0 %3073
        %3075 = vrot.lane.b32.xlu0 %v3069, 127
        %v3076 = vpop.permute.xlu0 %3075
        %3077 = vrot.lane.b32.xlu0 %v3070, 127
        %v3078 = vpop.permute.xlu0 %3077
        %v3079 = vrot.slane %v3072, 4
        %v3080 = vrot.slane %v3074, 4
        %v3081 = vrot.slane %v3076, 4
        %v3082 = vrot.slane %v3078, 4
        %v3083 = vsel %vm2874, %v3079, %v3080
        %vm3084 = vcmask 1039360
        %v3085 = vsel %vm3084, %v3072, %v3083
        %v3086 = vsel %vm2874, %v3081, %v3082
        %v3087 = vsel %vm3084, %v3076, %v3086
        %3090 = vst [vmem:[#allocation3 + $0x50] sm:$0xff] %v3085
        %3091 = vst [vmem:[#allocation3 + $0x58] sm:$0xff] %v3087
        %3092 = vrot.lane.b32.xlu0 %v2826, 31
        %v3093 = vpop.permute.xlu0 %3092
        %3094 = vrot.lane.b32.xlu0 %v2830, 31
        %v3095 = vpop.permute.xlu0 %3094
        %vm3096 = vcmask 252928
        %v3097 = vsel %vm3096, %v3093, %v3095
        %v3101 = vmul.f32 %v2813, %v3093
        %v3102 = vmul.f32 %v2814, %v3097
        %v3103 = vmul.f32 %v2815, %v3095
        %v3104 = vmul.f32 %v2817, %v3093
        %v3105 = vmul.f32 %v2818, %v3097
        %v3106 = vmul.f32 %v2819, %v3095
        %v3107 = vpack.c.bf16 %v3104, %v3101
        %v3108 = vpack.c.bf16 %v3105, %v3102
        %v3109 = vpack.c.bf16 %v3106, %v3103
        %v3113 = vunpack.c.l.b16 %v3107
        %v3114 = vunpack.c.l.b16 %v3108
        %v3115 = vunpack.c.l.b16 %v3109
        %v3116 = vunpack.c.h.b16 %v3107
        %v3117 = vunpack.c.h.b16 %v3108
        %v3118 = vunpack.c.h.b16 %v3109
        %v3119 = vpack.c.b16 %v3114, %v3113
        %v3120 = vpack.c.b16 %v3115, %v3115
        %v3121 = vpack.c.b16 %v3117, %v3116
        %v3122 = vpack.c.b16 %v3118, %v3118
        %3123 = vrot.lane.b32.xlu0 %v3119, 97
        %v3124 = vpop.permute.xlu0 %3123
        %3125 = vrot.lane.b32.xlu0 %v3120, 97
        %v3126 = vpop.permute.xlu0 %3125
        %3127 = vrot.lane.b32.xlu0 %v3121, 97
        %v3128 = vpop.permute.xlu0 %3127
        %3129 = vrot.lane.b32.xlu0 %v3122, 97
        %v3130 = vpop.permute.xlu0 %3129
        %v3131 = vrot.slane %v3124, 4
        %v3132 = vrot.slane %v3126, 4
        %v3133 = vrot.slane %v3128, 4
        %v3134 = vrot.slane %v3130, 4
        %v3135 = vsel %vm2874, %v3131, %v3132
        %vm3136 = vcmask 793600
        %v3137 = vsel %vm3136, %v3124, %v3135
        %v3138 = vsel %vm2874, %v3133, %v3134
        %v3139 = vsel %vm3136, %v3128, %v3138
        %3142 = vst [vmem:[#allocation3 + $0x60] sm:$0xff] %v3137
        %3143 = vst [vmem:[#allocation3 + $0x68] sm:$0xff] %v3139
        %v3144 = vpack.c.bf16 %v2819, %v2815
        %v3146 = vunpack.c.l.b16 %v3144
        %v3147 = vunpack.c.h.b16 %v3144
        %v3148 = vpack.c.b16 %v3146, %v3146
        %v3149 = vpack.c.b16 %v3147, %v3147
        %3150 = vrot.lane.b32.xlu0 %v3034, 96
        %v3151 = vpop.permute.xlu0 %3150
        %3152 = vrot.lane.b32.xlu0 %v3148, 96
        %v3153 = vpop.permute.xlu0 %3152
        %3154 = vrot.lane.b32.xlu0 %v3035, 96
        %v3155 = vpop.permute.xlu0 %3154
        %3156 = vrot.lane.b32.xlu0 %v3149, 96
        %v3157 = vpop.permute.xlu0 %3156
        %v3158 = vrot.slane %v3151, 4
        %v3159 = vrot.slane %v3153, 4
        %v3160 = vrot.slane %v3155, 4
        %v3161 = vrot.slane %v3157, 4
        %v3162 = vsel %vm2874, %v3158, %v3159
        %vm3163 = vcmask 785408
        %v3164 = vsel %vm3163, %v3151, %v3162
        %v3165 = vsel %vm2874, %v3160, %v3161
        %v3166 = vsel %vm3163, %v3155, %v3165
        %3169 = vst [vmem:[#allocation3 + $0x70] sm:$0xff] %v3164
        %3170 = vst [vmem:[#allocation3 + $0x78] sm:$0xff] %v3166
        %3171 = vrot.lane.b32.xlu0 %v2925, 33
        %v3172 = vpop.permute.xlu0 %3171
        %3173 = vrot.lane.b32.xlu0 %v2929, 33
        %v3174 = vpop.permute.xlu0 %3173
        %vm3175 = vcmask 269312
        %v3176 = vsel %vm3175, %v3172, %v3174
        %v3180 = vmul.f32 %v2813, %v3172
        %v3181 = vmul.f32 %v2814, %v3176
        %v3182 = vmul.f32 %v2815, %v3174
        %v3183 = vmul.f32 %v2817, %v3172
        %v3184 = vmul.f32 %v2818, %v3176
        %v3185 = vmul.f32 %v2819, %v3174
        %v3186 = vpack.c.bf16 %v3183, %v3180
        %v3187 = vpack.c.bf16 %v3184, %v3181
        %v3188 = vpack.c.bf16 %v3185, %v3182
        %v3192 = vunpack.c.l.b16 %v3186
        %v3193 = vunpack.c.l.b16 %v3187
        %v3194 = vunpack.c.l.b16 %v3188
        %v3195 = vunpack.c.h.b16 %v3186
        %v3196 = vunpack.c.h.b16 %v3187
        %v3197 = vunpack.c.h.b16 %v3188
        %v3198 = vpack.c.b16 %v3193, %v3192
        %v3199 = vpack.c.b16 %v3194, %v3194
        %v3200 = vpack.c.b16 %v3196, %v3195
        %v3201 = vpack.c.b16 %v3197, %v3197
        %3202 = vrot.lane.b32.xlu0 %v3198, 95
        %v3203 = vpop.permute.xlu0 %3202
        %3204 = vrot.lane.b32.xlu0 %v3199, 95
        %v3205 = vpop.permute.xlu0 %3204
        %3206 = vrot.lane.b32.xlu0 %v3200, 95
        %v3207 = vpop.permute.xlu0 %3206
        %3208 = vrot.lane.b32.xlu0 %v3201, 95
        %v3209 = vpop.permute.xlu0 %3208
        %v3210 = vrot.slane %v3203, 4
        %v3211 = vrot.slane %v3205, 4
        %v3212 = vrot.slane %v3207, 4
        %v3213 = vrot.slane %v3209, 4
        %v3214 = vsel %vm2874, %v3210, %v3211
        %vm3215 = vcmask 777216
        %v3216 = vsel %vm3215, %v3203, %v3214
        %v3217 = vsel %vm2874, %v3212, %v3213
        %v3218 = vsel %vm3215, %v3207, %v3217
        %3221 = vst [vmem:[#allocation3 + $0x80] sm:$0xff] %v3216
        %3222 = vst [vmem:[#allocation3 + $0x88] sm:$0xff] %v3218
        %v3223 = vld [vmem:[#allocation12] sm:$0xff]
        %v3224 = vld [vmem:[#allocation12 + $0x8] sm:$0xff]
        %v3225 = vld [vmem:[#allocation3] sm:$0xff]
        %v3226 = vld [vmem:[#allocation3 + $0x8] sm:$0xff]
        %v3227 = vld [vmem:[#allocation3 + $0x10] sm:$0xff]
        %v3228 = vld [vmem:[#allocation3 + $0x18] sm:$0xff]
        %v3229 = vld [vmem:[#allocation3 + $0x20] sm:$0xff]
        %v3230 = vld [vmem:[#allocation3 + $0x28] sm:$0xff]
        %v3231 = vld [vmem:[#allocation3 + $0x30] sm:$0xff]
        %v3232 = vld [vmem:[#allocation3 + $0x38] sm:$0xff]
        %v3233 = vld [vmem:[#allocation3 + $0x40] sm:$0xff]
        %v3234 = vld [vmem:[#allocation3 + $0x48] sm:$0xff]
        %v3235 = vld [vmem:[#allocation3 + $0x50] sm:$0xff]
        %v3236 = vld [vmem:[#allocation3 + $0x58] sm:$0xff]
        %v3237 = vld [vmem:[#allocation3 + $0x60] sm:$0xff]
        %v3238 = vld [vmem:[#allocation3 + $0x68] sm:$0xff]
        %v3239 = vld [vmem:[#allocation3 + $0x70] sm:$0xff]
        %v3240 = vld [vmem:[#allocation3 + $0x78] sm:$0xff]
        %v3241 = vld [vmem:[#allocation3 + $0x80] sm:$0xff]
        %v3242 = vld [vmem:[#allocation3 + $0x88] sm:$0xff]
        %v3243 = vld [vmem:[%s7] sm:$0xff]
        %v3244 = vld [vmem:[%s7 + $0x8] sm:$0xff]
        %3246 = vset.pattern.permute.xlu0 0
        %3247 = vperm.xlu0 %3246, %v3243
        %v3248 = vpop.permute.xlu0 %3247
        %3251 = vset.pattern.permute.xlu0 0
        %3252 = vperm.xlu0 %3251, %v3244
        %v3253 = vpop.permute.xlu0 %3252
        %v3257 = vunpack.c.l.b16 %v3223
        %v3258 = vunpack.c.h.b16 %v3223
        %v3259 = vunpack.c.l.b16 %v3224
        %v3260 = vunpack.c.h.b16 %v3224
        %v3261 = vpack.c.b16 %v3259, %v3257
        %v3262 = vpack.c.b16 %v3260, %v3258
        %v3282 = vunpack.c.l.b16 %v3225
        %v3283 = vunpack.c.h.b16 %v3225
        %v3284 = vunpack.c.l.b16 %v3226
        %v3285 = vunpack.c.h.b16 %v3226
        %v3286 = vunpack.c.l.b16 %v3227
        %v3287 = vunpack.c.h.b16 %v3227
        %v3288 = vunpack.c.l.b16 %v3228
        %v3289 = vunpack.c.h.b16 %v3228
        %v3290 = vunpack.c.l.b16 %v3229
        %v3291 = vunpack.c.h.b16 %v3229
        %v3292 = vunpack.c.l.b16 %v3230
        %v3293 = vunpack.c.h.b16 %v3230
        %v3294 = vunpack.c.l.b16 %v3231
        %v3295 = vunpack.c.h.b16 %v3231
        %v3296 = vunpack.c.l.b16 %v3232
        %v3297 = vunpack.c.h.b16 %v3232
        %v3298 = vunpack.c.l.b16 %v3233
        %v3299 = vunpack.c.h.b16 %v3233
        %v3300 = vunpack.c.l.b16 %v3234
        %v3301 = vunpack.c.h.b16 %v3234
        %v3302 = vunpack.c.l.b16 %v3235
        %v3303 = vunpack.c.h.b16 %v3235
        %v3304 = vunpack.c.l.b16 %v3236
        %v3305 = vunpack.c.h.b16 %v3236
        %v3306 = vunpack.c.l.b16 %v3237
        %v3307 = vunpack.c.h.b16 %v3237
        %v3308 = vunpack.c.l.b16 %v3238
        %v3309 = vunpack.c.h.b16 %v3238
        %v3310 = vunpack.c.l.b16 %v3239
        %v3311 = vunpack.c.h.b16 %v3239
        %v3312 = vunpack.c.l.b16 %v3240
        %v3313 = vunpack.c.h.b16 %v3240
        %v3314 = vunpack.c.l.b16 %v3241
        %v3315 = vunpack.c.h.b16 %v3241
        %v3316 = vunpack.c.l.b16 %v3242
        %v3317 = vunpack.c.h.b16 %v3242
        %v3318 = vpack.c.b16 %v3284, %v3282
        %v3319 = vpack.c.b16 %v3285, %v3283
        %v3320 = vpack.c.b16 %v3288, %v3286
        %v3321 = vpack.c.b16 %v3289, %v3287
        %v3322 = vpack.c.b16 %v3292, %v3290
        %v3323 = vpack.c.b16 %v3293, %v3291
        %v3324 = vpack.c.b16 %v3296, %v3294
        %v3325 = vpack.c.b16 %v3297, %v3295
        %v3326 = vpack.c.b16 %v3300, %v3298
        %v3327 = vpack.c.b16 %v3301, %v3299
        %v3328 = vpack.c.b16 %v3304, %v3302
        %v3329 = vpack.c.b16 %v3305, %v3303
        %v3330 = vpack.c.b16 %v3308, %v3306
        %v3331 = vpack.c.b16 %v3309, %v3307
        %v3332 = vpack.c.b16 %v3312, %v3310
        %v3333 = vpack.c.b16 %v3313, %v3311
        %v3334 = vpack.c.b16 %v3316, %v3314
        %v3335 = vpack.c.b16 %v3317, %v3315
        %v3355 = vsel %vm552, %v3262, 0
        %3357 = vmatprep.subr.bf16.mxu0 %v3333
        %3358 = vmatpush1.bf16.msra.mxu0 %v3332
        %3359 = vmatprep.subr.bf16.mxu0 %v3331
        %3360 = vmatpush1.bf16.msra.mxu0 %v3330
        %3361 = vmatprep.subr.bf16.mxu0 %v3329
        %3362 = vmatpush1.bf16.msra.mxu0 %v3328
        %3363 = vmatprep.subr.bf16.mxu0 %v3327
        %3364 = vmatpush1.bf16.msra.mxu0 %v3326
        %3365 = vmatprep.subr.bf16.mxu0 %v3325
        %3366 = vmatpush1.bf16.msra.mxu0 %v3324
        %3367 = vmatprep.subr.bf16.mxu0 %v3323
        %3368 = vmatpush1.bf16.msra.mxu0 %v3322
        %3369 = vmatprep.subr.bf16.mxu0 %v3321
        %3370 = vmatpush1.bf16.msra.mxu0 %v3320
        %3371 = vmatprep.subr.bf16.mxu0 %v3319
        %3372 = vmatpush1.bf16.msra.mxu0 %v3318
        %3373 = vmatprep.subr.bf16.mxu0 0
        %3374 = vmatpush2.bf16.msra.mxu0 0
        %3375 = vmatprep.subr.bf16.mxu0 0
        %3376 = vmatpush2.bf16.msra.mxu0 0
        %3377 = vmatprep.subr.bf16.mxu0 0
        %3378 = vmatpush2.bf16.msra.mxu0 0
        %3379 = vmatprep.subr.bf16.mxu0 0
        %3380 = vmatpush2.bf16.msra.mxu0 0
        %3381 = vmatprep.subr.bf16.mxu0 0
        %3382 = vmatpush2.bf16.msra.mxu0 0
        %3383 = vmatprep.subr.bf16.mxu0 0
        %3384 = vmatpush2.bf16.msra.mxu0 0
        %3385 = vmatprep.subr.bf16.mxu0 0
        %3386 = vmatpush2.bf16.msra.mxu0 0
        %3387 = vmatprep.subr.bf16.mxu0 %v3335
        %3388 = vmatpush2.bf16.msra.mxu0 %v3334
        %3389 = vmatprep.mubr.bf16.mxu0 %v3355
        %3390 = vmatmul.mubr.bf16.gmra.mxu0 %v3261
        %v3391 = vpop.f32.mrf.mxu0
        %v3392 = vadd.f32 %v3248, %v3391
        %v3393 = vpop.f32.mrf.mxu0
        %v3394 = vadd.f32 %v3248, %v3393
        %v3395 = vpop.f32.mrf.mxu0
        %v3396 = vadd.f32 %v3253, %v3395
        %v3397 = vpop.f32.mrf.mxu0
        %v3398 = vadd.f32 %v3253, %v3397
        %3399 = vdwg.mxu0
        %vm3400 = vcmp.gt.f32.partialorder %v3392, 0.0
        %vm3401 = vcmp.gt.f32.partialorder %v3394, 0.0
        %vm3402 = vcmp.gt.f32.partialorder %v3396, 0.0
        %vm3403 = vcmp.gt.f32.partialorder %v3398, 0.0
        %v3404 = vmul.f32 %v3392, 0.01
        %v3405 = vmul.f32 %v3394, 0.01
        %v3406 = vmul.f32 %v3396, 0.01
        %v3407 = vmul.f32 %v3398, 0.01
        %v3408 = vsel %vm3400, %v3392, %v3404
        %v3409 = vsel %vm3401, %v3394, %v3405
        %v3410 = vsel %vm3402, %v3396, %v3406
        %v3411 = vsel %vm3403, %v3398, %v3407
        %v3412 = vld [vmem:[%s8] sm:$0xf]
        %v3413 = vld [vmem:[%s8 + $0x4] sm:$0xf]
        %v3414 = vpack.c.bf16 %v3410, %v3408
        %v3415 = vpack.c.bf16 %v3411, %v3409
        %v3416 = vld [vmem:[%s9] sm:$0xff]
        %v3417 = vld [vmem:[%s9 + $0x8] sm:$0xff]
        %3419 = vset.pattern.permute.xlu0 0
        %3420 = vperm.xlu0 %3419, %v3416
        %v3421 = vpop.permute.xlu0 %3420
        %3424 = vset.pattern.permute.xlu0 0
        %3425 = vperm.xlu0 %3424, %v3417
        %v3426 = vpop.permute.xlu0 %3425
        %v3430 = vunpack.c.l.b16 %v3412
        %v3431 = vunpack.c.l.b16 %v3413
        %v3432 = vpack.c.b16 %v3431, %v3430
        %v3434 = vsel %vm552, %v3432, 0
        %3436 = vmatprep.subr.bf16.mxu0 0
        %3437 = vmatpush1.bf16.msra.mxu0 0
        %3438 = vmatprep.subr.bf16.mxu0 0
        %3439 = vmatpush1.bf16.msra.mxu0 0
        %3440 = vmatprep.subr.bf16.mxu0 0
        %3441 = vmatpush1.bf16.msra.mxu0 0
        %3442 = vmatprep.subr.bf16.mxu0 0
        %3443 = vmatpush1.bf16.msra.mxu0 0
        %3444 = vmatprep.subr.bf16.mxu0 0
        %3445 = vmatpush1.bf16.msra.mxu0 0
        %3446 = vmatprep.subr.bf16.mxu0 0
        %3447 = vmatpush1.bf16.msra.mxu0 0
        %3448 = vmatprep.subr.bf16.mxu0 0
        %3449 = vmatpush1.bf16.msra.mxu0 0
        %3450 = vmatprep.subr.bf16.mxu0 %v3415
        %3451 = vmatpush1.bf16.msra.mxu0 %v3414
        %3452 = vmatprep.subr.bf16.mxu0 0
        %3453 = vmatpush2.bf16.msra.mxu0 0
        %3454 = vmatprep.subr.bf16.mxu0 0
        %3455 = vmatpush2.bf16.msra.mxu0 0
        %3456 = vmatprep.subr.bf16.mxu0 0
        %3457 = vmatpush2.bf16.msra.mxu0 0
        %3458 = vmatprep.subr.bf16.mxu0 0
        %3459 = vmatpush2.bf16.msra.mxu0 0
        %3460 = vmatprep.subr.bf16.mxu0 0
        %3461 = vmatpush2.bf16.msra.mxu0 0
        %3462 = vmatprep.subr.bf16.mxu0 0
        %3463 = vmatpush2.bf16.msra.mxu0 0
        %3464 = vmatprep.subr.bf16.mxu0 0
        %3465 = vmatpush2.bf16.msra.mxu0 0
        %3466 = vmatprep.subr.bf16.mxu0 0
        %3467 = vmatpush2.bf16.msra.mxu0 0
        %3468 = vmatprep.mubr.bf16.mxu0 0
        %3469 = vmatmul.mubr.bf16.gmra.mxu0 %v3434
        %v3470 = vpop.f32.mrf.mxu0
        %v3471 = vadd.f32 %v3421, %v3470
        %v3472 = vpop.f32.mrf.mxu0
        %v3473 = vadd.f32 %v3421, %v3472
        %v3474 = vpop.f32.mrf.mxu0
        %v3475 = vadd.f32 %v3426, %v3474
        %v3476 = vpop.f32.mrf.mxu0
        %v3477 = vadd.f32 %v3426, %v3476
        %3478 = vdwg.mxu0
        %vm3479 = vcmp.gt.f32.partialorder %v3471, 0.0
        %vm3480 = vcmp.gt.f32.partialorder %v3473, 0.0
        %vm3481 = vcmp.gt.f32.partialorder %v3475, 0.0
        %vm3482 = vcmp.gt.f32.partialorder %v3477, 0.0
        %v3483 = vmul.f32 %v3471, 0.01
        %v3484 = vmul.f32 %v3473, 0.01
        %v3485 = vmul.f32 %v3475, 0.01
        %v3486 = vmul.f32 %v3477, 0.01
        %v3487 = vsel %vm3479, %v3471, %v3483
        %v3488 = vsel %vm3480, %v3473, %v3484
        %v3489 = vsel %vm3481, %v3475, %v3485
        %v3490 = vsel %vm3482, %v3477, %v3486
        %v3491 = vld [vmem:[%s10] sm:$0xf]
        %v3492 = vpack.c.bf16 %v3489, %v3487
        %v3493 = vpack.c.bf16 %v3490, %v3488
        %v3494 = vld [vmem:[%s11] sm:$0xff]
        %3496 = vset.pattern.permute.xlu0 0
        %3497 = vperm.xlu0 %3496, %v3494
        %v3498 = vpop.permute.xlu0 %3497
        %v3501 = vsel %vm552, %v3491, 0
        %3503 = vmatprep.subr.bf16.mxu0 0
        %3504 = vmatpush1.bf16.msra.mxu0 0
        %3505 = vmatprep.subr.bf16.mxu0 0
        %3506 = vmatpush1.bf16.msra.mxu0 0
        %3507 = vmatprep.subr.bf16.mxu0 0
        %3508 = vmatpush1.bf16.msra.mxu0 0
        %3509 = vmatprep.subr.bf16.mxu0 0
        %3510 = vmatpush1.bf16.msra.mxu0 0
        %3511 = vmatprep.subr.bf16.mxu0 0
        %3512 = vmatpush1.bf16.msra.mxu0 0
        %3513 = vmatprep.subr.bf16.mxu0 0
        %3514 = vmatpush1.bf16.msra.mxu0 0
        %3515 = vmatprep.subr.bf16.mxu0 0
        %3516 = vmatpush1.bf16.msra.mxu0 0
        %3517 = vmatprep.subr.bf16.mxu0 %v3493
        %3518 = vmatpush1.bf16.msra.mxu0 %v3492
        %3519 = vmatprep.subr.bf16.mxu0 0
        %3520 = vmatpush2.bf16.msra.mxu0 0
        %3521 = vmatprep.subr.bf16.mxu0 0
        %3522 = vmatpush2.bf16.msra.mxu0 0
        %3523 = vmatprep.subr.bf16.mxu0 0
        %3524 = vmatpush2.bf16.msra.mxu0 0
        %3525 = vmatprep.subr.bf16.mxu0 0
        %3526 = vmatpush2.bf16.msra.mxu0 0
        %3527 = vmatprep.subr.bf16.mxu0 0
        %3528 = vmatpush2.bf16.msra.mxu0 0
        %3529 = vmatprep.subr.bf16.mxu0 0
        %3530 = vmatpush2.bf16.msra.mxu0 0
        %3531 = vmatprep.subr.bf16.mxu0 0
        %3532 = vmatpush2.bf16.msra.mxu0 0
        %3533 = vmatprep.subr.bf16.mxu0 0
        %3534 = vmatpush2.bf16.msra.mxu0 0
        %3535 = vmatprep.mubr.bf16.mxu0 0
        %3536 = vmatmul.mubr.bf16.gmra.mxu0 %v3501
        %v3537 = vpop.f32.mrf.mxu0
        %v3538 = vadd.f32 %v3498, %v3537
        %v3539 = vpop.f32.mrf.mxu0
        %v3540 = vadd.f32 %v3498, %v3539
        %v3541 = vpop.f32.mrf.mxu0
        %v3542 = vpop.f32.mrf.mxu0
        %3543 = vdwg.mxu0
        %3544 = vst [vmem:[%s475] sm:$0xff] %v3538
        %3545 = vst [vmem:[%s475 + $0x8] sm:$0xff] %v3540
        %s3546 = sand.u32 %s294, 1
        %s3547 = scalar_lea.sflag [#allocation6], %s3546
        %s3548 = sand.u32 %s294, 1
        %s3549 = smul.addr %s3548, 16
        %s3550 = scalar_lea.vmem [#allocation13], %s3549
        // Predicated region
        $region89: #{tpu_custom_call.1} parent=67 // pred_check
          %p3551 = pneg %p304
        $region90: #{tpu_custom_call.1} parent=67 // pred_check_branch
          %3553 = sbr.rel (%p3551) target = $region92
        $region91: #{tpu_custom_call.1} parent=67 // pred_region
          %s3555 = ssub.s32 256, 256
          %3556 = vsyncadd %s3547, %s3555
          %s3557 = smul.addr %s29, 2
          %s3558 = smul.addr %s3557, 128
          %s3559 = scalar_lea.hbm %s12, %s3558
          %s3561 = sshll.u32 %s3550, 4
          %s3562 = int_to_ptr.vmem [resolvable:$true] %s3561
          %3564 = dma.vmem_to_hbm [thread:$0]  %s3562, 256, %s3559, %s3547
        $region92: #{tpu_custom_call.1} parent=67 // pred_fallthru
          _
      $region68: #{tpu_custom_call.1} parent=5 // pred_fallthru
        _
      %p3565 = scmp.le.s32.totalorder 2, %s24
      // Predicated region
      $region93: #{tpu_custom_call.1} parent=5 // pred_check
        %p3566 = pneg %p3565
      $region94: #{tpu_custom_call.1} parent=5 // pred_check_branch
        %3568 = sbr.rel (%p3566) target = $region96
      $region95: #{tpu_custom_call.1} parent=5 // pred_region
        %s3569 = ssub.s32 %s24, 2
        // Predicated region
        $region97: #{tpu_custom_call.1} parent=95 // pred_check
          %p3570 = pneg %p310
        $region98: #{tpu_custom_call.1} parent=95 // pred_check_branch
          %3572 = sbr.rel (%p3570) target = $region100
        $region99: #{tpu_custom_call.1} parent=95 // pred_region
          %s3573 = sand.u32 %s295, 1
          %s3574 = scalar_lea.sflag [#allocation6], %s3573
          %s3575 = sand.u32 %s295, 1
          %s3576 = smul.addr %s3575, 16
          %s3577 = scalar_lea.vmem [#allocation13], %s3576
          %3578 = dma.done %s3574, 256
        $region100: #{tpu_custom_call.1} parent=95 // pred_fallthru
          _
      $region96: #{tpu_custom_call.1} parent=5 // pred_fallthru
        _
    $region6: #{tpu_custom_call.1} parent=1 // loop_footer
      %s28 = sadd.s32 1, %s24
    $region7: #{tpu_custom_call.1} parent=1 // loop_footer_branch
      %23 = sbr.rel target = $region3
    $region8: #{tpu_custom_call.1} parent=1 // loop_exit
      _
    %3579 = vsyncpa [#allocation5], 1
    %s3580 = scalar_lea.sflag [#allocation5], 1
    %3581 = vsyncpa %s3580, 1
    %3582 = vsyncpa [#allocation8], 1
    %3583 = vsyncpa [#allocation11], 1
    %3584 = vsyncpa [#allocation6], 1
    %s3585 = scalar_lea.sflag [#allocation6], 1
    %3586 = vsyncpa %s3585, 1

</llo_original>
